<compile_context>
chip_gen: v7x
topology: tpu7x:2x2x1
jax: 0.10.0
libtpu: 0.0.40
codegen_flags: <defaults>
</compile_context>

<pallas_src>
import math

import jax
import jax.numpy as jnp
import numpy as np
from jax.experimental import pallas as pl
from jax.experimental.pallas import tpu as pltpu

_VMEM_LIMIT = 32 * 1024 * 1024  # above v5e's 16 MiB scoped default, safe on v7x (64 MiB phys)


def _round_up(x, m):
    return ((x + m - 1) // m) * m


def _lcm(a, b):
    return a * b // math.gcd(a, b)


# ---------------------------------------------------------------------------
# Kernel 1: fused conv1 + root/ReLU/split-weight epilogue.
#   grid = (row tiles i, k tiles k)
#   prologue (per nonzero (i,k)) :  z  = x_tile(k) @ W1              (f32)
#   accumulate                   :  acc += A(i, k) @ bf16(z)         (f32 scratch)
#   epilogue  (k == last)        :  o(i) = relu(acc + b1) @ Wh + relu(root(i)) @ Wr
# The scalar-prefetched nz table gates MXU work; the fetch table makes the A/X
# index_map repeat the previous nonzero block index on zero tiles so their DMA
# is skipped (Pallas reuses the buffer when the block index is unchanged).
# ---------------------------------------------------------------------------
def _conv1_fused_kernel(nz_ref, fetch_ref, a_ref, x_ref, w1_ref, b1_ref,
                        root_ref, wh_ref, wr_ref, o_ref, acc_ref):
    i = pl.program_id(0)
    k = pl.program_id(1)

    @pl.when(k == 0)
    def _():
        acc_ref[...] = jnp.zeros_like(acc_ref)

    @pl.when(nz_ref[i, k] != 0)
    def _():
        # XW1 prologue on the fly (tiny [tile_k, F] @ [F, n_latent] dot), then bf16 A @ Z.
        z = jnp.dot(x_ref[...], w1_ref[...], preferred_element_type=jnp.float32)
        acc_ref[...] += jnp.dot(a_ref[...], z.astype(jnp.bfloat16),
                                preferred_element_type=jnp.float32)

    @pl.when(k == pl.num_programs(1) - 1)
    def _():
        # Bias BEFORE ReLU (reference: relu(A@XW1 + b1)); epilogue math in f32.
        h = jnp.maximum(acc_ref[...] + b1_ref[...], 0.0)
        r = jnp.maximum(root_ref[...], 0.0)
        o_ref[...] = (
            jnp.dot(h, wh_ref[...], preferred_element_type=jnp.float32)
            + jnp.dot(r, wr_ref[...], preferred_element_type=jnp.float32)
        ).astype(o_ref.dtype)


def conv1_fused(nz, fetch, a, x, w1, b1, root, wh, wr, *, tile_m, tile_k):
    n_pad = a.shape[0]
    f_in = x.shape[1]
    n_lat = w1.shape[1]
    f_out2 = wh.shape[1]
    grid = (n_pad // tile_m, n_pad // tile_k)
    return pl.pallas_call(
        _conv1_fused_kernel,
        out_shape=jax.ShapeDtypeStruct((n_pad, f_out2), jnp.float32),
        grid_spec=pltpu.PrefetchScalarGridSpec(
            num_scalar_prefetch=2,
            grid=grid,
            in_specs=[
                # A tile: fetch-index so zero tiles repeat the previous block (DMA skipped).
                pl.BlockSpec((tile_m, tile_k), lambda i, k, nz_r, f_r: (i, f_r[i, k])),
                # X tile for the on-the-fly Z prologue (same fetch gating).
                pl.BlockSpec((tile_k, f_in), lambda i, k, nz_r, f_r: (f_r[i, k], 0)),
                pl.BlockSpec((f_in, n_lat), lambda i, k, nz_r, f_r: (0, 0)),    # W1 resident
                pl.BlockSpec((1, n_lat), lambda i, k, nz_r, f_r: (0, 0)),       # b1 resident
                pl.BlockSpec((tile_m, f_in), lambda i, k, nz_r, f_r: (i, 0)),   # root rows
                pl.BlockSpec((n_lat, f_out2), lambda i, k, nz_r, f_r: (0, 0)),  # W34[:n_lat]
                pl.BlockSpec((f_in, f_out2), lambda i, k, nz_r, f_r: (0, 0)),   # W34[n_lat:]
            ],
            out_specs=pl.BlockSpec((tile_m, f_out2), lambda i, k, nz_r, f_r: (i, 0)),
            scratch_shapes=[pltpu.VMEM((tile_m, n_lat), jnp.float32)],
        ),
        compiler_params=pltpu.CompilerParams(
            dimension_semantics=("parallel", "arbitrary"),
            vmem_limit_bytes=_VMEM_LIMIT,
        ),
    )(nz, fetch, a, x, w1, b1, root, wh, wr)


# ---------------------------------------------------------------------------
# Kernel 2: O = A_hat @ Z + b  with Z kept fully VMEM-resident (sliced by k in-kernel).
# Same nz (MXU) + fetch (DMA) gating for the A tiles; f32 accumulator scratch.
# ---------------------------------------------------------------------------
def _spmm_bias_kernel(nz_ref, fetch_ref, a_ref, z_ref, b_ref, o_ref, acc_ref):
    i = pl.program_id(0)
    k = pl.program_id(1)
    tile_k = a_ref.shape[1]

    @pl.when(k == 0)
    def _():
        acc_ref[...] = jnp.zeros_like(acc_ref)

    @pl.when(nz_ref[i, k] != 0)
    def _():
        koff = pl.multiple_of(k * tile_k, tile_k)
        z_blk = z_ref[pl.ds(koff, tile_k), :]
        acc_ref[...] += jnp.dot(a_ref[...], z_blk.astype(jnp.bfloat16),
                                preferred_element_type=jnp.float32)

    @pl.when(k == pl.num_programs(1) - 1)
    def _():
        o_ref[...] = acc_ref[...] + b_ref[...]


def spmm_bias(nz, fetch, a, z, b, *, tile_m, tile_k):
    n_pad = a.shape[0]
    f_out = z.shape[1]
    grid = (n_pad // tile_m, n_pad // tile_k)
    return pl.pallas_call(
        _spmm_bias_kernel,
        out_shape=jax.ShapeDtypeStruct((n_pad, f_out), jnp.float32),
        grid_spec=pltpu.PrefetchScalarGridSpec(
            num_scalar_prefetch=2,
            grid=grid,
            in_specs=[
                pl.BlockSpec((tile_m, tile_k), lambda i, k, nz_r, f_r: (i, f_r[i, k])),
                pl.BlockSpec((n_pad, f_out), lambda i, k, nz_r, f_r: (0, 0)),  # Z resident
                pl.BlockSpec((1, f_out), lambda i, k, nz_r, f_r: (0, 0)),
            ],
            out_specs=pl.BlockSpec((tile_m, f_out), lambda i, k, nz_r, f_r: (i, 0)),
            scratch_shapes=[pltpu.VMEM((tile_m, f_out), jnp.float32)],
        ),
        compiler_params=pltpu.CompilerParams(
            dimension_semantics=("parallel", "arbitrary"),
            vmem_limit_bytes=_VMEM_LIMIT,
        ),
    )(nz, fetch, a, z, b)


# ---------------------------------------------------------------------------
# Glue: normalized adjacency (PyG gcn_norm semantics), per-tile nz + fetch tables,
# parameter initialization.
# ---------------------------------------------------------------------------
def build_norm_adj(edge_index, num_nodes):
    """Dense \\hat{A} = D^{-1/2}(A + I)D^{-1/2}, message flows src -> dst."""
    src, dst = edge_index[0], edge_index[1]
    loop = jnp.arange(num_nodes, dtype=edge_index.dtype)
    src = jnp.concatenate([src, loop])
    dst = jnp.concatenate([dst, loop])
    ones = jnp.ones_like(src, dtype=jnp.float32)
    deg = jnp.zeros((num_nodes,), jnp.float32).at[dst].add(ones)
    dis = jnp.where(deg > 0, jax.lax.rsqrt(deg), 0.0)
    w = dis[src] * dis[dst]
    a = jnp.zeros((num_nodes, num_nodes), jnp.float32).at[dst, src].add(w)
    return a


def build_tile_tables(batch_pad, tile_m, tile_k, num_graphs):
    """nz[i,k]=1 iff A_hat tile (i,k) can contain nonzeros (graph-block overlap, a
    conservative superset -> always correct).  fetch[i,k] is the k-block index the A
    index_map should return at step (i,k): the last nonzero k' <= k (else the first
    nonzero k' > k, else 0), so zero tiles repeat the previous block index and their
    DMA is skipped while the MXU stays gated by nz."""
    n_pad = batch_pad.shape[0]
    onehot = jax.nn.one_hot(batch_pad, num_graphs, dtype=jnp.float32)   # padded id -1 -> 0
    row_pres = onehot.reshape(n_pad // tile_m, tile_m, num_graphs).max(axis=1)
    col_pres = onehot.reshape(n_pad // tile_k, tile_k, num_graphs).max(axis=1)
    nz = (row_pres @ col_pres.T > 0.0).astype(jnp.int32)                # (RT, KT)

    kt = nz.shape[1]
    k_idx = jnp.arange(kt, dtype=jnp.int32)
    prev_nz = jax.lax.cummax(jnp.where(nz > 0, k_idx, -1), axis=1)
    next_nz = jax.lax.cummin(jnp.where(nz > 0, k_idx, kt), axis=1, reverse=True)
    fetch = jnp.where(prev_nz >= 0, prev_nz,
                      jnp.where(next_nz < kt, next_nz, 0)).astype(jnp.int32)
    return nz, fetch


def init_params(key, n_total_features, n_latent, out_feats):
    def glorot(k, fan_in, fan_out):
        scale = jnp.sqrt(6.0 / (fan_in + fan_out))
        return jax.random.uniform(
            k, (fan_in, fan_out), jnp.float32, minval=-scale, maxval=scale
        )

    k1, k3, k4, kb1, kb3, kb4 = jax.random.split(key, 6)
    cat_dim = n_total_features + n_latent
    return {
        "w1": glorot(k1, n_total_features, n_latent),
        "b1": 0.01 * jax.random.normal(kb1, (1, n_latent), jnp.float32),
        "w3": glorot(k3, cat_dim, out_feats),
        "b3": 0.01 * jax.random.normal(kb3, (1, out_feats), jnp.float32),
        "w4": glorot(k4, cat_dim, out_feats),
        "b4": 0.01 * jax.random.normal(kb4, (1, out_feats), jnp.float32),
    }


# ---------------------------------------------------------------------------
# Forward pass (2 pallas_calls total)
# ---------------------------------------------------------------------------
def encoder_gcn_forward(x, edge_index, batch, rootindex, params, num_graphs,
                        *, tile_m=384, tile_k=384):
    """Pallas-backed EncoderGCN.forward. Returns (mean, std)."""
    n, f = x.shape
    n_latent = params["w1"].shape[1]
    out_feats = params["w3"].shape[1]

    x1 = x.astype(jnp.float32)
    a_hat = build_norm_adj(edge_index, n)

    # Pad N so tiles divide evenly.  Padded A rows/cols and padded X/root rows are zero,
    # so padded contributions to valid rows are exactly zero; padded outputs are sliced.
    n8 = _round_up(n, 8)
    if n8 <= max(tile_m, tile_k):
        tile_m = tile_k = n8          # single full-array block (exempt from (8,128) rule)
        n_pad = n8
    else:
        assert tile_m % 8 == 0 and tile_k % 128 == 0, \
            "tile_m must be a multiple of 8 and tile_k a multiple of 128"
        n_pad = _round_up(n, _lcm(tile_m, tile_k))
    pad = n_pad - n

    # bf16 A_hat halves the dominant N^2 HBM read and runs the MXU in native bf16;
    # padded zeros are exact in bf16.
    a_p = jnp.pad(a_hat, ((0, pad), (0, pad))).astype(jnp.bfloat16)
    x_p = jnp.pad(x1, ((0, pad), (0, 0)))                        # f32 (tiny)
    batch_i32 = batch.astype(jnp.int32)
    batch_p = jnp.concatenate([batch_i32, -jnp.ones((pad,), jnp.int32)])
    nz, fetch = build_tile_tables(batch_p, tile_m, tile_k, num_graphs)

    # Root broadcast (trivial gather, JAX glue).
    root_ext = x1[rootindex.astype(jnp.int32)[batch_i32]]        # (n, f)
    root_p = jnp.pad(root_ext, ((0, pad), (0, 0)))

    # conv3/conv4 fused via W34; relu(concat(h, root)) @ W34 split into two matmuls.
    w34 = jnp.concatenate([params["w3"], params["w4"]], axis=1)  # (n_latent+f, 2*out)
    b34 = jnp.concatenate([params["b3"], params["b4"]], axis=1)  # (1, 2*out)

    # Call 1: z2 = relu(A@ (X@W1) + b1) @ W34[:n_latent] + relu(root) @ W34[n_latent:]
    z2 = conv1_fused(nz, fetch, a_p, x_p, params["w1"], params["b1"],
                     root_p, w34[:n_latent], w34[n_latent:],
                     tile_m=tile_m, tile_k=tile_k)               # (n_pad, 2*out) f32

    # Call 2: [mean | std] = A @ z2 + b34
    ms = spmm_bias(nz, fetch, a_p, z2, b34, tile_m=tile_m, tile_k=tile_k)
    mean = ms[:n, :out_feats]
    std = ms[:n, out_feats:]
    return mean, std


# Pure-JAX reference for correctness checking (f32, highest matmul precision).
def encoder_gcn_reference(x, edge_index, batch, rootindex, params):
    hp = jax.lax.Precision.HIGHEST
    n = x.shape[0]
    a_hat = build_norm_adj(edge_index, n)
    x1 = x.astype(jnp.float32)
    h = jnp.dot(a_hat, jnp.dot(x1, params["w1"], precision=hp), precision=hp) + params["b1"]
    root_extend = x1[rootindex[batch]]
    cat = jax.nn.relu(jnp.concatenate([h, root_extend], axis=1))
    mean = jnp.dot(a_hat, jnp.dot(cat, params["w3"], precision=hp), precision=hp) + params["b3"]
    std = jnp.dot(a_hat, jnp.dot(cat, params["w4"], precision=hp), precision=hp) + params["b4"]
    return mean, std


# ---------------------------------------------------------------------------
if __name__ == "__main__":
    key = jax.random.PRNGKey(0)
    kx, kp = jax.random.split(key)

    # 4 graphs x 190 nodes (bidirectional chains): N = 760 -> padded to 768.
    n_total_features, n_latent, out_feats = 8, 16, 8
    num_graphs, nodes_per_graph = 4, 190
    n_nodes = num_graphs * nodes_per_graph

    src_list, dst_list = [], []
    for g in range(num_graphs):
        base = g * nodes_per_graph
        for i in range(nodes_per_graph - 1):
            src_list += [base + i, base + i + 1]
            dst_list += [base + i + 1, base + i]
    edge_index = jnp.array([src_list, dst_list], dtype=jnp.int32)   # [2, E]

    x = jax.random.normal(kx, (n_nodes, n_total_features), jnp.float32)
    batch = jnp.repeat(jnp.arange(num_graphs, dtype=jnp.int32), nodes_per_graph)
    rootindex = jnp.arange(num_graphs, dtype=jnp.int32) * nodes_per_graph

    params = init_params(kp, n_total_features, n_latent, out_feats)

    mean_ref, std_ref = encoder_gcn_reference(x, edge_index, batch, rootindex, params)

    # bf16 A_hat / Z operands vs. f32 HIGHEST reference -> loosened tolerance.
    rtol = atol = 3e-2

    # Config 1: big 384x384 tiles -> 2x2 grid (minimal grid-step overhead; even
    # row-tile count keeps v7x's 2 TensorCores balanced).
    mean, std = encoder_gcn_forward(
        x, edge_index, batch, rootindex, params, num_graphs, tile_m=384, tile_k=384)
    jax.block_until_ready((mean, std))
    np.testing.assert_allclose(np.asarray(mean), np.asarray(mean_ref), rtol=rtol, atol=atol)
    np.testing.assert_allclose(np.asarray(std), np.asarray(std_ref), rtol=rtol, atol=atol)

    # Config 2: 384x128 tiles -> exercises the block-diagonal nz/fetch path where
    # off-diagonal A tiles are neither re-DMA'd nor fed to the MXU.
    mean2, std2 = encoder_gcn_forward(
        x, edge_index, batch, rootindex, params, num_graphs, tile_m=384, tile_k=128)
    jax.block_until_ready((mean2, std2))
    np.testing.assert_allclose(np.asarray(mean2), np.asarray(mean_ref), rtol=rtol, atol=atol)
    np.testing.assert_allclose(np.asarray(std2), np.asarray(std_ref), rtol=rtol, atol=atol)

    print("KERNEL_OK")
</pallas_src>

<mosaic_0001>
module attributes {stable_mosaic.version = 11 : i64} {
  func.func @_conv1_fused_kernel(%arg0: i32, %arg1: i32, %arg2: memref<2x2xi32, #tpu.memory_space<smem>>, %arg3: memref<2x2xi32, #tpu.memory_space<smem>>, %arg4: memref<384x384xbf16, #tpu.memory_space<vmem>>, %arg5: memref<384x8xf32, #tpu.memory_space<vmem>>, %arg6: memref<8x16xf32, #tpu.memory_space<vmem>>, %arg7: memref<1x16xf32, #tpu.memory_space<vmem>>, %arg8: memref<384x8xf32, #tpu.memory_space<vmem>>, %arg9: memref<16x16xf32, #tpu.memory_space<vmem>>, %arg10: memref<8x16xf32, #tpu.memory_space<vmem>>, %arg11: memref<384x16xf32, #tpu.memory_space<vmem>>, %arg12: memref<384x16xf32, #tpu.memory_space<vmem>>) attributes {dimension_semantics = [#tpu.dimension_semantics<parallel>, #tpu.dimension_semantics<arbitrary>], iteration_bounds = array<i64: 2, 2>, scalar_prefetch = 2 : i64, scratch_operands = 1 : i64, tpu.core_type = #tpu.core_type<tc>, window_params = [{transform_indices = @transform_0, window_bounds = array<i64: 384, 384>}, {transform_indices = @transform_1, window_bounds = array<i64: 384, 8>}, {pipeline_mode = #tpu.pipeline_mode<synchronous>, transform_indices = @transform_2, window_bounds = array<i64: 8, 16>}, {pipeline_mode = #tpu.pipeline_mode<synchronous>, transform_indices = @transform_3, window_bounds = array<i64: 1, 16>}, {transform_indices = @transform_4, window_bounds = array<i64: 384, 8>}, {pipeline_mode = #tpu.pipeline_mode<synchronous>, transform_indices = @transform_5, window_bounds = array<i64: 16, 16>}, {pipeline_mode = #tpu.pipeline_mode<synchronous>, transform_indices = @transform_6, window_bounds = array<i64: 8, 16>}, {transform_indices = @transform_7, window_bounds = array<i64: 384, 16>}]} {
    %c0_i32 = arith.constant 0 : i32
    %0 = arith.cmpi eq, %arg1, %c0_i32 : i32
    %1 = arith.extui %0 : i1 to i32
    %c0_i32_0 = arith.constant 0 : i32
    %2 = arith.cmpi ne, %1, %c0_i32_0 : i32
    scf.if %2 {
      %cst = arith.constant 0.000000e+00 : f32
      %12 = vector.broadcast %cst : f32 to vector<384x16xf32>
      %c0 = arith.constant 0 : index
      %c0_4 = arith.constant 0 : index
      %13 = vector.load %arg12[%c0, %c0_4] : memref<384x16xf32, #tpu.memory_space<vmem>>, vector<384x16xf32>
      tpu.vector_store %arg12[%c0, %c0_4], %12 {strides = array<i32>} : memref<384x16xf32, #tpu.memory_space<vmem>>, vector<384x16xf32>,
    } else {
    }
    %3 = arith.index_cast %arg0 : i32 to index
    %4 = arith.index_cast %arg1 : i32 to index
    %5 = memref.load %arg2[%3, %4] : memref<2x2xi32, #tpu.memory_space<smem>>
    %c0_i32_1 = arith.constant 0 : i32
    %6 = arith.cmpi ne, %5, %c0_i32_1 : i32
    %7 = arith.extui %6 : i1 to i32
    %c0_i32_2 = arith.constant 0 : i32
    %8 = arith.cmpi ne, %7, %c0_i32_2 : i32
    scf.if %8 {
      %c0 = arith.constant 0 : index
      %c0_4 = arith.constant 0 : index
      %12 = vector.load %arg5[%c0, %c0_4] : memref<384x8xf32, #tpu.memory_space<vmem>>, vector<384x8xf32>
      %c0_5 = arith.constant 0 : index
      %c0_6 = arith.constant 0 : index
      %13 = vector.load %arg6[%c0_5, %c0_6] : memref<8x16xf32, #tpu.memory_space<vmem>>, vector<8x16xf32>
      %cst = arith.constant dense<0.000000e+00> : vector<384x16xf32>
      %14 = tpu.matmul %12, %13, %cst {dimension_numbers = #tpu.dot_dimension_numbers<[1], [0], [0], [1], [0, 0, 1, 1], [], []>} : vector<384x8xf32>, vector<8x16xf32>, vector<384x16xf32> -> vector<384x16xf32>
      %c0_7 = arith.constant 0 : index
      %c0_8 = arith.constant 0 : index
      %15 = vector.load %arg12[%c0_7, %c0_8] : memref<384x16xf32, #tpu.memory_space<vmem>>, vector<384x16xf32>
      %c0_9 = arith.constant 0 : index
      %c0_10 = arith.constant 0 : index
      %16 = vector.load %arg4[%c0_9, %c0_10] : memref<384x384xbf16, #tpu.memory_space<vmem>>, vector<384x384xbf16>
      %17 = arith.truncf %14 : vector<384x16xf32> to vector<384x16xbf16>
      %cst_11 = arith.constant dense<0.000000e+00> : vector<384x16xf32>
      %18 = tpu.matmul %16, %17, %cst_11 {dimension_numbers = #tpu.dot_dimension_numbers<[1], [0], [0], [1], [0, 0, 1, 1], [], []>} : vector<384x384xbf16>, vector<384x16xbf16>, vector<384x16xf32> -> vector<384x16xf32>
      %19 = arith.addf %15, %18 : vector<384x16xf32>
      %c0_12 = arith.constant 0 : index
      %c0_13 = arith.constant 0 : index
      %20 = vector.load %arg12[%c0_12, %c0_13] : memref<384x16xf32, #tpu.memory_space<vmem>>, vector<384x16xf32>
      tpu.vector_store %arg12[%c0_12, %c0_13], %19 {strides = array<i32>} : memref<384x16xf32, #tpu.memory_space<vmem>>, vector<384x16xf32>,
    } else {
    }
    %c1_i32 = arith.constant 1 : i32
    %9 = arith.cmpi eq, %arg1, %c1_i32 : i32
    %10 = arith.extui %9 : i1 to i32
    %c0_i32_3 = arith.constant 0 : i32
    %11 = arith.cmpi ne, %10, %c0_i32_3 : i32
    scf.if %11 {
      %c0 = arith.constant 0 : index
      %c0_4 = arith.constant 0 : index
      %12 = vector.load %arg12[%c0, %c0_4] : memref<384x16xf32, #tpu.memory_space<vmem>>, vector<384x16xf32>
      %c0_5 = arith.constant 0 : index
      %c0_6 = arith.constant 0 : index
      %13 = vector.load %arg7[%c0_5, %c0_6] : memref<1x16xf32, #tpu.memory_space<vmem>>, vector<1x16xf32>
      %14 = vector.broadcast %13 : vector<1x16xf32> to vector<384x16xf32>
      %15 = arith.addf %12, %14 : vector<384x16xf32>
      %cst = arith.constant 0.000000e+00 : f32
      %16 = vector.broadcast %cst : f32 to vector<384x16xf32>
      %17 = arith.maximumf %15, %16 : vector<384x16xf32>
      %c0_7 = arith.constant 0 : index
      %c0_8 = arith.constant 0 : index
      %18 = vector.load %arg8[%c0_7, %c0_8] : memref<384x8xf32, #tpu.memory_space<vmem>>, vector<384x8xf32>
      %cst_9 = arith.constant 0.000000e+00 : f32
      %19 = vector.broadcast %cst_9 : f32 to vector<384x8xf32>
      %20 = arith.maximumf %18, %19 : vector<384x8xf32>
      %c0_10 = arith.constant 0 : index
      %c0_11 = arith.constant 0 : index
      %21 = vector.load %arg9[%c0_10, %c0_11] : memref<16x16xf32, #tpu.memory_space<vmem>>, vector<16x16xf32>
      %cst_12 = arith.constant dense<0.000000e+00> : vector<384x16xf32>
      %22 = tpu.matmul %17, %21, %cst_12 {dimension_numbers = #tpu.dot_dimension_numbers<[1], [0], [0], [1], [0, 0, 1, 1], [], []>} : vector<384x16xf32>, vector<16x16xf32>, vector<384x16xf32> -> vector<384x16xf32>
      %c0_13 = arith.constant 0 : index
      %c0_14 = arith.constant 0 : index
      %23 = vector.load %arg10[%c0_13, %c0_14] : memref<8x16xf32, #tpu.memory_space<vmem>>, vector<8x16xf32>
      %cst_15 = arith.constant dense<0.000000e+00> : vector<384x16xf32>
      %24 = tpu.matmul %20, %23, %cst_15 {dimension_numbers = #tpu.dot_dimension_numbers<[1], [0], [0], [1], [0, 0, 1, 1], [], []>} : vector<384x8xf32>, vector<8x16xf32>, vector<384x16xf32> -> vector<384x16xf32>
      %25 = arith.addf %22, %24 : vector<384x16xf32>
      %c0_16 = arith.constant 0 : index
      %c0_17 = arith.constant 0 : index
      %26 = vector.load %arg11[%c0_16, %c0_17] : memref<384x16xf32, #tpu.memory_space<vmem>>, vector<384x16xf32>
      tpu.vector_store %arg11[%c0_16, %c0_17], %25 {strides = array<i32>} : memref<384x16xf32, #tpu.memory_space<vmem>>, vector<384x16xf32>,
    } else {
    }
    return
  }
  func.func @transform_0(%arg0: i32, %arg1: i32, %arg2: memref<2x2xi32, #tpu.memory_space<smem>>, %arg3: memref<2x2xi32, #tpu.memory_space<smem>>) -> (i32, i32) {
    %0 = arith.index_cast %arg0 : i32 to index
    %1 = arith.index_cast %arg1 : i32 to index
    %2 = memref.load %arg3[%0, %1] : memref<2x2xi32, #tpu.memory_space<smem>>
    %c0_i32 = arith.constant 0 : i32
    return %arg0, %2 : i32, i32
  }
  func.func @transform_1(%arg0: i32, %arg1: i32, %arg2: memref<2x2xi32, #tpu.memory_space<smem>>, %arg3: memref<2x2xi32, #tpu.memory_space<smem>>) -> (i32, i32) {
    %0 = arith.index_cast %arg0 : i32 to index
    %1 = arith.index_cast %arg1 : i32 to index
    %2 = memref.load %arg3[%0, %1] : memref<2x2xi32, #tpu.memory_space<smem>>
    %c0_i32 = arith.constant 0 : i32
    %c0_i32_0 = arith.constant 0 : i32
    return %2, %c0_i32 : i32, i32
  }
  func.func @transform_2(%arg0: i32, %arg1: i32, %arg2: memref<2x2xi32, #tpu.memory_space<smem>>, %arg3: memref<2x2xi32, #tpu.memory_space<smem>>) -> (i32, i32) {
    %c0_i32 = arith.constant 0 : i32
    %c0_i32_0 = arith.constant 0 : i32
    %c0_i32_1 = arith.constant 0 : i32
    return %c0_i32, %c0_i32_0 : i32, i32
  }
  func.func @transform_3(%arg0: i32, %arg1: i32, %arg2: memref<2x2xi32, #tpu.memory_space<smem>>, %arg3: memref<2x2xi32, #tpu.memory_space<smem>>) -> (i32, i32) {
    %c0_i32 = arith.constant 0 : i32
    %c0_i32_0 = arith.constant 0 : i32
    %c0_i32_1 = arith.constant 0 : i32
    return %c0_i32, %c0_i32_0 : i32, i32
  }
  func.func @transform_4(%arg0: i32, %arg1: i32, %arg2: memref<2x2xi32, #tpu.memory_space<smem>>, %arg3: memref<2x2xi32, #tpu.memory_space<smem>>) -> (i32, i32) {
    %c0_i32 = arith.constant 0 : i32
    %c0_i32_0 = arith.constant 0 : i32
    return %arg0, %c0_i32 : i32, i32
  }
  func.func @transform_5(%arg0: i32, %arg1: i32, %arg2: memref<2x2xi32, #tpu.memory_space<smem>>, %arg3: memref<2x2xi32, #tpu.memory_space<smem>>) -> (i32, i32) {
    %c0_i32 = arith.constant 0 : i32
    %c0_i32_0 = arith.constant 0 : i32
    %c0_i32_1 = arith.constant 0 : i32
    return %c0_i32, %c0_i32_0 : i32, i32
  }
  func.func @transform_6(%arg0: i32, %arg1: i32, %arg2: memref<2x2xi32, #tpu.memory_space<smem>>, %arg3: memref<2x2xi32, #tpu.memory_space<smem>>) -> (i32, i32) {
    %c0_i32 = arith.constant 0 : i32
    %c0_i32_0 = arith.constant 0 : i32
    %c0_i32_1 = arith.constant 0 : i32
    return %c0_i32, %c0_i32_0 : i32, i32
  }
  func.func @transform_7(%arg0: i32, %arg1: i32, %arg2: memref<2x2xi32, #tpu.memory_space<smem>>, %arg3: memref<2x2xi32, #tpu.memory_space<smem>>) -> (i32, i32) {
    %c0_i32 = arith.constant 0 : i32
    %c0_i32_0 = arith.constant 0 : i32
    return %arg0, %c0_i32 : i32, i32
  }
}

</mosaic_0001>

<llo_original>
// kernel: tpu_custom_call.1
$region0: #{tpu_custom_call.1}
  #allocation0 [shape = 'u32[]', space=smem, size = 0x4, offset = 0x4, fixed_abs, tag = 'smem constant byte address 0x4 - core index']
  #allocation1 [shape = 'u32[144,128]{1,0:T(1,128)}', space=vmem, size = 0x12000, scoped, tag = 'internal scratch']
  #allocation2 [shape = 'f32[384,16]{1,0:T(8,128)}', space=vmem, size = 0x30000, scoped, tag = 'scratch operand']
  #allocation3 [shape = 's32[1]{0}', space=sflag, size = 0x4, scoped, tag = 'scoped memory for tpu_custom_call.1']
  #allocation4 [shape = 'u8[1024]{0}', space=smem, size = 0x400, scoped, tag = 'prefetched SMEM operand 0']
  #allocation5 [shape = 'u8[1024]{0}', space=smem, size = 0x400, scoped, tag = 'prefetched SMEM operand 1']
  %s0 = inlined_call_operand.hbm [shape: s32[2,2], index: 0, kind: input, shape index: {}]
  %s1 = inlined_call_operand.hbm [shape: s32[2,2], index: 1, kind: input, shape index: {}]
  %s2 = inlined_call_operand.hbm [shape: bf16[768,768], index: 2, kind: input, shape index: {}]
  %s3 = inlined_call_operand.vmem [shape: f32[768,8], index: 3, kind: input, shape index: {}]
  %s4 = inlined_call_operand.hbm [shape: f32[8,16], index: 4, kind: input, shape index: {}]
  %s5 = inlined_call_operand.hbm [shape: f32[1,16], index: 5, kind: input, shape index: {}]
  %s6 = inlined_call_operand.vmem [shape: f32[768,8], index: 6, kind: input, shape index: {}]
  %s7 = inlined_call_operand.hbm [shape: f32[16,16], index: 7, kind: input, shape index: {}]
  %s8 = inlined_call_operand.hbm [shape: f32[8,16], index: 8, kind: input, shape index: {}]
  %s9 = inlined_call_operand.vmem [shape: f32[768,16], index: 9, kind: output, shape index: {}]
  %s10 = sld [smem:[#allocation0]]
  $region93: #{tpu_custom_call.1} parent=0
    _
  %s12 = ssub.s32 1, %s10
  %s13 = scalar_select 0, %s12, %s10
  %15 = dma.hbm_to_smem %s0, 32, [#allocation4], [#allocation3]
  %17 = dma.hbm_to_smem %s1, 32, [#allocation5], [#allocation3]
  %18 = dma.done [#allocation3], 64
  %19 = sfence
  $region1: #{tpu_custom_call.1} parent=0
    #allocation6 [shape = 'u8[589824]{0}', space=vmem, size = 0x90000, scoped, tag = 'input window, operand 2']
    #allocation7 [shape = 's32[2]{0}', space=sflag, size = 0x8, scoped, tag = 'scoped memory for tpu_custom_call.1']
    #allocation8 [shape = 'u8[4096]{0}', space=vmem, size = 0x1000, scoped, tag = 'input window, operand 4, single buffered']
    #allocation9 [shape = 's32[1]{0}', space=sflag, size = 0x4, scoped, tag = 'scoped memory for tpu_custom_call.1']
    #allocation10 [shape = 'u8[512]{0}', space=vmem, size = 0x400, scoped, tag = 'input window, operand 5, single buffered']
    #allocation11 [shape = 'u8[8192]{0}', space=vmem, size = 0x2000, scoped, tag = 'input window, operand 7, single buffered']
    #allocation12 [shape = 's32[1]{0}', space=sflag, size = 0x4, scoped, tag = 'scoped memory for tpu_custom_call.1']
    #allocation13 [shape = 'u8[4096]{0}', space=vmem, size = 0x1000, scoped, tag = 'input window, operand 8, single buffered']
    %20 = vsyncpa [#allocation7], 0
    %s21 = scalar_lea.sflag [#allocation7], 1
    %22 = vsyncpa %s21, 0
    %23 = vsyncpa [#allocation9], 0
    %24 = vsyncpa [#allocation12], 0
    loop: start=0, step=1, limit=6
    $region2: #{tpu_custom_call.1} parent=1 // loop_pre_header
      _
    $region3: #{tpu_custom_call.1} parent=1 // loop_header
      %s26 = sphi 0, %s30
      %p27 = scmp.ge.s32.totalorder %s26, 6
      %s33 = sphi 0, %s45
      %s34 = sphi 0, %s41
      %s35 = sphi 0, %s33
      %s36 = sphi 0, %s34
      %s37 = sphi 0, %s35
      %s38 = sphi 0, %s36
      %s66 = sphi 0, %s68
      %s69 = sphi 0, %s66
      %s70 = sphi 0, %s69
      %s86 = sphi 0, %s70
      %s108 = sphi 0, %s110
      %s111 = sphi 0, %s108
      %s112 = sphi 0, %s111
      %s128 = sphi 0, %s112
      %s132 = sphi 0, %s132
      %s134 = sphi 0, %s132
      %s135 = sphi 0, %s134
      %s149 = sphi 0, %s135
      %s153 = sphi 0, %s153
      %s155 = sphi 0, %s153
      %s156 = sphi 0, %s155
      %s170 = sphi 0, %s156
      %s176 = sphi 0, %s178
      %s179 = sphi 0, %s176
      %s180 = sphi 0, %s179
      %s196 = sphi 0, %s180
      %s200 = sphi 0, %s200
      %s202 = sphi 0, %s200
      %s203 = sphi 0, %s202
      %s217 = sphi 0, %s203
      %s221 = sphi 0, %s221
      %s223 = sphi 0, %s221
      %s224 = sphi 0, %s223
      %s238 = sphi 0, %s224
      %s244 = sphi 0, %s246
      %s247 = sphi 0, %s244
      %s248 = sphi 0, %s247
      %s264 = sphi 0, %s248
    $region4: #{tpu_custom_call.1} parent=1 // loop_header_branch
      %29 = sbr.rel (%p27) target = $region8
    $region5: #{tpu_custom_call.1} parent=1 // loop_body
      %s31 = ssub.s32 %s26, 1
      %s32 = ssub.s32 %s26, 2
      %s39 = sadd.s32 1, %s34
      %p40 = scmp.ge.s32.totalorder %s39, 2
      %s41 = scalar_select %p40, 0, %s39
      %s42 = sadd.s32 1, %s33
      %s43 = scalar_select %p40, %s42, %s33
      %p44 = scmp.ge.s32.totalorder %s43, 2
      %s45 = scalar_select %p44, 0, %s43
      %s46 = sshra.s32 %s34, 7
      %s47 = sand.u32 %s34, 127
      %s48 = sadd.s32 %s46, %s33
      %s49 = smul.u32 %s48, 128
      %s50 = sshra.s32 %s34, 7
      %s51 = sand.u32 %s34, 127
      %s52 = sadd.s32 %s49, %s51
      %s53 = sld [smem:[#allocation5 + %s52]]
      %s54 = sshra.s32 %s41, 7
      %s55 = sand.u32 %s41, 127
      %s56 = sadd.s32 %s54, %s45
      %s57 = smul.u32 %s56, 128
      %s58 = sshra.s32 %s41, 7
      %s59 = sand.u32 %s41, 127
      %s60 = sadd.s32 %s57, %s59
      %s61 = sld [smem:[#allocation5 + %s60]]
      %s62 = ssub.s32 %s33, %s45
      %s63 = ssub.s32 %s53, %s61
      %s64 = sor.u32 %s62, %s63
      %p65 = scmp.eq.s32.totalorder %s64, 0
      %s67 = sadd.s32 %s66, 1
      %s68 = scalar_select %p65, %s66, %s67
      %p71 = pneg %p65
      %p72 = scmp.eq.s32.totalorder %s26, 3
      %p73 = por %p71, %p72
      %p74 = scmp.ne.s32.totalorder %s66, %s69
      %p75 = scmp.eq.s32.totalorder %s26, 0
      %p76 = por %p74, %p75
      %p77 = scmp.ne.s32.totalorder %s66, %s69
      %p78 = scmp.eq.s32.totalorder %s31, 3
      %p79 = por %p77, %p78
      %p80 = scmp.ne.s32.totalorder %s69, %s70
      %p81 = scmp.eq.s32.totalorder %s31, 0
      %p82 = por %p80, %p81
      %p83 = scmp.ne.s32.totalorder %s69, %s70
      %p84 = scmp.eq.s32.totalorder %s32, 3
      %p85 = por %p83, %p84
      %p87 = scmp.ne.s32.totalorder %s70, %s86
      %p88 = scmp.eq.s32.totalorder %s32, 0
      %p89 = por %p87, %p88
      %s90 = sshra.s32 %s34, 7
      %s91 = sand.u32 %s34, 127
      %s92 = sadd.s32 %s90, %s33
      %s93 = smul.u32 %s92, 128
      %s94 = sshra.s32 %s34, 7
      %s95 = sand.u32 %s34, 127
      %s96 = sadd.s32 %s93, %s95
      %s97 = sld [smem:[#allocation5 + %s96]]
      %s98 = sshra.s32 %s41, 7
      %s99 = sand.u32 %s41, 127
      %s100 = sadd.s32 %s98, %s45
      %s101 = smul.u32 %s100, 128
      %s102 = sshra.s32 %s41, 7
      %s103 = sand.u32 %s41, 127
      %s104 = sadd.s32 %s101, %s103
      %s105 = sld [smem:[#allocation5 + %s104]]
      %s106 = ssub.s32 %s97, %s105
      %p107 = scmp.eq.s32.totalorder %s106, 0
      %s109 = sadd.s32 %s108, 1
      %s110 = scalar_select %p107, %s108, %s109
      %p113 = pneg %p107
      %p114 = scmp.eq.s32.totalorder %s26, 3
      %p115 = por %p113, %p114
      %p116 = scmp.ne.s32.totalorder %s108, %s111
      %p117 = scmp.eq.s32.totalorder %s26, 0
      %p118 = por %p116, %p117
      %p119 = scmp.ne.s32.totalorder %s108, %s111
      %p120 = scmp.eq.s32.totalorder %s31, 3
      %p121 = por %p119, %p120
      %p122 = scmp.ne.s32.totalorder %s111, %s112
      %p123 = scmp.eq.s32.totalorder %s31, 0
      %p124 = por %p122, %p123
      %p125 = scmp.ne.s32.totalorder %s111, %s112
      %p126 = scmp.eq.s32.totalorder %s32, 3
      %p127 = por %p125, %p126
      %p129 = scmp.ne.s32.totalorder %s112, %s128
      %p130 = scmp.eq.s32.totalorder %s32, 0
      %p131 = por %p129, %p130
      %s133 = sadd.s32 %s132, 1
      %p136 = scmp.eq.s32.totalorder %s26, 3
      %p137 = scmp.ne.s32.totalorder %s132, %s134
      %p138 = scmp.eq.s32.totalorder %s26, 0
      %p139 = por %p137, %p138
      %p140 = scmp.ne.s32.totalorder %s132, %s134
      %p141 = scmp.eq.s32.totalorder %s31, 3
      %p142 = por %p140, %p141
      %p143 = scmp.ne.s32.totalorder %s134, %s135
      %p144 = scmp.eq.s32.totalorder %s31, 0
      %p145 = por %p143, %p144
      %p146 = scmp.ne.s32.totalorder %s134, %s135
      %p147 = scmp.eq.s32.totalorder %s32, 3
      %p148 = por %p146, %p147
      %p150 = scmp.ne.s32.totalorder %s135, %s149
      %p151 = scmp.eq.s32.totalorder %s32, 0
      %p152 = por %p150, %p151
      %s154 = sadd.s32 %s153, 1
      %p157 = scmp.eq.s32.totalorder %s26, 3
      %p158 = scmp.ne.s32.totalorder %s153, %s155
      %p159 = scmp.eq.s32.totalorder %s26, 0
      %p160 = por %p158, %p159
      %p161 = scmp.ne.s32.totalorder %s153, %s155
      %p162 = scmp.eq.s32.totalorder %s31, 3
      %p163 = por %p161, %p162
      %p164 = scmp.ne.s32.totalorder %s155, %s156
      %p165 = scmp.eq.s32.totalorder %s31, 0
      %p166 = por %p164, %p165
      %p167 = scmp.ne.s32.totalorder %s155, %s156
      %p168 = scmp.eq.s32.totalorder %s32, 3
      %p169 = por %p167, %p168
      %p171 = scmp.ne.s32.totalorder %s156, %s170
      %p172 = scmp.eq.s32.totalorder %s32, 0
      %p173 = por %p171, %p172
      %s174 = ssub.s32 %s33, %s45
      %p175 = scmp.eq.s32.totalorder %s174, 0
      %s177 = sadd.s32 %s176, 1
      %s178 = scalar_select %p175, %s176, %s177
      %p181 = pneg %p175
      %p182 = scmp.eq.s32.totalorder %s26, 3
      %p183 = por %p181, %p182
      %p184 = scmp.ne.s32.totalorder %s176, %s179
      %p185 = scmp.eq.s32.totalorder %s26, 0
      %p186 = por %p184, %p185
      %p187 = scmp.ne.s32.totalorder %s176, %s179
      %p188 = scmp.eq.s32.totalorder %s31, 3
      %p189 = por %p187, %p188
      %p190 = scmp.ne.s32.totalorder %s179, %s180
      %p191 = scmp.eq.s32.totalorder %s31, 0
      %p192 = por %p190, %p191
      %p193 = scmp.ne.s32.totalorder %s179, %s180
      %p194 = scmp.eq.s32.totalorder %s32, 3
      %p195 = por %p193, %p194
      %p197 = scmp.ne.s32.totalorder %s180, %s196
      %p198 = scmp.eq.s32.totalorder %s32, 0
      %p199 = por %p197, %p198
      %s201 = sadd.s32 %s200, 1
      %p204 = scmp.eq.s32.totalorder %s26, 3
      %p205 = scmp.ne.s32.totalorder %s200, %s202
      %p206 = scmp.eq.s32.totalorder %s26, 0
      %p207 = por %p205, %p206
      %p208 = scmp.ne.s32.totalorder %s200, %s202
      %p209 = scmp.eq.s32.totalorder %s31, 3
      %p210 = por %p208, %p209
      %p211 = scmp.ne.s32.totalorder %s202, %s203
      %p212 = scmp.eq.s32.totalorder %s31, 0
      %p213 = por %p211, %p212
      %p214 = scmp.ne.s32.totalorder %s202, %s203
      %p215 = scmp.eq.s32.totalorder %s32, 3
      %p216 = por %p214, %p215
      %p218 = scmp.ne.s32.totalorder %s203, %s217
      %p219 = scmp.eq.s32.totalorder %s32, 0
      %p220 = por %p218, %p219
      %s222 = sadd.s32 %s221, 1
      %p225 = scmp.eq.s32.totalorder %s26, 3
      %p226 = scmp.ne.s32.totalorder %s221, %s223
      %p227 = scmp.eq.s32.totalorder %s26, 0
      %p228 = por %p226, %p227
      %p229 = scmp.ne.s32.totalorder %s221, %s223
      %p230 = scmp.eq.s32.totalorder %s31, 3
      %p231 = por %p229, %p230
      %p232 = scmp.ne.s32.totalorder %s223, %s224
      %p233 = scmp.eq.s32.totalorder %s31, 0
      %p234 = por %p232, %p233
      %p235 = scmp.ne.s32.totalorder %s223, %s224
      %p236 = scmp.eq.s32.totalorder %s32, 3
      %p237 = por %p235, %p236
      %p239 = scmp.ne.s32.totalorder %s224, %s238
      %p240 = scmp.eq.s32.totalorder %s32, 0
      %p241 = por %p239, %p240
      %s242 = ssub.s32 %s33, %s45
      %p243 = scmp.eq.s32.totalorder %s242, 0
      %s245 = sadd.s32 %s244, 1
      %s246 = scalar_select %p243, %s244, %s245
      %p249 = pneg %p243
      %p250 = scmp.eq.s32.totalorder %s26, 3
      %p251 = por %p249, %p250
      %p252 = scmp.ne.s32.totalorder %s244, %s247
      %p253 = scmp.eq.s32.totalorder %s26, 0
      %p254 = por %p252, %p253
      %p255 = scmp.ne.s32.totalorder %s244, %s247
      %p256 = scmp.eq.s32.totalorder %s31, 3
      %p257 = por %p255, %p256
      %p258 = scmp.ne.s32.totalorder %s247, %s248
      %p259 = scmp.eq.s32.totalorder %s31, 0
      %p260 = por %p258, %p259
      %p261 = scmp.ne.s32.totalorder %s247, %s248
      %p262 = scmp.eq.s32.totalorder %s32, 3
      %p263 = por %p261, %p262
      %p265 = scmp.ne.s32.totalorder %s248, %s264
      %p266 = scmp.eq.s32.totalorder %s32, 0
      %p267 = por %p265, %p266
      %p268 = scmp.le.s32.totalorder 1, %s26
      %p269 = scmp.lt.s32.totalorder %s26, 5
      %p270 = pnand %p268, %p269
      %p271 = pneg %p270
      // Predicated region
      $region9: #{tpu_custom_call.1} parent=5 // pred_check
        _
      $region10: #{tpu_custom_call.1} parent=5 // pred_check_branch
        %273 = sbr.rel (%p270) target = $region12
      $region11: #{tpu_custom_call.1} parent=5 // pred_region
        %s274 = ssub.s32 %s26, 1
        // Predicated region
        $region13: #{tpu_custom_call.1} parent=11 // pred_check
          %p275 = pneg %p145
        $region14: #{tpu_custom_call.1} parent=11 // pred_check_branch
          %277 = sbr.rel (%p275) target = $region16
        $region15: #{tpu_custom_call.1} parent=11 // pred_region
          %s279 = ssub.s32 128, 128
          %280 = vsyncadd [#allocation9], %s279
          %s282 = sshll.u32 [#allocation8], 4
          %s283 = int_to_ptr.vmem [resolvable:$true] %s282
          %285 = dma.hbm_to_vmem [thread:$0]  %s4, 128, %s283, [#allocation9]
        $region16: #{tpu_custom_call.1} parent=11 // pred_fallthru
          _
        // Predicated region
        $region17: #{tpu_custom_call.1} parent=11 // pred_check
          %p286 = pneg %p166
        $region18: #{tpu_custom_call.1} parent=11 // pred_check_branch
          %288 = sbr.rel (%p286) target = $region20
        $region19: #{tpu_custom_call.1} parent=11 // pred_region
          %s290 = ssub.s32 16, 16
          %291 = vsyncadd [#allocation9], %s290
          %s293 = sshll.u32 [#allocation10], 4
          %s294 = int_to_ptr.vmem [resolvable:$true] %s293
          %296 = dma.hbm_to_vmem [thread:$0]  %s5, 16, %s294, [#allocation9]
        $region20: #{tpu_custom_call.1} parent=11 // pred_fallthru
          _
        // Predicated region
        $region21: #{tpu_custom_call.1} parent=11 // pred_check
          %p297 = pneg %p213
        $region22: #{tpu_custom_call.1} parent=11 // pred_check_branch
          %299 = sbr.rel (%p297) target = $region24
        $region23: #{tpu_custom_call.1} parent=11 // pred_region
          %s301 = ssub.s32 256, 256
          %302 = vsyncadd [#allocation12], %s301
          %s303 = sshll.u32 [#allocation11], 4
          %s304 = int_to_ptr.vmem [resolvable:$true] %s303
          %309 = dma.hbm_to_vmem [thread:$0]  %s7, 256, %s304, [#allocation12], 128, 128, 8
        $region24: #{tpu_custom_call.1} parent=11 // pred_fallthru
          _
        // Predicated region
        $region25: #{tpu_custom_call.1} parent=11 // pred_check
          %p310 = pneg %p234
        $region26: #{tpu_custom_call.1} parent=11 // pred_check_branch
          %312 = sbr.rel (%p310) target = $region28
        $region27: #{tpu_custom_call.1} parent=11 // pred_region
          %s314 = ssub.s32 128, 128
          %315 = vsyncadd [#allocation12], %s314
          %s317 = sshll.u32 [#allocation13], 4
          %s318 = int_to_ptr.vmem [resolvable:$true] %s317
          %320 = dma.hbm_to_vmem [thread:$0]  %s8, 128, %s318, [#allocation12]
        $region28: #{tpu_custom_call.1} parent=11 // pred_fallthru
          _
      $region12: #{tpu_custom_call.1} parent=5 // pred_fallthru
        _
      %p321 = scmp.lt.s32.totalorder %s26, 4
      // Predicated region
      $region29: #{tpu_custom_call.1} parent=5 // pred_check
        %p322 = pneg %p321
      $region30: #{tpu_custom_call.1} parent=5 // pred_check_branch
        %324 = sbr.rel (%p322) target = $region32
      $region31: #{tpu_custom_call.1} parent=5 // pred_region
        // Predicated region
        $region33: #{tpu_custom_call.1} parent=31 // pred_check
          %p325 = pneg %p76
        $region34: #{tpu_custom_call.1} parent=31 // pred_check_branch
          %327 = sbr.rel (%p325) target = $region36
        $region35: #{tpu_custom_call.1} parent=31 // pred_region
          %s328 = sand.u32 %s66, 1
          %s329 = scalar_lea.sflag [#allocation7], %s328
          %s330 = sand.u32 %s66, 1
          %s331 = smul.addr %s330, 576
          %s332 = scalar_lea.vmem [#allocation6], %s331
          %s333 = sshra.s32 %s34, 7
          %s334 = sand.u32 %s34, 127
          %s335 = sadd.s32 %s333, %s33
          %s336 = smul.u32 %s335, 128
          %s337 = sshra.s32 %s34, 7
          %s338 = sand.u32 %s34, 127
          %s339 = sadd.s32 %s336, %s338
          %s340 = sld [smem:[#allocation5 + %s339]]
          %s341 = smul.u32 48, %s33
          %s342 = smul.u32 3, %s340
          %s344 = ssub.s32 9216, 9216
          %345 = vsyncadd %s329, %s344
          %s346 = smul.addr %s341, 6
          %s347 = sadd.s32 %s342, %s346
          %s348 = smul.addr %s347, 64
          %s349 = scalar_lea.hbm %s2, %s348
          %s350 = sshll.u32 %s332, 4
          %s351 = int_to_ptr.vmem [resolvable:$true] %s350
          %356 = dma.hbm_to_vmem [thread:$0]  %s349, 9216, %s351, %s329, 384, 192, 12
        $region36: #{tpu_custom_call.1} parent=31 // pred_fallthru
          _
        // Predicated region
        $region37: #{tpu_custom_call.1} parent=31 // pred_check
          %p357 = pneg %p118
        $region38: #{tpu_custom_call.1} parent=31 // pred_check_branch
          %359 = sbr.rel (%p357) target = $region40
        $region39: #{tpu_custom_call.1} parent=31 // pred_region
          %s360 = sshra.s32 %s34, 7
          %s361 = sand.u32 %s34, 127
          %s362 = sadd.s32 %s360, %s33
          %s363 = smul.u32 %s362, 128
          %s364 = sshra.s32 %s34, 7
          %s365 = sand.u32 %s34, 127
          %s366 = sadd.s32 %s363, %s365
          %s367 = sld [smem:[#allocation5 + %s366]]
          %s368 = smul.u32 48, %s367
          %p369 = scmp.lt.s32.totalorder %s368, 95
          %s370 = scalar_select %p369, %s368, 95
          %s371 = smul.addr %s370, 8
          %s372 = scalar_lea.vmem %s3, %s371
          %s373 = sshra.s32 %s34, 7
          %s374 = sand.u32 %s34, 127
          %s375 = sadd.s32 %s373, %s33
          %s376 = smul.u32 %s375, 128
          %s377 = sshra.s32 %s34, 7
          %s378 = sand.u32 %s34, 127
          %s379 = sadd.s32 %s376, %s378
          %s380 = sld [smem:[#allocation5 + %s379]]
          %s381 = smul.u32 48, %s380
        $region40: #{tpu_custom_call.1} parent=31 // pred_fallthru
          _
        // Predicated region
        $region41: #{tpu_custom_call.1} parent=31 // pred_check
          %p382 = pneg %p186
        $region42: #{tpu_custom_call.1} parent=31 // pred_check_branch
          %384 = sbr.rel (%p382) target = $region44
        $region43: #{tpu_custom_call.1} parent=31 // pred_region
          %s385 = smul.u32 48, %s33
          %p386 = scmp.lt.s32.totalorder %s385, 95
          %s387 = scalar_select %p386, %s385, 95
          %s388 = smul.addr %s387, 8
          %s389 = scalar_lea.vmem %s6, %s388
          %s390 = smul.u32 48, %s33
        $region44: #{tpu_custom_call.1} parent=31 // pred_fallthru
          _
      $region32: #{tpu_custom_call.1} parent=5 // pred_fallthru
        _
      %p391 = scmp.le.s32.totalorder 1, %s26
      %p392 = scmp.lt.s32.totalorder %s26, 5
      %p393 = pnand %p391, %p392
      %p394 = pneg %p393
      // Predicated region
      $region45: #{tpu_custom_call.1} parent=5 // pred_check
        _
      $region46: #{tpu_custom_call.1} parent=5 // pred_check_branch
        %396 = sbr.rel (%p393) target = $region48
      $region47: #{tpu_custom_call.1} parent=5 // pred_region
        %s397 = ssub.s32 %s26, 1
        %s398 = sand.u32 %s69, 1
        %s399 = scalar_lea.sflag [#allocation7], %s398
        %s400 = sand.u32 %s69, 1
        %s401 = smul.addr %s400, 576
        %s402 = scalar_lea.vmem [#allocation6], %s401
        // Predicated region
        $region49: #{tpu_custom_call.1} parent=47 // pred_check
          %p403 = pneg %p82
        $region50: #{tpu_custom_call.1} parent=47 // pred_check_branch
          %405 = sbr.rel (%p403) target = $region52
        $region51: #{tpu_custom_call.1} parent=47 // pred_region
          %406 = dma.done %s399, 9216
        $region52: #{tpu_custom_call.1} parent=47 // pred_fallthru
          _
        // Predicated region
        $region53: #{tpu_custom_call.1} parent=47 // pred_check
          %p407 = pneg %p145
        $region54: #{tpu_custom_call.1} parent=47 // pred_check_branch
          %409 = sbr.rel (%p407) target = $region56
        $region55: #{tpu_custom_call.1} parent=47 // pred_region
          %410 = dma.done [#allocation9], 128
        $region56: #{tpu_custom_call.1} parent=47 // pred_fallthru
          _
        // Predicated region
        $region57: #{tpu_custom_call.1} parent=47 // pred_check
          %p411 = pneg %p166
        $region58: #{tpu_custom_call.1} parent=47 // pred_check_branch
          %413 = sbr.rel (%p411) target = $region60
        $region59: #{tpu_custom_call.1} parent=47 // pred_region
          %414 = dma.done [#allocation9], 16
        $region60: #{tpu_custom_call.1} parent=47 // pred_fallthru
          _
        // Predicated region
        $region61: #{tpu_custom_call.1} parent=47 // pred_check
          %p415 = pneg %p213
        $region62: #{tpu_custom_call.1} parent=47 // pred_check_branch
          %417 = sbr.rel (%p415) target = $region64
        $region63: #{tpu_custom_call.1} parent=47 // pred_region
          %418 = dma.done [#allocation12], 256
        $region64: #{tpu_custom_call.1} parent=47 // pred_fallthru
          _
        // Predicated region
        $region65: #{tpu_custom_call.1} parent=47 // pred_check
          %p419 = pneg %p234
        $region66: #{tpu_custom_call.1} parent=47 // pred_check_branch
          %421 = sbr.rel (%p419) target = $region68
        $region67: #{tpu_custom_call.1} parent=47 // pred_region
          %422 = dma.done [#allocation12], 128
        $region68: #{tpu_custom_call.1} parent=47 // pred_fallthru
          _
        %s423 = sand.u32 %s69, 1
        %s424 = scalar_lea.sflag [#allocation7], %s423
        %s425 = sand.u32 %s69, 1
        %s426 = smul.addr %s425, 576
        %s427 = scalar_lea.vmem [#allocation6], %s426
        %p428 = pneg %p82
        %p429 = pneg %p79
        %s430 = sshra.s32 %s36, 7
        %s431 = sand.u32 %s36, 127
        %s432 = sadd.s32 %s430, %s35
        %s433 = smul.u32 %s432, 128
        %s434 = sshra.s32 %s36, 7
        %s435 = sand.u32 %s36, 127
        %s436 = sadd.s32 %s433, %s435
        %s437 = sld [smem:[#allocation5 + %s436]]
        %s438 = smul.u32 48, %s437
        %p439 = scmp.lt.s32.totalorder %s438, 95
        %s440 = scalar_select %p439, %s438, 95
        %s441 = smul.addr %s440, 8
        %s442 = scalar_lea.vmem %s3, %s441
        %p443 = pneg %p124
        %p444 = pneg %p121
        %p445 = pneg %p145
        %p446 = pneg %p142
        %p447 = pneg %p166
        %p448 = pneg %p163
        %s449 = smul.u32 48, %s35
        %p450 = scmp.lt.s32.totalorder %s449, 95
        %s451 = scalar_select %p450, %s449, 95
        %s452 = smul.addr %s451, 8
        %s453 = scalar_lea.vmem %s6, %s452
        %p454 = pneg %p192
        %p455 = pneg %p189
        %p456 = pneg %p213
        %p457 = pneg %p210
        %p458 = pneg %p234
        %p459 = pneg %p231
        %p460 = pneg %p260
        %p461 = pneg %p257
        %s462 = smul.u32 48, %s35
        %p463 = scmp.lt.s32.totalorder %s462, 95
        %s464 = scalar_select %p463, %s462, 95
        %s465 = smul.addr %s464, 8
        %s466 = scalar_lea.vmem %s9, %s465
        %s467 = sshra.s32 %s36, 7
        %s468 = sand.u32 %s36, 127
        %s469 = sadd.s32 %s467, %s35
        %s470 = smul.u32 %s469, 128
        %s471 = sshra.s32 %s36, 7
        %s472 = sand.u32 %s36, 127
        %s473 = sadd.s32 %s470, %s472
        %s474 = sld [smem:[#allocation5 + %s473]]
        %s475 = smul.u32 48, %s35
        %s476 = smul.u32 3, %s474
        %s477 = sshra.s32 %s36, 7
        %s478 = sand.u32 %s36, 127
        %s479 = sadd.s32 %s477, %s35
        %s480 = smul.u32 %s479, 128
        %s481 = sshra.s32 %s36, 7
        %s482 = sand.u32 %s36, 127
        %s483 = sadd.s32 %s480, %s482
        %s484 = sld [smem:[#allocation5 + %s483]]
        %s485 = smul.u32 48, %s484
        %p486 = scmp.lt.s32.totalorder %s485, 95
        %s487 = scalar_select %p486, %s485, 95
        %s488 = smul.addr %s487, 8
        %s489 = scalar_lea.vmem %s3, %s488
        %s490 = sshra.s32 %s36, 7
        %s491 = sand.u32 %s36, 127
        %s492 = sadd.s32 %s490, %s35
        %s493 = smul.u32 %s492, 128
        %s494 = sshra.s32 %s36, 7
        %s495 = sand.u32 %s36, 127
        %s496 = sadd.s32 %s493, %s495
        %s497 = sld [smem:[#allocation5 + %s496]]
        %s498 = smul.u32 48, %s497
        %s499 = smul.u32 48, %s35
        %p500 = scmp.lt.s32.totalorder %s499, 95
        %s501 = scalar_select %p500, %s499, 95
        %s502 = smul.addr %s501, 8
        %s503 = scalar_lea.vmem %s6, %s502
        %s504 = smul.u32 48, %s35
        %s505 = smul.u32 48, %s35
        %p506 = scmp.lt.s32.totalorder %s505, 95
        %s507 = scalar_select %p506, %s505, 95
        %s508 = smul.addr %s507, 8
        %s509 = scalar_lea.vmem %s9, %s508
        %s510 = smul.u32 48, %s35
        %p512 = scmp.eq.s32.totalorder %s36, 0
        // Predicated region
        $region69: #{tpu_custom_call.1} parent=47 // pred_check
          %p513 = pneg %p512
        $region70: #{tpu_custom_call.1} parent=47 // pred_check_branch
          %515 = sbr.rel (%p513) target = $region72
        $region71: #{tpu_custom_call.1} parent=47 // pred_region
          %vm516 = vcmask 130048
          %517 = vst.msk [vmem:[#allocation2] sm:$0xff] %vm516, 0.0
          %518 = vst.msk [vmem:[#allocation2 + $0x8] sm:$0xff] %vm516, 0.0
          %519 = vst.msk [vmem:[#allocation2 + $0x10] sm:$0xff] %vm516, 0.0
          %520 = vst.msk [vmem:[#allocation2 + $0x18] sm:$0xff] %vm516, 0.0
          %521 = vst.msk [vmem:[#allocation2 + $0x20] sm:$0xff] %vm516, 0.0
          %522 = vst.msk [vmem:[#allocation2 + $0x28] sm:$0xff] %vm516, 0.0
          %523 = vst.msk [vmem:[#allocation2 + $0x30] sm:$0xff] %vm516, 0.0
          %524 = vst.msk [vmem:[#allocation2 + $0x38] sm:$0xff] %vm516, 0.0
          %525 = vst.msk [vmem:[#allocation2 + $0x40] sm:$0xff] %vm516, 0.0
          %526 = vst.msk [vmem:[#allocation2 + $0x48] sm:$0xff] %vm516, 0.0
          %527 = vst.msk [vmem:[#allocation2 + $0x50] sm:$0xff] %vm516, 0.0
          %528 = vst.msk [vmem:[#allocation2 + $0x58] sm:$0xff] %vm516, 0.0
          %529 = vst.msk [vmem:[#allocation2 + $0x60] sm:$0xff] %vm516, 0.0
          %530 = vst.msk [vmem:[#allocation2 + $0x68] sm:$0xff] %vm516, 0.0
          %531 = vst.msk [vmem:[#allocation2 + $0x70] sm:$0xff] %vm516, 0.0
          %532 = vst.msk [vmem:[#allocation2 + $0x78] sm:$0xff] %vm516, 0.0
          %533 = vst.msk [vmem:[#allocation2 + $0x80] sm:$0xff] %vm516, 0.0
          %534 = vst.msk [vmem:[#allocation2 + $0x88] sm:$0xff] %vm516, 0.0
          %535 = vst.msk [vmem:[#allocation2 + $0x90] sm:$0xff] %vm516, 0.0
          %536 = vst.msk [vmem:[#allocation2 + $0x98] sm:$0xff] %vm516, 0.0
          %537 = vst.msk [vmem:[#allocation2 + $0xa0] sm:$0xff] %vm516, 0.0
          %538 = vst.msk [vmem:[#allocation2 + $0xa8] sm:$0xff] %vm516, 0.0
          %539 = vst.msk [vmem:[#allocation2 + $0xb0] sm:$0xff] %vm516, 0.0
          %540 = vst.msk [vmem:[#allocation2 + $0xb8] sm:$0xff] %vm516, 0.0
          %541 = vst.msk [vmem:[#allocation2 + $0xc0] sm:$0xff] %vm516, 0.0
          %542 = vst.msk [vmem:[#allocation2 + $0xc8] sm:$0xff] %vm516, 0.0
          %543 = vst.msk [vmem:[#allocation2 + $0xd0] sm:$0xff] %vm516, 0.0
          %544 = vst.msk [vmem:[#allocation2 + $0xd8] sm:$0xff] %vm516, 0.0
          %545 = vst.msk [vmem:[#allocation2 + $0xe0] sm:$0xff] %vm516, 0.0
          %546 = vst.msk [vmem:[#allocation2 + $0xe8] sm:$0xff] %vm516, 0.0
          %547 = vst.msk [vmem:[#allocation2 + $0xf0] sm:$0xff] %vm516, 0.0
          %548 = vst.msk [vmem:[#allocation2 + $0xf8] sm:$0xff] %vm516, 0.0
          %549 = vst.msk [vmem:[#allocation2 + $0x100] sm:$0xff] %vm516, 0.0
          %550 = vst.msk [vmem:[#allocation2 + $0x108] sm:$0xff] %vm516, 0.0
          %551 = vst.msk [vmem:[#allocation2 + $0x110] sm:$0xff] %vm516, 0.0
          %552 = vst.msk [vmem:[#allocation2 + $0x118] sm:$0xff] %vm516, 0.0
          %553 = vst.msk [vmem:[#allocation2 + $0x120] sm:$0xff] %vm516, 0.0
          %554 = vst.msk [vmem:[#allocation2 + $0x128] sm:$0xff] %vm516, 0.0
          %555 = vst.msk [vmem:[#allocation2 + $0x130] sm:$0xff] %vm516, 0.0
          %556 = vst.msk [vmem:[#allocation2 + $0x138] sm:$0xff] %vm516, 0.0
          %557 = vst.msk [vmem:[#allocation2 + $0x140] sm:$0xff] %vm516, 0.0
          %558 = vst.msk [vmem:[#allocation2 + $0x148] sm:$0xff] %vm516, 0.0
          %559 = vst.msk [vmem:[#allocation2 + $0x150] sm:$0xff] %vm516, 0.0
          %560 = vst.msk [vmem:[#allocation2 + $0x158] sm:$0xff] %vm516, 0.0
          %561 = vst.msk [vmem:[#allocation2 + $0x160] sm:$0xff] %vm516, 0.0
          %562 = vst.msk [vmem:[#allocation2 + $0x168] sm:$0xff] %vm516, 0.0
          %563 = vst.msk [vmem:[#allocation2 + $0x170] sm:$0xff] %vm516, 0.0
          %564 = vst.msk [vmem:[#allocation2 + $0x178] sm:$0xff] %vm516, 0.0
        $region72: #{tpu_custom_call.1} parent=47 // pred_fallthru
          _
        %s565 = sshra.s32 %s36, 7
        %s566 = sand.u32 %s36, 127
        %s567 = sadd.s32 %s565, %s35
        %s568 = smul.u32 %s567, 128
        %s569 = sshra.s32 %s36, 7
        %s570 = sand.u32 %s36, 127
        %s571 = sadd.s32 %s568, %s570
        %s572 = sld [smem:[#allocation4 + %s571]]
        %p573 = scmp.ne.s32.totalorder %s572, 0
        // Predicated region
        $region73: #{tpu_custom_call.1} parent=47 // pred_check
          %p574 = pneg %p573
        $region74: #{tpu_custom_call.1} parent=47 // pred_check_branch
          %576 = sbr.rel (%p574) target = $region76
        $region75: #{tpu_custom_call.1} parent=47 // pred_region
          %v577 = vld [vmem:[%s489] sm:$0xff]
          %v578 = vld [vmem:[%s489 + $0x8] sm:$0xff]
          %v579 = vld [vmem:[%s489 + $0x10] sm:$0xff]
          %v580 = vld [vmem:[%s489 + $0x18] sm:$0xff]
          %v581 = vld [vmem:[%s489 + $0x20] sm:$0xff]
          %v582 = vld [vmem:[%s489 + $0x28] sm:$0xff]
          %v583 = vld [vmem:[%s489 + $0x30] sm:$0xff]
          %v584 = vld [vmem:[%s489 + $0x38] sm:$0xff]
          %v585 = vld [vmem:[%s489 + $0x40] sm:$0xff]
          %v586 = vld [vmem:[%s489 + $0x48] sm:$0xff]
          %v587 = vld [vmem:[%s489 + $0x50] sm:$0xff]
          %v588 = vld [vmem:[%s489 + $0x58] sm:$0xff]
          %v589 = vld [vmem:[%s489 + $0x60] sm:$0xff]
          %v590 = vld [vmem:[%s489 + $0x68] sm:$0xff]
          %v591 = vld [vmem:[%s489 + $0x70] sm:$0xff]
          %v592 = vld [vmem:[%s489 + $0x78] sm:$0xff]
          %v593 = vld [vmem:[%s489 + $0x80] sm:$0xff]
          %v594 = vld [vmem:[%s489 + $0x88] sm:$0xff]
          %v595 = vld [vmem:[%s489 + $0x90] sm:$0xff]
          %v596 = vld [vmem:[%s489 + $0x98] sm:$0xff]
          %v597 = vld [vmem:[%s489 + $0xa0] sm:$0xff]
          %v598 = vld [vmem:[%s489 + $0xa8] sm:$0xff]
          %v599 = vld [vmem:[%s489 + $0xb0] sm:$0xff]
          %v600 = vld [vmem:[%s489 + $0xb8] sm:$0xff]
          %v601 = vld [vmem:[%s489 + $0xc0] sm:$0xff]
          %v602 = vld [vmem:[%s489 + $0xc8] sm:$0xff]
          %v603 = vld [vmem:[%s489 + $0xd0] sm:$0xff]
          %v604 = vld [vmem:[%s489 + $0xd8] sm:$0xff]
          %v605 = vld [vmem:[%s489 + $0xe0] sm:$0xff]
          %v606 = vld [vmem:[%s489 + $0xe8] sm:$0xff]
          %v607 = vld [vmem:[%s489 + $0xf0] sm:$0xff]
          %v608 = vld [vmem:[%s489 + $0xf8] sm:$0xff]
          %v609 = vld [vmem:[%s489 + $0x100] sm:$0xff]
          %v610 = vld [vmem:[%s489 + $0x108] sm:$0xff]
          %v611 = vld [vmem:[%s489 + $0x110] sm:$0xff]
          %v612 = vld [vmem:[%s489 + $0x118] sm:$0xff]
          %v613 = vld [vmem:[%s489 + $0x120] sm:$0xff]
          %v614 = vld [vmem:[%s489 + $0x128] sm:$0xff]
          %v615 = vld [vmem:[%s489 + $0x130] sm:$0xff]
          %v616 = vld [vmem:[%s489 + $0x138] sm:$0xff]
          %v617 = vld [vmem:[%s489 + $0x140] sm:$0xff]
          %v618 = vld [vmem:[%s489 + $0x148] sm:$0xff]
          %v619 = vld [vmem:[%s489 + $0x150] sm:$0xff]
          %v620 = vld [vmem:[%s489 + $0x158] sm:$0xff]
          %v621 = vld [vmem:[%s489 + $0x160] sm:$0xff]
          %v622 = vld [vmem:[%s489 + $0x168] sm:$0xff]
          %v623 = vld [vmem:[%s489 + $0x170] sm:$0xff]
          %v624 = vld [vmem:[%s489 + $0x178] sm:$0xff]
          %v625 = vld [vmem:[#allocation8] sm:$0xff]
          %vm626 = vcmask 64512
          %v628 = vsel %vm626, %v577, 0
          %v631 = vsel %vm626, %v578, 0
          %v634 = vsel %vm626, %v579, 0
          %v637 = vsel %vm626, %v580, 0
          %v640 = vsel %vm626, %v581, 0
          %v643 = vsel %vm626, %v582, 0
          %v646 = vsel %vm626, %v583, 0
          %v649 = vsel %vm626, %v584, 0
          %v652 = vsel %vm626, %v585, 0
          %v655 = vsel %vm626, %v586, 0
          %v658 = vsel %vm626, %v587, 0
          %v661 = vsel %vm626, %v588, 0
          %v664 = vsel %vm626, %v589, 0
          %v667 = vsel %vm626, %v590, 0
          %v670 = vsel %vm626, %v591, 0
          %v673 = vsel %vm626, %v592, 0
          %v676 = vsel %vm626, %v593, 0
          %v679 = vsel %vm626, %v594, 0
          %v682 = vsel %vm626, %v595, 0
          %v685 = vsel %vm626, %v596, 0
          %v688 = vsel %vm626, %v597, 0
          %v691 = vsel %vm626, %v598, 0
          %v694 = vsel %vm626, %v599, 0
          %v697 = vsel %vm626, %v600, 0
          %v700 = vsel %vm626, %v601, 0
          %v703 = vsel %vm626, %v602, 0
          %v706 = vsel %vm626, %v603, 0
          %v709 = vsel %vm626, %v604, 0
          %v712 = vsel %vm626, %v605, 0
          %v715 = vsel %vm626, %v606, 0
          %v718 = vsel %vm626, %v607, 0
          %v721 = vsel %vm626, %v608, 0
          %v724 = vsel %vm626, %v609, 0
          %v727 = vsel %vm626, %v610, 0
          %v730 = vsel %vm626, %v611, 0
          %v733 = vsel %vm626, %v612, 0
          %v736 = vsel %vm626, %v613, 0
          %v739 = vsel %vm626, %v614, 0
          %v742 = vsel %vm626, %v615, 0
          %v745 = vsel %vm626, %v616, 0
          %v748 = vsel %vm626, %v617, 0
          %v751 = vsel %vm626, %v618, 0
          %v754 = vsel %vm626, %v619, 0
          %v757 = vsel %vm626, %v620, 0
          %v760 = vsel %vm626, %v621, 0
          %v763 = vsel %vm626, %v622, 0
          %v766 = vsel %vm626, %v623, 0
          %v769 = vsel %vm626, %v624, 0
          %771 = vmatprep.subr.mxu0 0.0
          %772 = vmatpush1.msra.mxu0 %v625
          %773 = vmatprep.subr.mxu0 0.0
          %774 = vmatpush1.msra.mxu0 0.0
          %775 = vmatprep.subr.mxu0 0.0
          %776 = vmatpush1.msra.mxu0 0.0
          %777 = vmatprep.subr.mxu0 0.0
          %778 = vmatpush1.msra.mxu0 0.0
          %779 = vmatprep.subr.mxu0 0.0
          %780 = vmatpush1.msra.mxu0 0.0
          %781 = vmatprep.subr.mxu0 0.0
          %782 = vmatpush1.msra.mxu0 0.0
          %783 = vmatprep.subr.mxu0 0.0
          %784 = vmatpush1.msra.mxu0 0.0
          %785 = vmatprep.subr.mxu0 0.0
          %786 = vmatpush1.msra.mxu0 0.0
          %787 = vmatprep.subr.mxu0 0.0
          %788 = vmatpush1.msra.mxu0 0.0
          %789 = vmatprep.subr.mxu0 0.0
          %790 = vmatpush1.msra.mxu0 0.0
          %791 = vmatprep.subr.mxu0 0.0
          %792 = vmatpush1.msra.mxu0 0.0
          %793 = vmatprep.subr.mxu0 0.0
          %794 = vmatpush1.msra.mxu0 0.0
          %795 = vmatprep.subr.mxu0 0.0
          %796 = vmatpush1.msra.mxu0 0.0
          %797 = vmatprep.subr.mxu0 0.0
          %798 = vmatpush1.msra.mxu0 0.0
          %799 = vmatprep.subr.mxu0 0.0
          %800 = vmatpush1.msra.mxu0 0.0
          %801 = vmatprep.subr.mxu0 0.0
          %802 = vmatpush1.msra.mxu0 0.0
          %803 = vmatprep.subr.mxu0 0.0
          %804 = vmatpush1.msra.mxu0 0.0
          %805 = vmatprep.subr.mxu0 0.0
          %806 = vmatpush1.msra.mxu0 0.0
          %807 = vmatprep.subr.mxu0 0.0
          %808 = vmatpush1.msra.mxu0 0.0
          %809 = vmatprep.subr.mxu0 0.0
          %810 = vmatpush1.msra.mxu0 0.0
          %811 = vmatprep.subr.mxu0 0.0
          %812 = vmatpush1.msra.mxu0 0.0
          %813 = vmatprep.subr.mxu0 0.0
          %814 = vmatpush1.msra.mxu0 0.0
          %815 = vmatprep.subr.mxu0 0.0
          %816 = vmatpush1.msra.mxu0 0.0
          %817 = vmatprep.subr.mxu0 0.0
          %818 = vmatpush1.msra.mxu0 0.0
          %819 = vmatprep.subr.mxu0 0.0
          %820 = vmatpush1.msra.mxu0 0.0
          %821 = vmatprep.subr.mxu0 0.0
          %822 = vmatpush1.msra.mxu0 0.0
          %823 = vmatprep.subr.mxu0 0.0
          %824 = vmatpush1.msra.mxu0 0.0
          %825 = vmatprep.subr.mxu0 0.0
          %826 = vmatpush1.msra.mxu0 0.0
          %827 = vmatprep.subr.mxu0 0.0
          %828 = vmatpush1.msra.mxu0 0.0
          %829 = vmatprep.subr.mxu0 0.0
          %830 = vmatpush1.msra.mxu0 0.0
          %831 = vmatprep.subr.mxu0 0.0
          %832 = vmatpush1.msra.mxu0 0.0
          %833 = vmatprep.subr.mxu0 0.0
          %834 = vmatpush1.msra.mxu0 0.0
          %835 = vmatprep.mubr.f32.mxu0 0.0
          %836 = vmatmul.mubr.f32.gmra.mrb[0].mxu0 %v628
          %v837 = vpop.f32.mrb[0].mxu0
          %v838 = vadd.f32 0.0, %v837
          %v839 = vpop.f32.mrb[0].mxu0
          %840 = vmatprep.mubr.f32.mxu0 0.0
          %841 = vmatmul.mubr.f32.gmra.mrb[0].mxu0 %v631
          %v842 = vpop.f32.mrb[0].mxu0
          %v843 = vadd.f32 0.0, %v842
          %v844 = vpop.f32.mrb[0].mxu0
          %845 = vmatprep.mubr.f32.mxu0 0.0
          %846 = vmatmul.mubr.f32.gmra.mrb[0].mxu0 %v634
          %v847 = vpop.f32.mrb[0].mxu0
          %v848 = vadd.f32 0.0, %v847
          %v849 = vpop.f32.mrb[0].mxu0
          %850 = vmatprep.mubr.f32.mxu0 0.0
          %851 = vmatmul.mubr.f32.gmra.mrb[0].mxu0 %v637
          %v852 = vpop.f32.mrb[0].mxu0
          %v853 = vadd.f32 0.0, %v852
          %v854 = vpop.f32.mrb[0].mxu0
          %855 = vmatprep.mubr.f32.mxu0 0.0
          %856 = vmatmul.mubr.f32.gmra.mrb[0].mxu0 %v640
          %v857 = vpop.f32.mrb[0].mxu0
          %v858 = vadd.f32 0.0, %v857
          %v859 = vpop.f32.mrb[0].mxu0
          %860 = vmatprep.mubr.f32.mxu0 0.0
          %861 = vmatmul.mubr.f32.gmra.mrb[0].mxu0 %v643
          %v862 = vpop.f32.mrb[0].mxu0
          %v863 = vadd.f32 0.0, %v862
          %v864 = vpop.f32.mrb[0].mxu0
          %865 = vmatprep.mubr.f32.mxu0 0.0
          %866 = vmatmul.mubr.f32.gmra.mrb[0].mxu0 %v646
          %v867 = vpop.f32.mrb[0].mxu0
          %v868 = vadd.f32 0.0, %v867
          %v869 = vpop.f32.mrb[0].mxu0
          %870 = vmatprep.mubr.f32.mxu0 0.0
          %871 = vmatmul.mubr.f32.gmra.mrb[0].mxu0 %v649
          %v872 = vpop.f32.mrb[0].mxu0
          %v873 = vadd.f32 0.0, %v872
          %v874 = vpop.f32.mrb[0].mxu0
          %875 = vmatprep.mubr.f32.mxu0 0.0
          %876 = vmatmul.mubr.f32.gmra.mrb[0].mxu0 %v652
          %v877 = vpop.f32.mrb[0].mxu0
          %v878 = vadd.f32 0.0, %v877
          %v879 = vpop.f32.mrb[0].mxu0
          %880 = vmatprep.mubr.f32.mxu0 0.0
          %881 = vmatmul.mubr.f32.gmra.mrb[0].mxu0 %v655
          %v882 = vpop.f32.mrb[0].mxu0
          %v883 = vadd.f32 0.0, %v882
          %v884 = vpop.f32.mrb[0].mxu0
          %885 = vmatprep.mubr.f32.mxu0 0.0
          %886 = vmatmul.mubr.f32.gmra.mrb[0].mxu0 %v658
          %v887 = vpop.f32.mrb[0].mxu0
          %v888 = vadd.f32 0.0, %v887
          %v889 = vpop.f32.mrb[0].mxu0
          %890 = vmatprep.mubr.f32.mxu0 0.0
          %891 = vmatmul.mubr.f32.gmra.mrb[0].mxu0 %v661
          %v892 = vpop.f32.mrb[0].mxu0
          %v893 = vadd.f32 0.0, %v892
          %v894 = vpop.f32.mrb[0].mxu0
          %895 = vmatprep.mubr.f32.mxu0 0.0
          %896 = vmatmul.mubr.f32.gmra.mrb[0].mxu0 %v664
          %v897 = vpop.f32.mrb[0].mxu0
          %v898 = vadd.f32 0.0, %v897
          %v899 = vpop.f32.mrb[0].mxu0
          %900 = vmatprep.mubr.f32.mxu0 0.0
          %901 = vmatmul.mubr.f32.gmra.mrb[0].mxu0 %v667
          %v902 = vpop.f32.mrb[0].mxu0
          %v903 = vadd.f32 0.0, %v902
          %v904 = vpop.f32.mrb[0].mxu0
          %905 = vmatprep.mubr.f32.mxu0 0.0
          %906 = vmatmul.mubr.f32.gmra.mrb[0].mxu0 %v670
          %v907 = vpop.f32.mrb[0].mxu0
          %v908 = vadd.f32 0.0, %v907
          %v909 = vpop.f32.mrb[0].mxu0
          %910 = vmatprep.mubr.f32.mxu0 0.0
          %911 = vmatmul.mubr.f32.gmra.mrb[0].mxu0 %v673
          %v912 = vpop.f32.mrb[0].mxu0
          %v913 = vadd.f32 0.0, %v912
          %v914 = vpop.f32.mrb[0].mxu0
          %915 = vmatprep.mubr.f32.mxu0 0.0
          %916 = vmatmul.mubr.f32.gmra.mrb[0].mxu0 %v676
          %v917 = vpop.f32.mrb[0].mxu0
          %v918 = vadd.f32 0.0, %v917
          %v919 = vpop.f32.mrb[0].mxu0
          %920 = vmatprep.mubr.f32.mxu0 0.0
          %921 = vmatmul.mubr.f32.gmra.mrb[0].mxu0 %v679
          %v922 = vpop.f32.mrb[0].mxu0
          %v923 = vadd.f32 0.0, %v922
          %v924 = vpop.f32.mrb[0].mxu0
          %925 = vmatprep.mubr.f32.mxu0 0.0
          %926 = vmatmul.mubr.f32.gmra.mrb[0].mxu0 %v682
          %v927 = vpop.f32.mrb[0].mxu0
          %v928 = vadd.f32 0.0, %v927
          %v929 = vpop.f32.mrb[0].mxu0
          %930 = vmatprep.mubr.f32.mxu0 0.0
          %931 = vmatmul.mubr.f32.gmra.mrb[0].mxu0 %v685
          %v932 = vpop.f32.mrb[0].mxu0
          %v933 = vadd.f32 0.0, %v932
          %v934 = vpop.f32.mrb[0].mxu0
          %935 = vmatprep.mubr.f32.mxu0 0.0
          %936 = vmatmul.mubr.f32.gmra.mrb[0].mxu0 %v688
          %v937 = vpop.f32.mrb[0].mxu0
          %v938 = vadd.f32 0.0, %v937
          %v939 = vpop.f32.mrb[0].mxu0
          %940 = vmatprep.mubr.f32.mxu0 0.0
          %941 = vmatmul.mubr.f32.gmra.mrb[0].mxu0 %v691
          %v942 = vpop.f32.mrb[0].mxu0
          %v943 = vadd.f32 0.0, %v942
          %v944 = vpop.f32.mrb[0].mxu0
          %945 = vmatprep.mubr.f32.mxu0 0.0
          %946 = vmatmul.mubr.f32.gmra.mrb[0].mxu0 %v694
          %v947 = vpop.f32.mrb[0].mxu0
          %v948 = vadd.f32 0.0, %v947
          %v949 = vpop.f32.mrb[0].mxu0
          %950 = vmatprep.mubr.f32.mxu0 0.0
          %951 = vmatmul.mubr.f32.gmra.mrb[0].mxu0 %v697
          %v952 = vpop.f32.mrb[0].mxu0
          %v953 = vadd.f32 0.0, %v952
          %v954 = vpop.f32.mrb[0].mxu0
          %955 = vmatprep.mubr.f32.mxu0 0.0
          %956 = vmatmul.mubr.f32.gmra.mrb[0].mxu0 %v700
          %v957 = vpop.f32.mrb[0].mxu0
          %v958 = vadd.f32 0.0, %v957
          %v959 = vpop.f32.mrb[0].mxu0
          %960 = vmatprep.mubr.f32.mxu0 0.0
          %961 = vmatmul.mubr.f32.gmra.mrb[0].mxu0 %v703
          %v962 = vpop.f32.mrb[0].mxu0
          %v963 = vadd.f32 0.0, %v962
          %v964 = vpop.f32.mrb[0].mxu0
          %965 = vmatprep.mubr.f32.mxu0 0.0
          %966 = vmatmul.mubr.f32.gmra.mrb[0].mxu0 %v706
          %v967 = vpop.f32.mrb[0].mxu0
          %v968 = vadd.f32 0.0, %v967
          %v969 = vpop.f32.mrb[0].mxu0
          %970 = vmatprep.mubr.f32.mxu0 0.0
          %971 = vmatmul.mubr.f32.gmra.mrb[0].mxu0 %v709
          %v972 = vpop.f32.mrb[0].mxu0
          %v973 = vadd.f32 0.0, %v972
          %v974 = vpop.f32.mrb[0].mxu0
          %975 = vmatprep.mubr.f32.mxu0 0.0
          %976 = vmatmul.mubr.f32.gmra.mrb[0].mxu0 %v712
          %v977 = vpop.f32.mrb[0].mxu0
          %v978 = vadd.f32 0.0, %v977
          %v979 = vpop.f32.mrb[0].mxu0
          %980 = vmatprep.mubr.f32.mxu0 0.0
          %981 = vmatmul.mubr.f32.gmra.mrb[0].mxu0 %v715
          %v982 = vpop.f32.mrb[0].mxu0
          %v983 = vadd.f32 0.0, %v982
          %v984 = vpop.f32.mrb[0].mxu0
          %985 = vmatprep.mubr.f32.mxu0 0.0
          %986 = vmatmul.mubr.f32.gmra.mrb[0].mxu0 %v718
          %v987 = vpop.f32.mrb[0].mxu0
          %v988 = vadd.f32 0.0, %v987
          %v989 = vpop.f32.mrb[0].mxu0
          %990 = vmatprep.mubr.f32.mxu0 0.0
          %991 = vmatmul.mubr.f32.gmra.mrb[0].mxu0 %v721
          %v992 = vpop.f32.mrb[0].mxu0
          %v993 = vadd.f32 0.0, %v992
          %v994 = vpop.f32.mrb[0].mxu0
          %995 = vmatprep.mubr.f32.mxu0 0.0
          %996 = vmatmul.mubr.f32.gmra.mrb[0].mxu0 %v724
          %v997 = vpop.f32.mrb[0].mxu0
          %v998 = vadd.f32 0.0, %v997
          %v999 = vpop.f32.mrb[0].mxu0
          %1000 = vmatprep.mubr.f32.mxu0 0.0
          %1001 = vmatmul.mubr.f32.gmra.mrb[0].mxu0 %v727
          %v1002 = vpop.f32.mrb[0].mxu0
          %v1003 = vadd.f32 0.0, %v1002
          %v1004 = vpop.f32.mrb[0].mxu0
          %1005 = vmatprep.mubr.f32.mxu0 0.0
          %1006 = vmatmul.mubr.f32.gmra.mrb[0].mxu0 %v730
          %v1007 = vpop.f32.mrb[0].mxu0
          %v1008 = vadd.f32 0.0, %v1007
          %v1009 = vpop.f32.mrb[0].mxu0
          %1010 = vmatprep.mubr.f32.mxu0 0.0
          %1011 = vmatmul.mubr.f32.gmra.mrb[0].mxu0 %v733
          %v1012 = vpop.f32.mrb[0].mxu0
          %v1013 = vadd.f32 0.0, %v1012
          %v1014 = vpop.f32.mrb[0].mxu0
          %1015 = vmatprep.mubr.f32.mxu0 0.0
          %1016 = vmatmul.mubr.f32.gmra.mrb[0].mxu0 %v736
          %v1017 = vpop.f32.mrb[0].mxu0
          %v1018 = vadd.f32 0.0, %v1017
          %v1019 = vpop.f32.mrb[0].mxu0
          %1020 = vmatprep.mubr.f32.mxu0 0.0
          %1021 = vmatmul.mubr.f32.gmra.mrb[0].mxu0 %v739
          %v1022 = vpop.f32.mrb[0].mxu0
          %v1023 = vadd.f32 0.0, %v1022
          %v1024 = vpop.f32.mrb[0].mxu0
          %1025 = vmatprep.mubr.f32.mxu0 0.0
          %1026 = vmatmul.mubr.f32.gmra.mrb[0].mxu0 %v742
          %v1027 = vpop.f32.mrb[0].mxu0
          %v1028 = vadd.f32 0.0, %v1027
          %v1029 = vpop.f32.mrb[0].mxu0
          %1030 = vmatprep.mubr.f32.mxu0 0.0
          %1031 = vmatmul.mubr.f32.gmra.mrb[0].mxu0 %v745
          %v1032 = vpop.f32.mrb[0].mxu0
          %v1033 = vadd.f32 0.0, %v1032
          %v1034 = vpop.f32.mrb[0].mxu0
          %1035 = vmatprep.mubr.f32.mxu0 0.0
          %1036 = vmatmul.mubr.f32.gmra.mrb[0].mxu0 %v748
          %v1037 = vpop.f32.mrb[0].mxu0
          %v1038 = vadd.f32 0.0, %v1037
          %v1039 = vpop.f32.mrb[0].mxu0
          %1040 = vmatprep.mubr.f32.mxu0 0.0
          %1041 = vmatmul.mubr.f32.gmra.mrb[0].mxu0 %v751
          %v1042 = vpop.f32.mrb[0].mxu0
          %v1043 = vadd.f32 0.0, %v1042
          %v1044 = vpop.f32.mrb[0].mxu0
          %1045 = vmatprep.mubr.f32.mxu0 0.0
          %1046 = vmatmul.mubr.f32.gmra.mrb[0].mxu0 %v754
          %v1047 = vpop.f32.mrb[0].mxu0
          %v1048 = vadd.f32 0.0, %v1047
          %v1049 = vpop.f32.mrb[0].mxu0
          %1050 = vmatprep.mubr.f32.mxu0 0.0
          %1051 = vmatmul.mubr.f32.gmra.mrb[0].mxu0 %v757
          %v1052 = vpop.f32.mrb[0].mxu0
          %v1053 = vadd.f32 0.0, %v1052
          %v1054 = vpop.f32.mrb[0].mxu0
          %1055 = vmatprep.mubr.f32.mxu0 0.0
          %1056 = vmatmul.mubr.f32.gmra.mrb[0].mxu0 %v760
          %v1057 = vpop.f32.mrb[0].mxu0
          %v1058 = vadd.f32 0.0, %v1057
          %v1059 = vpop.f32.mrb[0].mxu0
          %1060 = vmatprep.mubr.f32.mxu0 0.0
          %1061 = vmatmul.mubr.f32.gmra.mrb[0].mxu0 %v763
          %v1062 = vpop.f32.mrb[0].mxu0
          %v1063 = vadd.f32 0.0, %v1062
          %v1064 = vpop.f32.mrb[0].mxu0
          %1065 = vmatprep.mubr.f32.mxu0 0.0
          %1066 = vmatmul.mubr.f32.gmra.mrb[0].mxu0 %v766
          %v1067 = vpop.f32.mrb[0].mxu0
          %v1068 = vadd.f32 0.0, %v1067
          %v1069 = vpop.f32.mrb[0].mxu0
          %1070 = vmatprep.mubr.f32.mxu0 0.0
          %1071 = vmatmul.mubr.f32.gmra.mrb[0].mxu0 %v769
          %v1072 = vpop.f32.mrb[0].mxu0
          %v1073 = vadd.f32 0.0, %v1072
          %v1074 = vpop.f32.mrb[0].mxu0
          %1075 = vdwg.mxu0
          %v1076 = vld [vmem:[#allocation2] sm:$0xff]
          %v1077 = vld [vmem:[#allocation2 + $0x8] sm:$0xff]
          %v1078 = vld [vmem:[#allocation2 + $0x10] sm:$0xff]
          %v1079 = vld [vmem:[#allocation2 + $0x18] sm:$0xff]
          %v1080 = vld [vmem:[#allocation2 + $0x20] sm:$0xff]
          %v1081 = vld [vmem:[#allocation2 + $0x28] sm:$0xff]
          %v1082 = vld [vmem:[#allocation2 + $0x30] sm:$0xff]
          %v1083 = vld [vmem:[#allocation2 + $0x38] sm:$0xff]
          %v1084 = vld [vmem:[#allocation2 + $0x40] sm:$0xff]
          %v1085 = vld [vmem:[#allocation2 + $0x48] sm:$0xff]
          %v1086 = vld [vmem:[#allocation2 + $0x50] sm:$0xff]
          %v1087 = vld [vmem:[#allocation2 + $0x58] sm:$0xff]
          %v1088 = vld [vmem:[#allocation2 + $0x60] sm:$0xff]
          %v1089 = vld [vmem:[#allocation2 + $0x68] sm:$0xff]
          %v1090 = vld [vmem:[#allocation2 + $0x70] sm:$0xff]
          %v1091 = vld [vmem:[#allocation2 + $0x78] sm:$0xff]
          %v1092 = vld [vmem:[#allocation2 + $0x80] sm:$0xff]
          %v1093 = vld [vmem:[#allocation2 + $0x88] sm:$0xff]
          %v1094 = vld [vmem:[#allocation2 + $0x90] sm:$0xff]
          %v1095 = vld [vmem:[#allocation2 + $0x98] sm:$0xff]
          %v1096 = vld [vmem:[#allocation2 + $0xa0] sm:$0xff]
          %v1097 = vld [vmem:[#allocation2 + $0xa8] sm:$0xff]
          %v1098 = vld [vmem:[#allocation2 + $0xb0] sm:$0xff]
          %v1099 = vld [vmem:[#allocation2 + $0xb8] sm:$0xff]
          %v1100 = vld [vmem:[#allocation2 + $0xc0] sm:$0xff]
          %v1101 = vld [vmem:[#allocation2 + $0xc8] sm:$0xff]
          %v1102 = vld [vmem:[#allocation2 + $0xd0] sm:$0xff]
          %v1103 = vld [vmem:[#allocation2 + $0xd8] sm:$0xff]
          %v1104 = vld [vmem:[#allocation2 + $0xe0] sm:$0xff]
          %v1105 = vld [vmem:[#allocation2 + $0xe8] sm:$0xff]
          %v1106 = vld [vmem:[#allocation2 + $0xf0] sm:$0xff]
          %v1107 = vld [vmem:[#allocation2 + $0xf8] sm:$0xff]
          %v1108 = vld [vmem:[#allocation2 + $0x100] sm:$0xff]
          %v1109 = vld [vmem:[#allocation2 + $0x108] sm:$0xff]
          %v1110 = vld [vmem:[#allocation2 + $0x110] sm:$0xff]
          %v1111 = vld [vmem:[#allocation2 + $0x118] sm:$0xff]
          %v1112 = vld [vmem:[#allocation2 + $0x120] sm:$0xff]
          %v1113 = vld [vmem:[#allocation2 + $0x128] sm:$0xff]
          %v1114 = vld [vmem:[#allocation2 + $0x130] sm:$0xff]
          %v1115 = vld [vmem:[#allocation2 + $0x138] sm:$0xff]
          %v1116 = vld [vmem:[#allocation2 + $0x140] sm:$0xff]
          %v1117 = vld [vmem:[#allocation2 + $0x148] sm:$0xff]
          %v1118 = vld [vmem:[#allocation2 + $0x150] sm:$0xff]
          %v1119 = vld [vmem:[#allocation2 + $0x158] sm:$0xff]
          %v1120 = vld [vmem:[#allocation2 + $0x160] sm:$0xff]
          %v1121 = vld [vmem:[#allocation2 + $0x168] sm:$0xff]
          %v1122 = vld [vmem:[#allocation2 + $0x170] sm:$0xff]
          %v1123 = vld [vmem:[#allocation2 + $0x178] sm:$0xff]
          %v1124 = vld [vmem:[%s402] sm:$0xff]
          %v1125 = vld [vmem:[%s402 + $0x8] sm:$0xf]
          %v1126 = vld [vmem:[%s402 + $0xc] sm:$0xff]
          %v1127 = vld [vmem:[%s402 + $0x14] sm:$0xf]
          %v1128 = vld [vmem:[%s402 + $0x18] sm:$0xff]
          %v1129 = vld [vmem:[%s402 + $0x20] sm:$0xf]
          %v1130 = vld [vmem:[%s402 + $0x24] sm:$0xff]
          %v1131 = vld [vmem:[%s402 + $0x2c] sm:$0xf]
          %v1132 = vld [vmem:[%s402 + $0x30] sm:$0xff]
          %v1133 = vld [vmem:[%s402 + $0x38] sm:$0xf]
          %v1134 = vld [vmem:[%s402 + $0x3c] sm:$0xff]
          %v1135 = vld [vmem:[%s402 + $0x44] sm:$0xf]
          %v1136 = vld [vmem:[%s402 + $0x48] sm:$0xff]
          %v1137 = vld [vmem:[%s402 + $0x50] sm:$0xf]
          %v1138 = vld [vmem:[%s402 + $0x54] sm:$0xff]
          %v1139 = vld [vmem:[%s402 + $0x5c] sm:$0xf]
          %v1140 = vld [vmem:[%s402 + $0x60] sm:$0xff]
          %v1141 = vld [vmem:[%s402 + $0x68] sm:$0xf]
          %v1142 = vld [vmem:[%s402 + $0x6c] sm:$0xff]
          %v1143 = vld [vmem:[%s402 + $0x74] sm:$0xf]
          %v1144 = vld [vmem:[%s402 + $0x78] sm:$0xff]
          %v1145 = vld [vmem:[%s402 + $0x80] sm:$0xf]
          %v1146 = vld [vmem:[%s402 + $0x84] sm:$0xff]
          %v1147 = vld [vmem:[%s402 + $0x8c] sm:$0xf]
          %v1148 = vld [vmem:[%s402 + $0x90] sm:$0xff]
          %v1149 = vld [vmem:[%s402 + $0x98] sm:$0xf]
          %v1150 = vld [vmem:[%s402 + $0x9c] sm:$0xff]
          %v1151 = vld [vmem:[%s402 + $0xa4] sm:$0xf]
          %v1152 = vld [vmem:[%s402 + $0xa8] sm:$0xff]
          %v1153 = vld [vmem:[%s402 + $0xb0] sm:$0xf]
          %v1154 = vld [vmem:[%s402 + $0xb4] sm:$0xff]
          %v1155 = vld [vmem:[%s402 + $0xbc] sm:$0xf]
          %v1156 = vld [vmem:[%s402 + $0xc0] sm:$0xff]
          %v1157 = vld [vmem:[%s402 + $0xc8] sm:$0xf]
          %v1158 = vld [vmem:[%s402 + $0xcc] sm:$0xff]
          %v1159 = vld [vmem:[%s402 + $0xd4] sm:$0xf]
          %v1160 = vld [vmem:[%s402 + $0xd8] sm:$0xff]
          %v1161 = vld [vmem:[%s402 + $0xe0] sm:$0xf]
          %v1162 = vld [vmem:[%s402 + $0xe4] sm:$0xff]
          %v1163 = vld [vmem:[%s402 + $0xec] sm:$0xf]
          %v1164 = vld [vmem:[%s402 + $0xf0] sm:$0xff]
          %v1165 = vld [vmem:[%s402 + $0xf8] sm:$0xf]
          %v1166 = vld [vmem:[%s402 + $0xfc] sm:$0xff]
          %v1167 = vld [vmem:[%s402 + $0x104] sm:$0xf]
          %v1168 = vld [vmem:[%s402 + $0x108] sm:$0xff]
          %v1169 = vld [vmem:[%s402 + $0x110] sm:$0xf]
          %v1170 = vld [vmem:[%s402 + $0x114] sm:$0xff]
          %v1171 = vld [vmem:[%s402 + $0x11c] sm:$0xf]
          %v1172 = vld [vmem:[%s402 + $0x120] sm:$0xff]
          %v1173 = vld [vmem:[%s402 + $0x128] sm:$0xf]
          %v1174 = vld [vmem:[%s402 + $0x12c] sm:$0xff]
          %v1175 = vld [vmem:[%s402 + $0x134] sm:$0xf]
          %v1176 = vld [vmem:[%s402 + $0x138] sm:$0xff]
          %v1177 = vld [vmem:[%s402 + $0x140] sm:$0xf]
          %v1178 = vld [vmem:[%s402 + $0x144] sm:$0xff]
          %v1179 = vld [vmem:[%s402 + $0x14c] sm:$0xf]
          %v1180 = vld [vmem:[%s402 + $0x150] sm:$0xff]
          %v1181 = vld [vmem:[%s402 + $0x158] sm:$0xf]
          %v1182 = vld [vmem:[%s402 + $0x15c] sm:$0xff]
          %v1183 = vld [vmem:[%s402 + $0x164] sm:$0xf]
          %v1184 = vld [vmem:[%s402 + $0x168] sm:$0xff]
          %v1185 = vld [vmem:[%s402 + $0x170] sm:$0xf]
          %v1186 = vld [vmem:[%s402 + $0x174] sm:$0xff]
          %v1187 = vld [vmem:[%s402 + $0x17c] sm:$0xf]
          %v1188 = vld [vmem:[%s402 + $0x180] sm:$0xff]
          %v1189 = vld [vmem:[%s402 + $0x188] sm:$0xf]
          %v1190 = vld [vmem:[%s402 + $0x18c] sm:$0xff]
          %v1191 = vld [vmem:[%s402 + $0x194] sm:$0xf]
          %v1192 = vld [vmem:[%s402 + $0x198] sm:$0xff]
          %v1193 = vld [vmem:[%s402 + $0x1a0] sm:$0xf]
          %v1194 = vld [vmem:[%s402 + $0x1a4] sm:$0xff]
          %v1195 = vld [vmem:[%s402 + $0x1ac] sm:$0xf]
          %v1196 = vld [vmem:[%s402 + $0x1b0] sm:$0xff]
          %v1197 = vld [vmem:[%s402 + $0x1b8] sm:$0xf]
          %v1198 = vld [vmem:[%s402 + $0x1bc] sm:$0xff]
          %v1199 = vld [vmem:[%s402 + $0x1c4] sm:$0xf]
          %v1200 = vld [vmem:[%s402 + $0x1c8] sm:$0xff]
          %v1201 = vld [vmem:[%s402 + $0x1d0] sm:$0xf]
          %v1202 = vld [vmem:[%s402 + $0x1d4] sm:$0xff]
          %v1203 = vld [vmem:[%s402 + $0x1dc] sm:$0xf]
          %v1204 = vld [vmem:[%s402 + $0x1e0] sm:$0xff]
          %v1205 = vld [vmem:[%s402 + $0x1e8] sm:$0xf]
          %v1206 = vld [vmem:[%s402 + $0x1ec] sm:$0xff]
          %v1207 = vld [vmem:[%s402 + $0x1f4] sm:$0xf]
          %v1208 = vld [vmem:[%s402 + $0x1f8] sm:$0xff]
          %v1209 = vld [vmem:[%s402 + $0x200] sm:$0xf]
          %v1210 = vld [vmem:[%s402 + $0x204] sm:$0xff]
          %v1211 = vld [vmem:[%s402 + $0x20c] sm:$0xf]
          %v1212 = vld [vmem:[%s402 + $0x210] sm:$0xff]
          %v1213 = vld [vmem:[%s402 + $0x218] sm:$0xf]
          %v1214 = vld [vmem:[%s402 + $0x21c] sm:$0xff]
          %v1215 = vld [vmem:[%s402 + $0x224] sm:$0xf]
          %v1216 = vld [vmem:[%s402 + $0x228] sm:$0xff]
          %v1217 = vld [vmem:[%s402 + $0x230] sm:$0xf]
          %v1218 = vld [vmem:[%s402 + $0x234] sm:$0xff]
          %v1219 = vld [vmem:[%s402 + $0x23c] sm:$0xf]
          %v1220 = vpack.c.bf16 %v843, %v838
          %v1221 = vpack.c.bf16 %v853, %v848
          %v1222 = vpack.c.bf16 %v863, %v858
          %v1223 = vpack.c.bf16 %v873, %v868
          %v1224 = vpack.c.bf16 %v883, %v878
          %v1225 = vpack.c.bf16 %v893, %v888
          %v1226 = vpack.c.bf16 %v903, %v898
          %v1227 = vpack.c.bf16 %v913, %v908
          %v1228 = vpack.c.bf16 %v923, %v918
          %v1229 = vpack.c.bf16 %v933, %v928
          %v1230 = vpack.c.bf16 %v943, %v938
          %v1231 = vpack.c.bf16 %v953, %v948
          %v1232 = vpack.c.bf16 %v963, %v958
          %v1233 = vpack.c.bf16 %v973, %v968
          %v1234 = vpack.c.bf16 %v983, %v978
          %v1235 = vpack.c.bf16 %v993, %v988
          %v1236 = vpack.c.bf16 %v1003, %v998
          %v1237 = vpack.c.bf16 %v1013, %v1008
          %v1238 = vpack.c.bf16 %v1023, %v1018
          %v1239 = vpack.c.bf16 %v1033, %v1028
          %v1240 = vpack.c.bf16 %v1043, %v1038
          %v1241 = vpack.c.bf16 %v1053, %v1048
          %v1242 = vpack.c.bf16 %v1063, %v1058
          %v1243 = vpack.c.bf16 %v1073, %v1068
          %v1340 = vunpack.c.l.b16 %v1124
          %v1341 = vunpack.c.h.b16 %v1124
          %v1342 = vunpack.c.l.b16 %v1125
          %v1343 = vunpack.c.l.b16 %v1126
          %v1344 = vunpack.c.h.b16 %v1126
          %v1345 = vunpack.c.l.b16 %v1127
          %v1346 = vunpack.c.l.b16 %v1128
          %v1347 = vunpack.c.h.b16 %v1128
          %v1348 = vunpack.c.l.b16 %v1129
          %v1349 = vunpack.c.l.b16 %v1130
          %v1350 = vunpack.c.h.b16 %v1130
          %v1351 = vunpack.c.l.b16 %v1131
          %v1352 = vunpack.c.l.b16 %v1132
          %v1353 = vunpack.c.h.b16 %v1132
          %v1354 = vunpack.c.l.b16 %v1133
          %v1355 = vunpack.c.l.b16 %v1134
          %v1356 = vunpack.c.h.b16 %v1134
          %v1357 = vunpack.c.l.b16 %v1135
          %v1358 = vunpack.c.l.b16 %v1136
          %v1359 = vunpack.c.h.b16 %v1136
          %v1360 = vunpack.c.l.b16 %v1137
          %v1361 = vunpack.c.l.b16 %v1138
          %v1362 = vunpack.c.h.b16 %v1138
          %v1363 = vunpack.c.l.b16 %v1139
          %v1364 = vunpack.c.l.b16 %v1140
          %v1365 = vunpack.c.h.b16 %v1140
          %v1366 = vunpack.c.l.b16 %v1141
          %v1367 = vunpack.c.l.b16 %v1142
          %v1368 = vunpack.c.h.b16 %v1142
          %v1369 = vunpack.c.l.b16 %v1143
          %v1370 = vunpack.c.l.b16 %v1144
          %v1371 = vunpack.c.h.b16 %v1144
          %v1372 = vunpack.c.l.b16 %v1145
          %v1373 = vunpack.c.l.b16 %v1146
          %v1374 = vunpack.c.h.b16 %v1146
          %v1375 = vunpack.c.l.b16 %v1147
          %v1376 = vunpack.c.l.b16 %v1148
          %v1377 = vunpack.c.h.b16 %v1148
          %v1378 = vunpack.c.l.b16 %v1149
          %v1379 = vunpack.c.l.b16 %v1150
          %v1380 = vunpack.c.h.b16 %v1150
          %v1381 = vunpack.c.l.b16 %v1151
          %v1382 = vunpack.c.l.b16 %v1152
          %v1383 = vunpack.c.h.b16 %v1152
          %v1384 = vunpack.c.l.b16 %v1153
          %v1385 = vunpack.c.l.b16 %v1154
          %v1386 = vunpack.c.h.b16 %v1154
          %v1387 = vunpack.c.l.b16 %v1155
          %v1388 = vunpack.c.l.b16 %v1156
          %v1389 = vunpack.c.h.b16 %v1156
          %v1390 = vunpack.c.l.b16 %v1157
          %v1391 = vunpack.c.l.b16 %v1158
          %v1392 = vunpack.c.h.b16 %v1158
          %v1393 = vunpack.c.l.b16 %v1159
          %v1394 = vunpack.c.l.b16 %v1160
          %v1395 = vunpack.c.h.b16 %v1160
          %v1396 = vunpack.c.l.b16 %v1161
          %v1397 = vunpack.c.l.b16 %v1162
          %v1398 = vunpack.c.h.b16 %v1162
          %v1399 = vunpack.c.l.b16 %v1163
          %v1400 = vunpack.c.l.b16 %v1164
          %v1401 = vunpack.c.h.b16 %v1164
          %v1402 = vunpack.c.l.b16 %v1165
          %v1403 = vunpack.c.l.b16 %v1166
          %v1404 = vunpack.c.h.b16 %v1166
          %v1405 = vunpack.c.l.b16 %v1167
          %v1406 = vunpack.c.l.b16 %v1168
          %v1407 = vunpack.c.h.b16 %v1168
          %v1408 = vunpack.c.l.b16 %v1169
          %v1409 = vunpack.c.l.b16 %v1170
          %v1410 = vunpack.c.h.b16 %v1170
          %v1411 = vunpack.c.l.b16 %v1171
          %v1412 = vunpack.c.l.b16 %v1172
          %v1413 = vunpack.c.h.b16 %v1172
          %v1414 = vunpack.c.l.b16 %v1173
          %v1415 = vunpack.c.l.b16 %v1174
          %v1416 = vunpack.c.h.b16 %v1174
          %v1417 = vunpack.c.l.b16 %v1175
          %v1418 = vunpack.c.l.b16 %v1176
          %v1419 = vunpack.c.h.b16 %v1176
          %v1420 = vunpack.c.l.b16 %v1177
          %v1421 = vunpack.c.l.b16 %v1178
          %v1422 = vunpack.c.h.b16 %v1178
          %v1423 = vunpack.c.l.b16 %v1179
          %v1424 = vunpack.c.l.b16 %v1180
          %v1425 = vunpack.c.h.b16 %v1180
          %v1426 = vunpack.c.l.b16 %v1181
          %v1427 = vunpack.c.l.b16 %v1182
          %v1428 = vunpack.c.h.b16 %v1182
          %v1429 = vunpack.c.l.b16 %v1183
          %v1430 = vunpack.c.l.b16 %v1184
          %v1431 = vunpack.c.h.b16 %v1184
          %v1432 = vunpack.c.l.b16 %v1185
          %v1433 = vunpack.c.l.b16 %v1186
          %v1434 = vunpack.c.h.b16 %v1186
          %v1435 = vunpack.c.l.b16 %v1187
          %v1436 = vunpack.c.l.b16 %v1188
          %v1437 = vunpack.c.h.b16 %v1188
          %v1438 = vunpack.c.l.b16 %v1189
          %v1439 = vunpack.c.l.b16 %v1190
          %v1440 = vunpack.c.h.b16 %v1190
          %v1441 = vunpack.c.l.b16 %v1191
          %v1442 = vunpack.c.l.b16 %v1192
          %v1443 = vunpack.c.h.b16 %v1192
          %v1444 = vunpack.c.l.b16 %v1193
          %v1445 = vunpack.c.l.b16 %v1194
          %v1446 = vunpack.c.h.b16 %v1194
          %v1447 = vunpack.c.l.b16 %v1195
          %v1448 = vunpack.c.l.b16 %v1196
          %v1449 = vunpack.c.h.b16 %v1196
          %v1450 = vunpack.c.l.b16 %v1197
          %v1451 = vunpack.c.l.b16 %v1198
          %v1452 = vunpack.c.h.b16 %v1198
          %v1453 = vunpack.c.l.b16 %v1199
          %v1454 = vunpack.c.l.b16 %v1200
          %v1455 = vunpack.c.h.b16 %v1200
          %v1456 = vunpack.c.l.b16 %v1201
          %v1457 = vunpack.c.l.b16 %v1202
          %v1458 = vunpack.c.h.b16 %v1202
          %v1459 = vunpack.c.l.b16 %v1203
          %v1460 = vunpack.c.l.b16 %v1204
          %v1461 = vunpack.c.h.b16 %v1204
          %v1462 = vunpack.c.l.b16 %v1205
          %v1463 = vunpack.c.l.b16 %v1206
          %v1464 = vunpack.c.h.b16 %v1206
          %v1465 = vunpack.c.l.b16 %v1207
          %v1466 = vunpack.c.l.b16 %v1208
          %v1467 = vunpack.c.h.b16 %v1208
          %v1468 = vunpack.c.l.b16 %v1209
          %v1469 = vunpack.c.l.b16 %v1210
          %v1470 = vunpack.c.h.b16 %v1210
          %v1471 = vunpack.c.l.b16 %v1211
          %v1472 = vunpack.c.l.b16 %v1212
          %v1473 = vunpack.c.h.b16 %v1212
          %v1474 = vunpack.c.l.b16 %v1213
          %v1475 = vunpack.c.l.b16 %v1214
          %v1476 = vunpack.c.h.b16 %v1214
          %v1477 = vunpack.c.l.b16 %v1215
          %v1478 = vunpack.c.l.b16 %v1216
          %v1479 = vunpack.c.h.b16 %v1216
          %v1480 = vunpack.c.l.b16 %v1217
          %v1481 = vunpack.c.l.b16 %v1218
          %v1482 = vunpack.c.h.b16 %v1218
          %v1483 = vunpack.c.l.b16 %v1219
          %v1484 = vpack.c.b16 %v1343, %v1340
          %v1485 = vpack.c.b16 %v1344, %v1341
          %v1486 = vpack.c.b16 %v1345, %v1342
          %v1487 = vpack.c.b16 %v1349, %v1346
          %v1488 = vpack.c.b16 %v1350, %v1347
          %v1489 = vpack.c.b16 %v1351, %v1348
          %v1490 = vpack.c.b16 %v1355, %v1352
          %v1491 = vpack.c.b16 %v1356, %v1353
          %v1492 = vpack.c.b16 %v1357, %v1354
          %v1493 = vpack.c.b16 %v1361, %v1358
          %v1494 = vpack.c.b16 %v1362, %v1359
          %v1495 = vpack.c.b16 %v1363, %v1360
          %v1496 = vpack.c.b16 %v1367, %v1364
          %v1497 = vpack.c.b16 %v1368, %v1365
          %v1498 = vpack.c.b16 %v1369, %v1366
          %v1499 = vpack.c.b16 %v1373, %v1370
          %v1500 = vpack.c.b16 %v1374, %v1371
          %v1501 = vpack.c.b16 %v1375, %v1372
          %v1502 = vpack.c.b16 %v1379, %v1376
          %v1503 = vpack.c.b16 %v1380, %v1377
          %v1504 = vpack.c.b16 %v1381, %v1378
          %v1505 = vpack.c.b16 %v1385, %v1382
          %v1506 = vpack.c.b16 %v1386, %v1383
          %v1507 = vpack.c.b16 %v1387, %v1384
          %v1508 = vpack.c.b16 %v1391, %v1388
          %v1509 = vpack.c.b16 %v1392, %v1389
          %v1510 = vpack.c.b16 %v1393, %v1390
          %v1511 = vpack.c.b16 %v1397, %v1394
          %v1512 = vpack.c.b16 %v1398, %v1395
          %v1513 = vpack.c.b16 %v1399, %v1396
          %v1514 = vpack.c.b16 %v1403, %v1400
          %v1515 = vpack.c.b16 %v1404, %v1401
          %v1516 = vpack.c.b16 %v1405, %v1402
          %v1517 = vpack.c.b16 %v1409, %v1406
          %v1518 = vpack.c.b16 %v1410, %v1407
          %v1519 = vpack.c.b16 %v1411, %v1408
          %v1520 = vpack.c.b16 %v1415, %v1412
          %v1521 = vpack.c.b16 %v1416, %v1413
          %v1522 = vpack.c.b16 %v1417, %v1414
          %v1523 = vpack.c.b16 %v1421, %v1418
          %v1524 = vpack.c.b16 %v1422, %v1419
          %v1525 = vpack.c.b16 %v1423, %v1420
          %v1526 = vpack.c.b16 %v1427, %v1424
          %v1527 = vpack.c.b16 %v1428, %v1425
          %v1528 = vpack.c.b16 %v1429, %v1426
          %v1529 = vpack.c.b16 %v1433, %v1430
          %v1530 = vpack.c.b16 %v1434, %v1431
          %v1531 = vpack.c.b16 %v1435, %v1432
          %v1532 = vpack.c.b16 %v1439, %v1436
          %v1533 = vpack.c.b16 %v1440, %v1437
          %v1534 = vpack.c.b16 %v1441, %v1438
          %v1535 = vpack.c.b16 %v1445, %v1442
          %v1536 = vpack.c.b16 %v1446, %v1443
          %v1537 = vpack.c.b16 %v1447, %v1444
          %v1538 = vpack.c.b16 %v1451, %v1448
          %v1539 = vpack.c.b16 %v1452, %v1449
          %v1540 = vpack.c.b16 %v1453, %v1450
          %v1541 = vpack.c.b16 %v1457, %v1454
          %v1542 = vpack.c.b16 %v1458, %v1455
          %v1543 = vpack.c.b16 %v1459, %v1456
          %v1544 = vpack.c.b16 %v1463, %v1460
          %v1545 = vpack.c.b16 %v1464, %v1461
          %v1546 = vpack.c.b16 %v1465, %v1462
          %v1547 = vpack.c.b16 %v1469, %v1466
          %v1548 = vpack.c.b16 %v1470, %v1467
          %v1549 = vpack.c.b16 %v1471, %v1468
          %v1550 = vpack.c.b16 %v1475, %v1472
          %v1551 = vpack.c.b16 %v1476, %v1473
          %v1552 = vpack.c.b16 %v1477, %v1474
          %v1553 = vpack.c.b16 %v1481, %v1478
          %v1554 = vpack.c.b16 %v1482, %v1479
          %v1555 = vpack.c.b16 %v1483, %v1480
          %1628 = vmatprep.subr.bf16.mxu0 0
          %1629 = vmatpush1.bf16.msra.mxu0 %v1220
          %1630 = vmatprep.subr.bf16.mxu0 0
          %1631 = vmatpush1.bf16.msra.mxu0 %v1221
          %1632 = vmatprep.subr.bf16.mxu0 0
          %1633 = vmatpush1.bf16.msra.mxu0 %v1222
          %1634 = vmatprep.subr.bf16.mxu0 0
          %1635 = vmatpush1.bf16.msra.mxu0 %v1223
          %1636 = vmatprep.subr.bf16.mxu0 0
          %1637 = vmatpush1.bf16.msra.mxu0 %v1224
          %1638 = vmatprep.subr.bf16.mxu0 0
          %1639 = vmatpush1.bf16.msra.mxu0 %v1225
          %1640 = vmatprep.subr.bf16.mxu0 0
          %1641 = vmatpush1.bf16.msra.mxu0 %v1226
          %1642 = vmatprep.subr.bf16.mxu0 0
          %1643 = vmatpush1.bf16.msra.mxu0 %v1227
          %1644 = vmatprep.subr.bf16.mxu0 0
          %1645 = vmatpush1.bf16.msra.mxu0 %v1228
          %1646 = vmatprep.subr.bf16.mxu0 0
          %1647 = vmatpush1.bf16.msra.mxu0 %v1229
          %1648 = vmatprep.subr.bf16.mxu0 0
          %1649 = vmatpush1.bf16.msra.mxu0 %v1230
          %1650 = vmatprep.subr.bf16.mxu0 0
          %1651 = vmatpush1.bf16.msra.mxu0 %v1231
          %1652 = vmatprep.subr.bf16.mxu0 0
          %1653 = vmatpush1.bf16.msra.mxu0 %v1232
          %1654 = vmatprep.subr.bf16.mxu0 0
          %1655 = vmatpush1.bf16.msra.mxu0 %v1233
          %1656 = vmatprep.subr.bf16.mxu0 0
          %1657 = vmatpush1.bf16.msra.mxu0 %v1234
          %1658 = vmatprep.subr.bf16.mxu0 0
          %1659 = vmatpush1.bf16.msra.mxu0 %v1235
          %1660 = vmatprep.mubr.bf16.mxu0 %v1485
          %1661 = vmatmul.mubr.bf16.gmra.mrb[0].mxu0 %v1484
          %v1662 = vpop.f32.mrb[0].mxu0
          %v1663 = vadd.f32 0.0, %v1662
          %v1664 = vpop.f32.mrb[0].mxu0
          %v1665 = vpop.f32.mrb[0].mxu0
          %v1666 = vadd.f32 0.0, %v1665
          %v1667 = vpop.f32.mrb[0].mxu0
          %1668 = vmatprep.mubr.bf16.mxu0 %v1488
          %1669 = vmatmul.mubr.bf16.gmra.mrb[0].mxu0 %v1487
          %v1670 = vpop.f32.mrb[0].mxu0
          %v1671 = vadd.f32 0.0, %v1670
          %v1672 = vpop.f32.mrb[0].mxu0
          %v1673 = vpop.f32.mrb[0].mxu0
          %v1674 = vadd.f32 0.0, %v1673
          %v1675 = vpop.f32.mrb[0].mxu0
          %1676 = vmatprep.mubr.bf16.mxu0 %v1491
          %1677 = vmatmul.mubr.bf16.gmra.mrb[0].mxu0 %v1490
          %v1678 = vpop.f32.mrb[0].mxu0
          %v1679 = vadd.f32 0.0, %v1678
          %v1680 = vpop.f32.mrb[0].mxu0
          %v1681 = vpop.f32.mrb[0].mxu0
          %v1682 = vadd.f32 0.0, %v1681
          %v1683 = vpop.f32.mrb[0].mxu0
          %1684 = vmatprep.mubr.bf16.mxu0 %v1494
          %1685 = vmatmul.mubr.bf16.gmra.mrb[0].mxu0 %v1493
          %v1686 = vpop.f32.mrb[0].mxu0
          %v1687 = vadd.f32 0.0, %v1686
          %v1688 = vpop.f32.mrb[0].mxu0
          %v1689 = vpop.f32.mrb[0].mxu0
          %v1690 = vadd.f32 0.0, %v1689
          %v1691 = vpop.f32.mrb[0].mxu0
          %1692 = vmatprep.mubr.bf16.mxu0 %v1497
          %1693 = vmatmul.mubr.bf16.gmra.mrb[0].mxu0 %v1496
          %v1694 = vpop.f32.mrb[0].mxu0
          %v1695 = vadd.f32 0.0, %v1694
          %v1696 = vpop.f32.mrb[0].mxu0
          %v1697 = vpop.f32.mrb[0].mxu0
          %v1698 = vadd.f32 0.0, %v1697
          %v1699 = vpop.f32.mrb[0].mxu0
          %1700 = vmatprep.mubr.bf16.mxu0 %v1500
          %1701 = vmatmul.mubr.bf16.gmra.mrb[0].mxu0 %v1499
          %v1702 = vpop.f32.mrb[0].mxu0
          %v1703 = vadd.f32 0.0, %v1702
          %v1704 = vpop.f32.mrb[0].mxu0
          %v1705 = vpop.f32.mrb[0].mxu0
          %v1706 = vadd.f32 0.0, %v1705
          %v1707 = vpop.f32.mrb[0].mxu0
          %1708 = vmatprep.mubr.bf16.mxu0 %v1503
          %1709 = vmatmul.mubr.bf16.gmra.mrb[0].mxu0 %v1502
          %v1710 = vpop.f32.mrb[0].mxu0
          %v1711 = vadd.f32 0.0, %v1710
          %v1712 = vpop.f32.mrb[0].mxu0
          %v1713 = vpop.f32.mrb[0].mxu0
          %v1714 = vadd.f32 0.0, %v1713
          %v1715 = vpop.f32.mrb[0].mxu0
          %1716 = vmatprep.mubr.bf16.mxu0 %v1506
          %1717 = vmatmul.mubr.bf16.gmra.mrb[0].mxu0 %v1505
          %v1718 = vpop.f32.mrb[0].mxu0
          %v1719 = vadd.f32 0.0, %v1718
          %v1720 = vpop.f32.mrb[0].mxu0
          %v1721 = vpop.f32.mrb[0].mxu0
          %v1722 = vadd.f32 0.0, %v1721
          %v1723 = vpop.f32.mrb[0].mxu0
          %1724 = vmatprep.mubr.bf16.mxu0 %v1509
          %1725 = vmatmul.mubr.bf16.gmra.mrb[0].mxu0 %v1508
          %v1726 = vpop.f32.mrb[0].mxu0
          %v1727 = vadd.f32 0.0, %v1726
          %v1728 = vpop.f32.mrb[0].mxu0
          %v1729 = vpop.f32.mrb[0].mxu0
          %v1730 = vadd.f32 0.0, %v1729
          %v1731 = vpop.f32.mrb[0].mxu0
          %1732 = vmatprep.mubr.bf16.mxu0 %v1512
          %1733 = vmatmul.mubr.bf16.gmra.mrb[0].mxu0 %v1511
          %v1734 = vpop.f32.mrb[0].mxu0
          %v1735 = vadd.f32 0.0, %v1734
          %v1736 = vpop.f32.mrb[0].mxu0
          %v1737 = vpop.f32.mrb[0].mxu0
          %v1738 = vadd.f32 0.0, %v1737
          %v1739 = vpop.f32.mrb[0].mxu0
          %1740 = vmatprep.mubr.bf16.mxu0 %v1515
          %1741 = vmatmul.mubr.bf16.gmra.mrb[0].mxu0 %v1514
          %v1742 = vpop.f32.mrb[0].mxu0
          %v1743 = vadd.f32 0.0, %v1742
          %v1744 = vpop.f32.mrb[0].mxu0
          %v1745 = vpop.f32.mrb[0].mxu0
          %v1746 = vadd.f32 0.0, %v1745
          %v1747 = vpop.f32.mrb[0].mxu0
          %1748 = vmatprep.mubr.bf16.mxu0 %v1518
          %1749 = vmatmul.mubr.bf16.gmra.mrb[0].mxu0 %v1517
          %v1750 = vpop.f32.mrb[0].mxu0
          %v1751 = vadd.f32 0.0, %v1750
          %v1752 = vpop.f32.mrb[0].mxu0
          %v1753 = vpop.f32.mrb[0].mxu0
          %v1754 = vadd.f32 0.0, %v1753
          %v1755 = vpop.f32.mrb[0].mxu0
          %1756 = vmatprep.mubr.bf16.mxu0 %v1521
          %1757 = vmatmul.mubr.bf16.gmra.mrb[0].mxu0 %v1520
          %v1758 = vpop.f32.mrb[0].mxu0
          %v1759 = vadd.f32 0.0, %v1758
          %v1760 = vpop.f32.mrb[0].mxu0
          %v1761 = vpop.f32.mrb[0].mxu0
          %v1762 = vadd.f32 0.0, %v1761
          %v1763 = vpop.f32.mrb[0].mxu0
          %1764 = vmatprep.mubr.bf16.mxu0 %v1524
          %1765 = vmatmul.mubr.bf16.gmra.mrb[0].mxu0 %v1523
          %v1766 = vpop.f32.mrb[0].mxu0
          %v1767 = vadd.f32 0.0, %v1766
          %v1768 = vpop.f32.mrb[0].mxu0
          %v1769 = vpop.f32.mrb[0].mxu0
          %v1770 = vadd.f32 0.0, %v1769
          %v1771 = vpop.f32.mrb[0].mxu0
          %1772 = vmatprep.mubr.bf16.mxu0 %v1527
          %1773 = vmatmul.mubr.bf16.gmra.mrb[0].mxu0 %v1526
          %v1774 = vpop.f32.mrb[0].mxu0
          %v1775 = vadd.f32 0.0, %v1774
          %v1776 = vpop.f32.mrb[0].mxu0
          %v1777 = vpop.f32.mrb[0].mxu0
          %v1778 = vadd.f32 0.0, %v1777
          %v1779 = vpop.f32.mrb[0].mxu0
          %1780 = vmatprep.mubr.bf16.mxu0 %v1530
          %1781 = vmatmul.mubr.bf16.gmra.mrb[0].mxu0 %v1529
          %v1782 = vpop.f32.mrb[0].mxu0
          %v1783 = vadd.f32 0.0, %v1782
          %v1784 = vpop.f32.mrb[0].mxu0
          %v1785 = vpop.f32.mrb[0].mxu0
          %v1786 = vadd.f32 0.0, %v1785
          %v1787 = vpop.f32.mrb[0].mxu0
          %1788 = vmatprep.mubr.bf16.mxu0 %v1533
          %1789 = vmatmul.mubr.bf16.gmra.mrb[0].mxu0 %v1532
          %v1790 = vpop.f32.mrb[0].mxu0
          %v1791 = vadd.f32 0.0, %v1790
          %v1792 = vpop.f32.mrb[0].mxu0
          %v1793 = vpop.f32.mrb[0].mxu0
          %v1794 = vadd.f32 0.0, %v1793
          %v1795 = vpop.f32.mrb[0].mxu0
          %1796 = vmatprep.mubr.bf16.mxu0 %v1536
          %1797 = vmatmul.mubr.bf16.gmra.mrb[0].mxu0 %v1535
          %v1798 = vpop.f32.mrb[0].mxu0
          %v1799 = vadd.f32 0.0, %v1798
          %v1800 = vpop.f32.mrb[0].mxu0
          %v1801 = vpop.f32.mrb[0].mxu0
          %v1802 = vadd.f32 0.0, %v1801
          %v1803 = vpop.f32.mrb[0].mxu0
          %1804 = vmatprep.mubr.bf16.mxu0 %v1539
          %1805 = vmatmul.mubr.bf16.gmra.mrb[0].mxu0 %v1538
          %v1806 = vpop.f32.mrb[0].mxu0
          %v1807 = vadd.f32 0.0, %v1806
          %v1808 = vpop.f32.mrb[0].mxu0
          %v1809 = vpop.f32.mrb[0].mxu0
          %v1810 = vadd.f32 0.0, %v1809
          %v1811 = vpop.f32.mrb[0].mxu0
          %1812 = vmatprep.mubr.bf16.mxu0 %v1542
          %1813 = vmatmul.mubr.bf16.gmra.mrb[0].mxu0 %v1541
          %v1814 = vpop.f32.mrb[0].mxu0
          %v1815 = vadd.f32 0.0, %v1814
          %v1816 = vpop.f32.mrb[0].mxu0
          %v1817 = vpop.f32.mrb[0].mxu0
          %v1818 = vadd.f32 0.0, %v1817
          %v1819 = vpop.f32.mrb[0].mxu0
          %1820 = vmatprep.mubr.bf16.mxu0 %v1545
          %1821 = vmatmul.mubr.bf16.gmra.mrb[0].mxu0 %v1544
          %v1822 = vpop.f32.mrb[0].mxu0
          %v1823 = vadd.f32 0.0, %v1822
          %v1824 = vpop.f32.mrb[0].mxu0
          %v1825 = vpop.f32.mrb[0].mxu0
          %v1826 = vadd.f32 0.0, %v1825
          %v1827 = vpop.f32.mrb[0].mxu0
          %1828 = vmatprep.mubr.bf16.mxu0 %v1548
          %1829 = vmatmul.mubr.bf16.gmra.mrb[0].mxu0 %v1547
          %v1830 = vpop.f32.mrb[0].mxu0
          %v1831 = vadd.f32 0.0, %v1830
          %v1832 = vpop.f32.mrb[0].mxu0
          %v1833 = vpop.f32.mrb[0].mxu0
          %v1834 = vadd.f32 0.0, %v1833
          %v1835 = vpop.f32.mrb[0].mxu0
          %1836 = vmatprep.mubr.bf16.mxu0 %v1551
          %1837 = vmatmul.mubr.bf16.gmra.mrb[0].mxu0 %v1550
          %v1838 = vpop.f32.mrb[0].mxu0
          %v1839 = vadd.f32 0.0, %v1838
          %v1840 = vpop.f32.mrb[0].mxu0
          %v1841 = vpop.f32.mrb[0].mxu0
          %v1842 = vadd.f32 0.0, %v1841
          %v1843 = vpop.f32.mrb[0].mxu0
          %1844 = vmatprep.mubr.bf16.mxu0 %v1554
          %1845 = vmatmul.mubr.bf16.gmra.mrb[0].mxu0 %v1553
          %v1846 = vpop.f32.mrb[0].mxu0
          %v1847 = vadd.f32 0.0, %v1846
          %v1848 = vpop.f32.mrb[0].mxu0
          %v1849 = vpop.f32.mrb[0].mxu0
          %v1850 = vadd.f32 0.0, %v1849
          %v1851 = vpop.f32.mrb[0].mxu0
          %1852 = vdwg.mxu0
          %1853 = vmatprep.subr.bf16.mxu0 0
          %1854 = vmatpush1.bf16.msra.mxu0 %v1236
          %1855 = vmatprep.subr.bf16.mxu0 0
          %1856 = vmatpush1.bf16.msra.mxu0 %v1237
          %1857 = vmatprep.subr.bf16.mxu0 0
          %1858 = vmatpush1.bf16.msra.mxu0 %v1238
          %1859 = vmatprep.subr.bf16.mxu0 0
          %1860 = vmatpush1.bf16.msra.mxu0 %v1239
          %1861 = vmatprep.subr.bf16.mxu0 0
          %1862 = vmatpush1.bf16.msra.mxu0 %v1240
          %1863 = vmatprep.subr.bf16.mxu0 0
          %1864 = vmatpush1.bf16.msra.mxu0 %v1241
          %1865 = vmatprep.subr.bf16.mxu0 0
          %1866 = vmatpush1.bf16.msra.mxu0 %v1242
          %1867 = vmatprep.subr.bf16.mxu0 0
          %1868 = vmatpush1.bf16.msra.mxu0 %v1243
          %1869 = vmatprep.subr.bf16.mxu0 0
          %1870 = vmatpush1.bf16.msra.mxu0 0
          %1871 = vmatprep.subr.bf16.mxu0 0
          %1872 = vmatpush1.bf16.msra.mxu0 0
          %1873 = vmatprep.subr.bf16.mxu0 0
          %1874 = vmatpush1.bf16.msra.mxu0 0
          %1875 = vmatprep.subr.bf16.mxu0 0
          %1876 = vmatpush1.bf16.msra.mxu0 0
          %1877 = vmatprep.subr.bf16.mxu0 0
          %1878 = vmatpush1.bf16.msra.mxu0 0
          %1879 = vmatprep.subr.bf16.mxu0 0
          %1880 = vmatpush1.bf16.msra.mxu0 0
          %1881 = vmatprep.subr.bf16.mxu0 0
          %1882 = vmatpush1.bf16.msra.mxu0 0
          %1883 = vmatprep.subr.bf16.mxu0 0
          %1884 = vmatpush1.bf16.msra.mxu0 0
          %1885 = vmatprep.mubr.bf16.mxu0 0
          %1886 = vmatmul.mubr.bf16.gmra.mrb[0].mxu0 %v1486
          %v1887 = vpop.f32.mrb[0].mxu0
          %v1888 = vadd.f32 %v1663, %v1887
          %v1889 = vpop.f32.mrb[0].mxu0
          %v1890 = vpop.f32.mrb[0].mxu0
          %v1891 = vadd.f32 %v1666, %v1890
          %v1892 = vpop.f32.mrb[0].mxu0
          %1893 = vmatprep.mubr.bf16.mxu0 0
          %1894 = vmatmul.mubr.bf16.gmra.mrb[0].mxu0 %v1489
          %v1895 = vpop.f32.mrb[0].mxu0
          %v1896 = vadd.f32 %v1671, %v1895
          %v1897 = vpop.f32.mrb[0].mxu0
          %v1898 = vpop.f32.mrb[0].mxu0
          %v1899 = vadd.f32 %v1674, %v1898
          %v1900 = vpop.f32.mrb[0].mxu0
          %1901 = vmatprep.mubr.bf16.mxu0 0
          %1902 = vmatmul.mubr.bf16.gmra.mrb[0].mxu0 %v1492
          %v1903 = vpop.f32.mrb[0].mxu0
          %v1904 = vadd.f32 %v1679, %v1903
          %v1905 = vpop.f32.mrb[0].mxu0
          %v1906 = vpop.f32.mrb[0].mxu0
          %v1907 = vadd.f32 %v1682, %v1906
          %v1908 = vpop.f32.mrb[0].mxu0
          %1909 = vmatprep.mubr.bf16.mxu0 0
          %1910 = vmatmul.mubr.bf16.gmra.mrb[0].mxu0 %v1495
          %v1911 = vpop.f32.mrb[0].mxu0
          %v1912 = vadd.f32 %v1687, %v1911
          %v1913 = vpop.f32.mrb[0].mxu0
          %v1914 = vpop.f32.mrb[0].mxu0
          %v1915 = vadd.f32 %v1690, %v1914
          %v1916 = vpop.f32.mrb[0].mxu0
          %1917 = vmatprep.mubr.bf16.mxu0 0
          %1918 = vmatmul.mubr.bf16.gmra.mrb[0].mxu0 %v1498
          %v1919 = vpop.f32.mrb[0].mxu0
          %v1920 = vadd.f32 %v1695, %v1919
          %v1921 = vpop.f32.mrb[0].mxu0
          %v1922 = vpop.f32.mrb[0].mxu0
          %v1923 = vadd.f32 %v1698, %v1922
          %v1924 = vpop.f32.mrb[0].mxu0
          %1925 = vmatprep.mubr.bf16.mxu0 0
          %1926 = vmatmul.mubr.bf16.gmra.mrb[0].mxu0 %v1501
          %v1927 = vpop.f32.mrb[0].mxu0
          %v1928 = vadd.f32 %v1703, %v1927
          %v1929 = vpop.f32.mrb[0].mxu0
          %v1930 = vpop.f32.mrb[0].mxu0
          %v1931 = vadd.f32 %v1706, %v1930
          %v1932 = vpop.f32.mrb[0].mxu0
          %1933 = vmatprep.mubr.bf16.mxu0 0
          %1934 = vmatmul.mubr.bf16.gmra.mrb[0].mxu0 %v1504
          %v1935 = vpop.f32.mrb[0].mxu0
          %v1936 = vadd.f32 %v1711, %v1935
          %v1937 = vpop.f32.mrb[0].mxu0
          %v1938 = vpop.f32.mrb[0].mxu0
          %v1939 = vadd.f32 %v1714, %v1938
          %v1940 = vpop.f32.mrb[0].mxu0
          %1941 = vmatprep.mubr.bf16.mxu0 0
          %1942 = vmatmul.mubr.bf16.gmra.mrb[0].mxu0 %v1507
          %v1943 = vpop.f32.mrb[0].mxu0
          %v1944 = vadd.f32 %v1719, %v1943
          %v1945 = vpop.f32.mrb[0].mxu0
          %v1946 = vpop.f32.mrb[0].mxu0
          %v1947 = vadd.f32 %v1722, %v1946
          %v1948 = vpop.f32.mrb[0].mxu0
          %1949 = vmatprep.mubr.bf16.mxu0 0
          %1950 = vmatmul.mubr.bf16.gmra.mrb[0].mxu0 %v1510
          %v1951 = vpop.f32.mrb[0].mxu0
          %v1952 = vadd.f32 %v1727, %v1951
          %v1953 = vpop.f32.mrb[0].mxu0
          %v1954 = vpop.f32.mrb[0].mxu0
          %v1955 = vadd.f32 %v1730, %v1954
          %v1956 = vpop.f32.mrb[0].mxu0
          %1957 = vmatprep.mubr.bf16.mxu0 0
          %1958 = vmatmul.mubr.bf16.gmra.mrb[0].mxu0 %v1513
          %v1959 = vpop.f32.mrb[0].mxu0
          %v1960 = vadd.f32 %v1735, %v1959
          %v1961 = vpop.f32.mrb[0].mxu0
          %v1962 = vpop.f32.mrb[0].mxu0
          %v1963 = vadd.f32 %v1738, %v1962
          %v1964 = vpop.f32.mrb[0].mxu0
          %1965 = vmatprep.mubr.bf16.mxu0 0
          %1966 = vmatmul.mubr.bf16.gmra.mrb[0].mxu0 %v1516
          %v1967 = vpop.f32.mrb[0].mxu0
          %v1968 = vadd.f32 %v1743, %v1967
          %v1969 = vpop.f32.mrb[0].mxu0
          %v1970 = vpop.f32.mrb[0].mxu0
          %v1971 = vadd.f32 %v1746, %v1970
          %v1972 = vpop.f32.mrb[0].mxu0
          %1973 = vmatprep.mubr.bf16.mxu0 0
          %1974 = vmatmul.mubr.bf16.gmra.mrb[0].mxu0 %v1519
          %v1975 = vpop.f32.mrb[0].mxu0
          %v1976 = vadd.f32 %v1751, %v1975
          %v1977 = vpop.f32.mrb[0].mxu0
          %v1978 = vpop.f32.mrb[0].mxu0
          %v1979 = vadd.f32 %v1754, %v1978
          %v1980 = vpop.f32.mrb[0].mxu0
          %1981 = vmatprep.mubr.bf16.mxu0 0
          %1982 = vmatmul.mubr.bf16.gmra.mrb[0].mxu0 %v1522
          %v1983 = vpop.f32.mrb[0].mxu0
          %v1984 = vadd.f32 %v1759, %v1983
          %v1985 = vpop.f32.mrb[0].mxu0
          %v1986 = vpop.f32.mrb[0].mxu0
          %v1987 = vadd.f32 %v1762, %v1986
          %v1988 = vpop.f32.mrb[0].mxu0
          %1989 = vmatprep.mubr.bf16.mxu0 0
          %1990 = vmatmul.mubr.bf16.gmra.mrb[0].mxu0 %v1525
          %v1991 = vpop.f32.mrb[0].mxu0
          %v1992 = vadd.f32 %v1767, %v1991
          %v1993 = vpop.f32.mrb[0].mxu0
          %v1994 = vpop.f32.mrb[0].mxu0
          %v1995 = vadd.f32 %v1770, %v1994
          %v1996 = vpop.f32.mrb[0].mxu0
          %1997 = vmatprep.mubr.bf16.mxu0 0
          %1998 = vmatmul.mubr.bf16.gmra.mrb[0].mxu0 %v1528
          %v1999 = vpop.f32.mrb[0].mxu0
          %v2000 = vadd.f32 %v1775, %v1999
          %v2001 = vpop.f32.mrb[0].mxu0
          %v2002 = vpop.f32.mrb[0].mxu0
          %v2003 = vadd.f32 %v1778, %v2002
          %v2004 = vpop.f32.mrb[0].mxu0
          %2005 = vmatprep.mubr.bf16.mxu0 0
          %2006 = vmatmul.mubr.bf16.gmra.mrb[0].mxu0 %v1531
          %v2007 = vpop.f32.mrb[0].mxu0
          %v2008 = vadd.f32 %v1783, %v2007
          %v2009 = vpop.f32.mrb[0].mxu0
          %v2010 = vpop.f32.mrb[0].mxu0
          %v2011 = vadd.f32 %v1786, %v2010
          %v2012 = vpop.f32.mrb[0].mxu0
          %2013 = vmatprep.mubr.bf16.mxu0 0
          %2014 = vmatmul.mubr.bf16.gmra.mrb[0].mxu0 %v1534
          %v2015 = vpop.f32.mrb[0].mxu0
          %v2016 = vadd.f32 %v1791, %v2015
          %v2017 = vpop.f32.mrb[0].mxu0
          %v2018 = vpop.f32.mrb[0].mxu0
          %v2019 = vadd.f32 %v1794, %v2018
          %v2020 = vpop.f32.mrb[0].mxu0
          %2021 = vmatprep.mubr.bf16.mxu0 0
          %2022 = vmatmul.mubr.bf16.gmra.mrb[0].mxu0 %v1537
          %v2023 = vpop.f32.mrb[0].mxu0
          %v2024 = vadd.f32 %v1799, %v2023
          %v2025 = vpop.f32.mrb[0].mxu0
          %v2026 = vpop.f32.mrb[0].mxu0
          %v2027 = vadd.f32 %v1802, %v2026
          %v2028 = vpop.f32.mrb[0].mxu0
          %2029 = vmatprep.mubr.bf16.mxu0 0
          %2030 = vmatmul.mubr.bf16.gmra.mrb[0].mxu0 %v1540
          %v2031 = vpop.f32.mrb[0].mxu0
          %v2032 = vadd.f32 %v1807, %v2031
          %v2033 = vpop.f32.mrb[0].mxu0
          %v2034 = vpop.f32.mrb[0].mxu0
          %v2035 = vadd.f32 %v1810, %v2034
          %v2036 = vpop.f32.mrb[0].mxu0
          %2037 = vmatprep.mubr.bf16.mxu0 0
          %2038 = vmatmul.mubr.bf16.gmra.mrb[0].mxu0 %v1543
          %v2039 = vpop.f32.mrb[0].mxu0
          %v2040 = vadd.f32 %v1815, %v2039
          %v2041 = vpop.f32.mrb[0].mxu0
          %v2042 = vpop.f32.mrb[0].mxu0
          %v2043 = vadd.f32 %v1818, %v2042
          %v2044 = vpop.f32.mrb[0].mxu0
          %2045 = vmatprep.mubr.bf16.mxu0 0
          %2046 = vmatmul.mubr.bf16.gmra.mrb[0].mxu0 %v1546
          %v2047 = vpop.f32.mrb[0].mxu0
          %v2048 = vadd.f32 %v1823, %v2047
          %v2049 = vpop.f32.mrb[0].mxu0
          %v2050 = vpop.f32.mrb[0].mxu0
          %v2051 = vadd.f32 %v1826, %v2050
          %v2052 = vpop.f32.mrb[0].mxu0
          %2053 = vmatprep.mubr.bf16.mxu0 0
          %2054 = vmatmul.mubr.bf16.gmra.mrb[0].mxu0 %v1549
          %v2055 = vpop.f32.mrb[0].mxu0
          %v2056 = vadd.f32 %v1831, %v2055
          %v2057 = vpop.f32.mrb[0].mxu0
          %v2058 = vpop.f32.mrb[0].mxu0
          %v2059 = vadd.f32 %v1834, %v2058
          %v2060 = vpop.f32.mrb[0].mxu0
          %2061 = vmatprep.mubr.bf16.mxu0 0
          %2062 = vmatmul.mubr.bf16.gmra.mrb[0].mxu0 %v1552
          %v2063 = vpop.f32.mrb[0].mxu0
          %v2064 = vadd.f32 %v1839, %v2063
          %v2065 = vpop.f32.mrb[0].mxu0
          %v2066 = vpop.f32.mrb[0].mxu0
          %v2067 = vadd.f32 %v1842, %v2066
          %v2068 = vpop.f32.mrb[0].mxu0
          %2069 = vmatprep.mubr.bf16.mxu0 0
          %2070 = vmatmul.mubr.bf16.gmra.mrb[0].mxu0 %v1555
          %v2071 = vpop.f32.mrb[0].mxu0
          %v2072 = vadd.f32 %v1847, %v2071
          %v2073 = vpop.f32.mrb[0].mxu0
          %v2074 = vpop.f32.mrb[0].mxu0
          %v2075 = vadd.f32 %v1850, %v2074
          %v2076 = vpop.f32.mrb[0].mxu0
          %2077 = vdwg.mxu0
          %v2078 = vadd.f32 %v1076, %v1888
          %v2079 = vadd.f32 %v1077, %v1891
          %v2080 = vadd.f32 %v1078, %v1896
          %v2081 = vadd.f32 %v1079, %v1899
          %v2082 = vadd.f32 %v1080, %v1904
          %v2083 = vadd.f32 %v1081, %v1907
          %v2084 = vadd.f32 %v1082, %v1912
          %v2085 = vadd.f32 %v1083, %v1915
          %v2086 = vadd.f32 %v1084, %v1920
          %v2087 = vadd.f32 %v1085, %v1923
          %v2088 = vadd.f32 %v1086, %v1928
          %v2089 = vadd.f32 %v1087, %v1931
          %v2090 = vadd.f32 %v1088, %v1936
          %v2091 = vadd.f32 %v1089, %v1939
          %v2092 = vadd.f32 %v1090, %v1944
          %v2093 = vadd.f32 %v1091, %v1947
          %v2094 = vadd.f32 %v1092, %v1952
          %v2095 = vadd.f32 %v1093, %v1955
          %v2096 = vadd.f32 %v1094, %v1960
          %v2097 = vadd.f32 %v1095, %v1963
          %v2098 = vadd.f32 %v1096, %v1968
          %v2099 = vadd.f32 %v1097, %v1971
          %v2100 = vadd.f32 %v1098, %v1976
          %v2101 = vadd.f32 %v1099, %v1979
          %v2102 = vadd.f32 %v1100, %v1984
          %v2103 = vadd.f32 %v1101, %v1987
          %v2104 = vadd.f32 %v1102, %v1992
          %v2105 = vadd.f32 %v1103, %v1995
          %v2106 = vadd.f32 %v1104, %v2000
          %v2107 = vadd.f32 %v1105, %v2003
          %v2108 = vadd.f32 %v1106, %v2008
          %v2109 = vadd.f32 %v1107, %v2011
          %v2110 = vadd.f32 %v1108, %v2016
          %v2111 = vadd.f32 %v1109, %v2019
          %v2112 = vadd.f32 %v1110, %v2024
          %v2113 = vadd.f32 %v1111, %v2027
          %v2114 = vadd.f32 %v1112, %v2032
          %v2115 = vadd.f32 %v1113, %v2035
          %v2116 = vadd.f32 %v1114, %v2040
          %v2117 = vadd.f32 %v1115, %v2043
          %v2118 = vadd.f32 %v1116, %v2048
          %v2119 = vadd.f32 %v1117, %v2051
          %v2120 = vadd.f32 %v1118, %v2056
          %v2121 = vadd.f32 %v1119, %v2059
          %v2122 = vadd.f32 %v1120, %v2064
          %v2123 = vadd.f32 %v1121, %v2067
          %v2124 = vadd.f32 %v1122, %v2072
          %v2125 = vadd.f32 %v1123, %v2075
          %vm2126 = vcmask 130048
          %2127 = vst.msk [vmem:[#allocation2] sm:$0xff] %vm2126, %v2078
          %2128 = vst.msk [vmem:[#allocation2 + $0x8] sm:$0xff] %vm2126, %v2079
          %2129 = vst.msk [vmem:[#allocation2 + $0x10] sm:$0xff] %vm2126, %v2080
          %2130 = vst.msk [vmem:[#allocation2 + $0x18] sm:$0xff] %vm2126, %v2081
          %2131 = vst.msk [vmem:[#allocation2 + $0x20] sm:$0xff] %vm2126, %v2082
          %2132 = vst.msk [vmem:[#allocation2 + $0x28] sm:$0xff] %vm2126, %v2083
          %2133 = vst.msk [vmem:[#allocation2 + $0x30] sm:$0xff] %vm2126, %v2084
          %2134 = vst.msk [vmem:[#allocation2 + $0x38] sm:$0xff] %vm2126, %v2085
          %2135 = vst.msk [vmem:[#allocation2 + $0x40] sm:$0xff] %vm2126, %v2086
          %2136 = vst.msk [vmem:[#allocation2 + $0x48] sm:$0xff] %vm2126, %v2087
          %2137 = vst.msk [vmem:[#allocation2 + $0x50] sm:$0xff] %vm2126, %v2088
          %2138 = vst.msk [vmem:[#allocation2 + $0x58] sm:$0xff] %vm2126, %v2089
          %2139 = vst.msk [vmem:[#allocation2 + $0x60] sm:$0xff] %vm2126, %v2090
          %2140 = vst.msk [vmem:[#allocation2 + $0x68] sm:$0xff] %vm2126, %v2091
          %2141 = vst.msk [vmem:[#allocation2 + $0x70] sm:$0xff] %vm2126, %v2092
          %2142 = vst.msk [vmem:[#allocation2 + $0x78] sm:$0xff] %vm2126, %v2093
          %2143 = vst.msk [vmem:[#allocation2 + $0x80] sm:$0xff] %vm2126, %v2094
          %2144 = vst.msk [vmem:[#allocation2 + $0x88] sm:$0xff] %vm2126, %v2095
          %2145 = vst.msk [vmem:[#allocation2 + $0x90] sm:$0xff] %vm2126, %v2096
          %2146 = vst.msk [vmem:[#allocation2 + $0x98] sm:$0xff] %vm2126, %v2097
          %2147 = vst.msk [vmem:[#allocation2 + $0xa0] sm:$0xff] %vm2126, %v2098
          %2148 = vst.msk [vmem:[#allocation2 + $0xa8] sm:$0xff] %vm2126, %v2099
          %2149 = vst.msk [vmem:[#allocation2 + $0xb0] sm:$0xff] %vm2126, %v2100
          %2150 = vst.msk [vmem:[#allocation2 + $0xb8] sm:$0xff] %vm2126, %v2101
          %2151 = vst.msk [vmem:[#allocation2 + $0xc0] sm:$0xff] %vm2126, %v2102
          %2152 = vst.msk [vmem:[#allocation2 + $0xc8] sm:$0xff] %vm2126, %v2103
          %2153 = vst.msk [vmem:[#allocation2 + $0xd0] sm:$0xff] %vm2126, %v2104
          %2154 = vst.msk [vmem:[#allocation2 + $0xd8] sm:$0xff] %vm2126, %v2105
          %2155 = vst.msk [vmem:[#allocation2 + $0xe0] sm:$0xff] %vm2126, %v2106
          %2156 = vst.msk [vmem:[#allocation2 + $0xe8] sm:$0xff] %vm2126, %v2107
          %2157 = vst.msk [vmem:[#allocation2 + $0xf0] sm:$0xff] %vm2126, %v2108
          %2158 = vst.msk [vmem:[#allocation2 + $0xf8] sm:$0xff] %vm2126, %v2109
          %2159 = vst.msk [vmem:[#allocation2 + $0x100] sm:$0xff] %vm2126, %v2110
          %2160 = vst.msk [vmem:[#allocation2 + $0x108] sm:$0xff] %vm2126, %v2111
          %2161 = vst.msk [vmem:[#allocation2 + $0x110] sm:$0xff] %vm2126, %v2112
          %2162 = vst.msk [vmem:[#allocation2 + $0x118] sm:$0xff] %vm2126, %v2113
          %2163 = vst.msk [vmem:[#allocation2 + $0x120] sm:$0xff] %vm2126, %v2114
          %2164 = vst.msk [vmem:[#allocation2 + $0x128] sm:$0xff] %vm2126, %v2115
          %2165 = vst.msk [vmem:[#allocation2 + $0x130] sm:$0xff] %vm2126, %v2116
          %2166 = vst.msk [vmem:[#allocation2 + $0x138] sm:$0xff] %vm2126, %v2117
          %2167 = vst.msk [vmem:[#allocation2 + $0x140] sm:$0xff] %vm2126, %v2118
          %2168 = vst.msk [vmem:[#allocation2 + $0x148] sm:$0xff] %vm2126, %v2119
          %2169 = vst.msk [vmem:[#allocation2 + $0x150] sm:$0xff] %vm2126, %v2120
          %2170 = vst.msk [vmem:[#allocation2 + $0x158] sm:$0xff] %vm2126, %v2121
          %2171 = vst.msk [vmem:[#allocation2 + $0x160] sm:$0xff] %vm2126, %v2122
          %2172 = vst.msk [vmem:[#allocation2 + $0x168] sm:$0xff] %vm2126, %v2123
          %2173 = vst.msk [vmem:[#allocation2 + $0x170] sm:$0xff] %vm2126, %v2124
          %2174 = vst.msk [vmem:[#allocation2 + $0x178] sm:$0xff] %vm2126, %v2125
        $region76: #{tpu_custom_call.1} parent=47 // pred_fallthru
          _
        %p2175 = scmp.eq.s32.totalorder %s36, 1
        // Predicated region
        $region77: #{tpu_custom_call.1} parent=47 // pred_check
          %p2176 = pneg %p2175
        $region78: #{tpu_custom_call.1} parent=47 // pred_check_branch
          %2178 = sbr.rel (%p2176) target = $region80
        $region79: #{tpu_custom_call.1} parent=47 // pred_region
          %v2179 = vld [vmem:[#allocation2] sm:$0xff]
          %v2180 = vld [vmem:[#allocation2 + $0x8] sm:$0xff]
          %v2181 = vld [vmem:[#allocation2 + $0x10] sm:$0xff]
          %v2182 = vld [vmem:[#allocation2 + $0x18] sm:$0xff]
          %v2183 = vld [vmem:[#allocation2 + $0x20] sm:$0xff]
          %v2184 = vld [vmem:[#allocation2 + $0x28] sm:$0xff]
          %v2185 = vld [vmem:[#allocation2 + $0x30] sm:$0xff]
          %v2186 = vld [vmem:[#allocation2 + $0x38] sm:$0xff]
          %v2187 = vld [vmem:[#allocation2 + $0x40] sm:$0xff]
          %v2188 = vld [vmem:[#allocation2 + $0x48] sm:$0xff]
          %v2189 = vld [vmem:[#allocation2 + $0x50] sm:$0xff]
          %v2190 = vld [vmem:[#allocation2 + $0x58] sm:$0xff]
          %v2191 = vld [vmem:[#allocation2 + $0x60] sm:$0xff]
          %v2192 = vld [vmem:[#allocation2 + $0x68] sm:$0xff]
          %v2193 = vld [vmem:[#allocation2 + $0x70] sm:$0xff]
          %v2194 = vld [vmem:[#allocation2 + $0x78] sm:$0xff]
          %v2195 = vld [vmem:[#allocation2 + $0x80] sm:$0xff]
          %v2196 = vld [vmem:[#allocation2 + $0x88] sm:$0xff]
          %v2197 = vld [vmem:[#allocation2 + $0x90] sm:$0xff]
          %v2198 = vld [vmem:[#allocation2 + $0x98] sm:$0xff]
          %v2199 = vld [vmem:[#allocation2 + $0xa0] sm:$0xff]
          %v2200 = vld [vmem:[#allocation2 + $0xa8] sm:$0xff]
          %v2201 = vld [vmem:[#allocation2 + $0xb0] sm:$0xff]
          %v2202 = vld [vmem:[#allocation2 + $0xb8] sm:$0xff]
          %v2203 = vld [vmem:[#allocation2 + $0xc0] sm:$0xff]
          %v2204 = vld [vmem:[#allocation2 + $0xc8] sm:$0xff]
          %v2205 = vld [vmem:[#allocation2 + $0xd0] sm:$0xff]
          %v2206 = vld [vmem:[#allocation2 + $0xd8] sm:$0xff]
          %v2207 = vld [vmem:[#allocation2 + $0xe0] sm:$0xff]
          %v2208 = vld [vmem:[#allocation2 + $0xe8] sm:$0xff]
          %v2209 = vld [vmem:[#allocation2 + $0xf0] sm:$0xff]
          %v2210 = vld [vmem:[#allocation2 + $0xf8] sm:$0xff]
          %v2211 = vld [vmem:[#allocation2 + $0x100] sm:$0xff]
          %v2212 = vld [vmem:[#allocation2 + $0x108] sm:$0xff]
          %v2213 = vld [vmem:[#allocation2 + $0x110] sm:$0xff]
          %v2214 = vld [vmem:[#allocation2 + $0x118] sm:$0xff]
          %v2215 = vld [vmem:[#allocation2 + $0x120] sm:$0xff]
          %v2216 = vld [vmem:[#allocation2 + $0x128] sm:$0xff]
          %v2217 = vld [vmem:[#allocation2 + $0x130] sm:$0xff]
          %v2218 = vld [vmem:[#allocation2 + $0x138] sm:$0xff]
          %v2219 = vld [vmem:[#allocation2 + $0x140] sm:$0xff]
          %v2220 = vld [vmem:[#allocation2 + $0x148] sm:$0xff]
          %v2221 = vld [vmem:[#allocation2 + $0x150] sm:$0xff]
          %v2222 = vld [vmem:[#allocation2 + $0x158] sm:$0xff]
          %v2223 = vld [vmem:[#allocation2 + $0x160] sm:$0xff]
          %v2224 = vld [vmem:[#allocation2 + $0x168] sm:$0xff]
          %v2225 = vld [vmem:[#allocation2 + $0x170] sm:$0xff]
          %v2226 = vld [vmem:[#allocation2 + $0x178] sm:$0xff]
          %v2227 = vld [vmem:[#allocation10] sm:$0x1]
          %v2229 = vlaneseq
          %v2230 = vshrl.u32 %v2229, 7
          %v2231 = vsub.s32 0, %v2230
          %v2232 = vrot.slane %v2227, %v2231
          %v2234 = vadd.f32 %v2179, %v2232
          %v2235 = vadd.f32 %v2180, %v2232
          %v2236 = vadd.f32 %v2181, %v2232
          %v2237 = vadd.f32 %v2182, %v2232
          %v2238 = vadd.f32 %v2183, %v2232
          %v2239 = vadd.f32 %v2184, %v2232
          %v2240 = vadd.f32 %v2185, %v2232
          %v2241 = vadd.f32 %v2186, %v2232
          %v2242 = vadd.f32 %v2187, %v2232
          %v2243 = vadd.f32 %v2188, %v2232
          %v2244 = vadd.f32 %v2189, %v2232
          %v2245 = vadd.f32 %v2190, %v2232
          %v2246 = vadd.f32 %v2191, %v2232
          %v2247 = vadd.f32 %v2192, %v2232
          %v2248 = vadd.f32 %v2193, %v2232
          %v2249 = vadd.f32 %v2194, %v2232
          %v2250 = vadd.f32 %v2195, %v2232
          %v2251 = vadd.f32 %v2196, %v2232
          %v2252 = vadd.f32 %v2197, %v2232
          %v2253 = vadd.f32 %v2198, %v2232
          %v2254 = vadd.f32 %v2199, %v2232
          %v2255 = vadd.f32 %v2200, %v2232
          %v2256 = vadd.f32 %v2201, %v2232
          %v2257 = vadd.f32 %v2202, %v2232
          %v2258 = vadd.f32 %v2203, %v2232
          %v2259 = vadd.f32 %v2204, %v2232
          %v2260 = vadd.f32 %v2205, %v2232
          %v2261 = vadd.f32 %v2206, %v2232
          %v2262 = vadd.f32 %v2207, %v2232
          %v2263 = vadd.f32 %v2208, %v2232
          %v2264 = vadd.f32 %v2209, %v2232
          %v2265 = vadd.f32 %v2210, %v2232
          %v2266 = vadd.f32 %v2211, %v2232
          %v2267 = vadd.f32 %v2212, %v2232
          %v2268 = vadd.f32 %v2213, %v2232
          %v2269 = vadd.f32 %v2214, %v2232
          %v2270 = vadd.f32 %v2215, %v2232
          %v2271 = vadd.f32 %v2216, %v2232
          %v2272 = vadd.f32 %v2217, %v2232
          %v2273 = vadd.f32 %v2218, %v2232
          %v2274 = vadd.f32 %v2219, %v2232
          %v2275 = vadd.f32 %v2220, %v2232
          %v2276 = vadd.f32 %v2221, %v2232
          %v2277 = vadd.f32 %v2222, %v2232
          %v2278 = vadd.f32 %v2223, %v2232
          %v2279 = vadd.f32 %v2224, %v2232
          %v2280 = vadd.f32 %v2225, %v2232
          %v2281 = vadd.f32 %v2226, %v2232
          %v2282 = vmax.f32 %v2234, 0.0
          %v2283 = vmax.f32 %v2235, 0.0
          %v2284 = vmax.f32 %v2236, 0.0
          %v2285 = vmax.f32 %v2237, 0.0
          %v2286 = vmax.f32 %v2238, 0.0
          %v2287 = vmax.f32 %v2239, 0.0
          %v2288 = vmax.f32 %v2240, 0.0
          %v2289 = vmax.f32 %v2241, 0.0
          %v2290 = vmax.f32 %v2242, 0.0
          %v2291 = vmax.f32 %v2243, 0.0
          %v2292 = vmax.f32 %v2244, 0.0
          %v2293 = vmax.f32 %v2245, 0.0
          %v2294 = vmax.f32 %v2246, 0.0
          %v2295 = vmax.f32 %v2247, 0.0
          %v2296 = vmax.f32 %v2248, 0.0
          %v2297 = vmax.f32 %v2249, 0.0
          %v2298 = vmax.f32 %v2250, 0.0
          %v2299 = vmax.f32 %v2251, 0.0
          %v2300 = vmax.f32 %v2252, 0.0
          %v2301 = vmax.f32 %v2253, 0.0
          %v2302 = vmax.f32 %v2254, 0.0
          %v2303 = vmax.f32 %v2255, 0.0
          %v2304 = vmax.f32 %v2256, 0.0
          %v2305 = vmax.f32 %v2257, 0.0
          %v2306 = vmax.f32 %v2258, 0.0
          %v2307 = vmax.f32 %v2259, 0.0
          %v2308 = vmax.f32 %v2260, 0.0
          %v2309 = vmax.f32 %v2261, 0.0
          %v2310 = vmax.f32 %v2262, 0.0
          %v2311 = vmax.f32 %v2263, 0.0
          %v2312 = vmax.f32 %v2264, 0.0
          %v2313 = vmax.f32 %v2265, 0.0
          %v2314 = vmax.f32 %v2266, 0.0
          %v2315 = vmax.f32 %v2267, 0.0
          %v2316 = vmax.f32 %v2268, 0.0
          %v2317 = vmax.f32 %v2269, 0.0
          %v2318 = vmax.f32 %v2270, 0.0
          %v2319 = vmax.f32 %v2271, 0.0
          %v2320 = vmax.f32 %v2272, 0.0
          %v2321 = vmax.f32 %v2273, 0.0
          %v2322 = vmax.f32 %v2274, 0.0
          %v2323 = vmax.f32 %v2275, 0.0
          %v2324 = vmax.f32 %v2276, 0.0
          %v2325 = vmax.f32 %v2277, 0.0
          %v2326 = vmax.f32 %v2278, 0.0
          %v2327 = vmax.f32 %v2279, 0.0
          %v2328 = vmax.f32 %v2280, 0.0
          %v2329 = vmax.f32 %v2281, 0.0
          %v2330 = vld [vmem:[%s503] sm:$0xff]
          %v2331 = vld [vmem:[%s503 + $0x8] sm:$0xff]
          %v2332 = vld [vmem:[%s503 + $0x10] sm:$0xff]
          %v2333 = vld [vmem:[%s503 + $0x18] sm:$0xff]
          %v2334 = vld [vmem:[%s503 + $0x20] sm:$0xff]
          %v2335 = vld [vmem:[%s503 + $0x28] sm:$0xff]
          %v2336 = vld [vmem:[%s503 + $0x30] sm:$0xff]
          %v2337 = vld [vmem:[%s503 + $0x38] sm:$0xff]
          %v2338 = vld [vmem:[%s503 + $0x40] sm:$0xff]
          %v2339 = vld [vmem:[%s503 + $0x48] sm:$0xff]
          %v2340 = vld [vmem:[%s503 + $0x50] sm:$0xff]
          %v2341 = vld [vmem:[%s503 + $0x58] sm:$0xff]
          %v2342 = vld [vmem:[%s503 + $0x60] sm:$0xff]
          %v2343 = vld [vmem:[%s503 + $0x68] sm:$0xff]
          %v2344 = vld [vmem:[%s503 + $0x70] sm:$0xff]
          %v2345 = vld [vmem:[%s503 + $0x78] sm:$0xff]
          %v2346 = vld [vmem:[%s503 + $0x80] sm:$0xff]
          %v2347 = vld [vmem:[%s503 + $0x88] sm:$0xff]
          %v2348 = vld [vmem:[%s503 + $0x90] sm:$0xff]
          %v2349 = vld [vmem:[%s503 + $0x98] sm:$0xff]
          %v2350 = vld [vmem:[%s503 + $0xa0] sm:$0xff]
          %v2351 = vld [vmem:[%s503 + $0xa8] sm:$0xff]
          %v2352 = vld [vmem:[%s503 + $0xb0] sm:$0xff]
          %v2353 = vld [vmem:[%s503 + $0xb8] sm:$0xff]
          %v2354 = vld [vmem:[%s503 + $0xc0] sm:$0xff]
          %v2355 = vld [vmem:[%s503 + $0xc8] sm:$0xff]
          %v2356 = vld [vmem:[%s503 + $0xd0] sm:$0xff]
          %v2357 = vld [vmem:[%s503 + $0xd8] sm:$0xff]
          %v2358 = vld [vmem:[%s503 + $0xe0] sm:$0xff]
          %v2359 = vld [vmem:[%s503 + $0xe8] sm:$0xff]
          %v2360 = vld [vmem:[%s503 + $0xf0] sm:$0xff]
          %v2361 = vld [vmem:[%s503 + $0xf8] sm:$0xff]
          %v2362 = vld [vmem:[%s503 + $0x100] sm:$0xff]
          %v2363 = vld [vmem:[%s503 + $0x108] sm:$0xff]
          %v2364 = vld [vmem:[%s503 + $0x110] sm:$0xff]
          %v2365 = vld [vmem:[%s503 + $0x118] sm:$0xff]
          %v2366 = vld [vmem:[%s503 + $0x120] sm:$0xff]
          %v2367 = vld [vmem:[%s503 + $0x128] sm:$0xff]
          %v2368 = vld [vmem:[%s503 + $0x130] sm:$0xff]
          %v2369 = vld [vmem:[%s503 + $0x138] sm:$0xff]
          %v2370 = vld [vmem:[%s503 + $0x140] sm:$0xff]
          %v2371 = vld [vmem:[%s503 + $0x148] sm:$0xff]
          %v2372 = vld [vmem:[%s503 + $0x150] sm:$0xff]
          %v2373 = vld [vmem:[%s503 + $0x158] sm:$0xff]
          %v2374 = vld [vmem:[%s503 + $0x160] sm:$0xff]
          %v2375 = vld [vmem:[%s503 + $0x168] sm:$0xff]
          %v2376 = vld [vmem:[%s503 + $0x170] sm:$0xff]
          %v2377 = vld [vmem:[%s503 + $0x178] sm:$0xff]
          %v2378 = vmax.f32 %v2330, 0.0
          %v2379 = vmax.f32 %v2331, 0.0
          %v2380 = vmax.f32 %v2332, 0.0
          %v2381 = vmax.f32 %v2333, 0.0
          %v2382 = vmax.f32 %v2334, 0.0
          %v2383 = vmax.f32 %v2335, 0.0
          %v2384 = vmax.f32 %v2336, 0.0
          %v2385 = vmax.f32 %v2337, 0.0
          %v2386 = vmax.f32 %v2338, 0.0
          %v2387 = vmax.f32 %v2339, 0.0
          %v2388 = vmax.f32 %v2340, 0.0
          %v2389 = vmax.f32 %v2341, 0.0
          %v2390 = vmax.f32 %v2342, 0.0
          %v2391 = vmax.f32 %v2343, 0.0
          %v2392 = vmax.f32 %v2344, 0.0
          %v2393 = vmax.f32 %v2345, 0.0
          %v2394 = vmax.f32 %v2346, 0.0
          %v2395 = vmax.f32 %v2347, 0.0
          %v2396 = vmax.f32 %v2348, 0.0
          %v2397 = vmax.f32 %v2349, 0.0
          %v2398 = vmax.f32 %v2350, 0.0
          %v2399 = vmax.f32 %v2351, 0.0
          %v2400 = vmax.f32 %v2352, 0.0
          %v2401 = vmax.f32 %v2353, 0.0
          %v2402 = vmax.f32 %v2354, 0.0
          %v2403 = vmax.f32 %v2355, 0.0
          %v2404 = vmax.f32 %v2356, 0.0
          %v2405 = vmax.f32 %v2357, 0.0
          %v2406 = vmax.f32 %v2358, 0.0
          %v2407 = vmax.f32 %v2359, 0.0
          %v2408 = vmax.f32 %v2360, 0.0
          %v2409 = vmax.f32 %v2361, 0.0
          %v2410 = vmax.f32 %v2362, 0.0
          %v2411 = vmax.f32 %v2363, 0.0
          %v2412 = vmax.f32 %v2364, 0.0
          %v2413 = vmax.f32 %v2365, 0.0
          %v2414 = vmax.f32 %v2366, 0.0
          %v2415 = vmax.f32 %v2367, 0.0
          %v2416 = vmax.f32 %v2368, 0.0
          %v2417 = vmax.f32 %v2369, 0.0
          %v2418 = vmax.f32 %v2370, 0.0
          %v2419 = vmax.f32 %v2371, 0.0
          %v2420 = vmax.f32 %v2372, 0.0
          %v2421 = vmax.f32 %v2373, 0.0
          %v2422 = vmax.f32 %v2374, 0.0
          %v2423 = vmax.f32 %v2375, 0.0
          %v2424 = vmax.f32 %v2376, 0.0
          %v2425 = vmax.f32 %v2377, 0.0
          %v2426 = vld [vmem:[#allocation11] sm:$0xff]
          %v2427 = vld [vmem:[#allocation11 + $0x8] sm:$0xff]
          %v2428 = vld [vmem:[#allocation13] sm:$0xff]
          %vm2429 = vcmask 64512
          %v2431 = vsel %vm2429, %v2378, 0
          %v2434 = vsel %vm2429, %v2379, 0
          %v2437 = vsel %vm2429, %v2380, 0
          %v2440 = vsel %vm2429, %v2381, 0
          %v2443 = vsel %vm2429, %v2382, 0
          %v2446 = vsel %vm2429, %v2383, 0
          %v2449 = vsel %vm2429, %v2384, 0
          %v2452 = vsel %vm2429, %v2385, 0
          %v2455 = vsel %vm2429, %v2386, 0
          %v2458 = vsel %vm2429, %v2387, 0
          %v2461 = vsel %vm2429, %v2388, 0
          %v2464 = vsel %vm2429, %v2389, 0
          %v2467 = vsel %vm2429, %v2390, 0
          %v2470 = vsel %vm2429, %v2391, 0
          %v2473 = vsel %vm2429, %v2392, 0
          %v2476 = vsel %vm2429, %v2393, 0
          %v2479 = vsel %vm2429, %v2394, 0
          %v2482 = vsel %vm2429, %v2395, 0
          %v2485 = vsel %vm2429, %v2396, 0
          %v2488 = vsel %vm2429, %v2397, 0
          %v2491 = vsel %vm2429, %v2398, 0
          %v2494 = vsel %vm2429, %v2399, 0
          %v2497 = vsel %vm2429, %v2400, 0
          %v2500 = vsel %vm2429, %v2401, 0
          %v2503 = vsel %vm2429, %v2402, 0
          %v2506 = vsel %vm2429, %v2403, 0
          %v2509 = vsel %vm2429, %v2404, 0
          %v2512 = vsel %vm2429, %v2405, 0
          %v2515 = vsel %vm2429, %v2406, 0
          %v2518 = vsel %vm2429, %v2407, 0
          %v2521 = vsel %vm2429, %v2408, 0
          %v2524 = vsel %vm2429, %v2409, 0
          %v2527 = vsel %vm2429, %v2410, 0
          %v2530 = vsel %vm2429, %v2411, 0
          %v2533 = vsel %vm2429, %v2412, 0
          %v2536 = vsel %vm2429, %v2413, 0
          %v2539 = vsel %vm2429, %v2414, 0
          %v2542 = vsel %vm2429, %v2415, 0
          %v2545 = vsel %vm2429, %v2416, 0
          %v2548 = vsel %vm2429, %v2417, 0
          %v2551 = vsel %vm2429, %v2418, 0
          %v2554 = vsel %vm2429, %v2419, 0
          %v2557 = vsel %vm2429, %v2420, 0
          %v2560 = vsel %vm2429, %v2421, 0
          %v2563 = vsel %vm2429, %v2422, 0
          %v2566 = vsel %vm2429, %v2423, 0
          %v2569 = vsel %vm2429, %v2424, 0
          %v2572 = vsel %vm2429, %v2425, 0
          %2574 = vmatprep.subr.mxu0 0.0
          %2575 = vmatpush1.msra.mxu0 %v2428
          %2576 = vmatprep.subr.mxu0 0.0
          %2577 = vmatpush1.msra.mxu0 0.0
          %2578 = vmatprep.subr.mxu0 0.0
          %2579 = vmatpush1.msra.mxu0 0.0
          %2580 = vmatprep.subr.mxu0 0.0
          %2581 = vmatpush1.msra.mxu0 0.0
          %2582 = vmatprep.subr.mxu0 0.0
          %2583 = vmatpush1.msra.mxu0 0.0
          %2584 = vmatprep.subr.mxu0 0.0
          %2585 = vmatpush1.msra.mxu0 0.0
          %2586 = vmatprep.subr.mxu0 0.0
          %2587 = vmatpush1.msra.mxu0 0.0
          %2588 = vmatprep.subr.mxu0 0.0
          %2589 = vmatpush1.msra.mxu0 0.0
          %2590 = vmatprep.subr.mxu0 0.0
          %2591 = vmatpush1.msra.mxu0 0.0
          %2592 = vmatprep.subr.mxu0 0.0
          %2593 = vmatpush1.msra.mxu0 0.0
          %2594 = vmatprep.subr.mxu0 0.0
          %2595 = vmatpush1.msra.mxu0 0.0
          %2596 = vmatprep.subr.mxu0 0.0
          %2597 = vmatpush1.msra.mxu0 0.0
          %2598 = vmatprep.subr.mxu0 0.0
          %2599 = vmatpush1.msra.mxu0 0.0
          %2600 = vmatprep.subr.mxu0 0.0
          %2601 = vmatpush1.msra.mxu0 0.0
          %2602 = vmatprep.subr.mxu0 0.0
          %2603 = vmatpush1.msra.mxu0 0.0
          %2604 = vmatprep.subr.mxu0 0.0
          %2605 = vmatpush1.msra.mxu0 0.0
          %2606 = vmatprep.subr.mxu0 0.0
          %2607 = vmatpush1.msra.mxu0 0.0
          %2608 = vmatprep.subr.mxu0 0.0
          %2609 = vmatpush1.msra.mxu0 0.0
          %2610 = vmatprep.subr.mxu0 0.0
          %2611 = vmatpush1.msra.mxu0 0.0
          %2612 = vmatprep.subr.mxu0 0.0
          %2613 = vmatpush1.msra.mxu0 0.0
          %2614 = vmatprep.subr.mxu0 0.0
          %2615 = vmatpush1.msra.mxu0 0.0
          %2616 = vmatprep.subr.mxu0 0.0
          %2617 = vmatpush1.msra.mxu0 0.0
          %2618 = vmatprep.subr.mxu0 0.0
          %2619 = vmatpush1.msra.mxu0 0.0
          %2620 = vmatprep.subr.mxu0 0.0
          %2621 = vmatpush1.msra.mxu0 0.0
          %2622 = vmatprep.subr.mxu0 0.0
          %2623 = vmatpush1.msra.mxu0 0.0
          %2624 = vmatprep.subr.mxu0 0.0
          %2625 = vmatpush1.msra.mxu0 0.0
          %2626 = vmatprep.subr.mxu0 0.0
          %2627 = vmatpush1.msra.mxu0 0.0
          %2628 = vmatprep.subr.mxu0 0.0
          %2629 = vmatpush1.msra.mxu0 0.0
          %2630 = vmatprep.subr.mxu0 0.0
          %2631 = vmatpush1.msra.mxu0 0.0
          %2632 = vmatprep.subr.mxu0 0.0
          %2633 = vmatpush1.msra.mxu0 0.0
          %2634 = vmatprep.subr.mxu0 0.0
          %2635 = vmatpush1.msra.mxu0 0.0
          %2636 = vmatprep.subr.mxu0 0.0
          %2637 = vmatpush1.msra.mxu0 0.0
          %2638 = vmatprep.mubr.f32.mxu0 0.0
          %2639 = vmatmul.mubr.f32.gmra.mrb[0].mxu0 %v2431
          %v2640 = vpop.f32.mrb[0].mxu0
          %v2641 = vadd.f32 0.0, %v2640
          %v2642 = vpop.f32.mrb[0].mxu0
          %2643 = vmatprep.mubr.f32.mxu0 0.0
          %2644 = vmatmul.mubr.f32.gmra.mrb[0].mxu0 %v2434
          %v2645 = vpop.f32.mrb[0].mxu0
          %v2646 = vadd.f32 0.0, %v2645
          %v2647 = vpop.f32.mrb[0].mxu0
          %2648 = vmatprep.mubr.f32.mxu0 0.0
          %2649 = vmatmul.mubr.f32.gmra.mrb[0].mxu0 %v2437
          %v2650 = vpop.f32.mrb[0].mxu0
          %v2651 = vadd.f32 0.0, %v2650
          %v2652 = vpop.f32.mrb[0].mxu0
          %2653 = vmatprep.mubr.f32.mxu0 0.0
          %2654 = vmatmul.mubr.f32.gmra.mrb[0].mxu0 %v2440
          %v2655 = vpop.f32.mrb[0].mxu0
          %v2656 = vadd.f32 0.0, %v2655
          %v2657 = vpop.f32.mrb[0].mxu0
          %2658 = vmatprep.mubr.f32.mxu0 0.0
          %2659 = vmatmul.mubr.f32.gmra.mrb[0].mxu0 %v2443
          %v2660 = vpop.f32.mrb[0].mxu0
          %v2661 = vadd.f32 0.0, %v2660
          %v2662 = vpop.f32.mrb[0].mxu0
          %2663 = vmatprep.mubr.f32.mxu0 0.0
          %2664 = vmatmul.mubr.f32.gmra.mrb[0].mxu0 %v2446
          %v2665 = vpop.f32.mrb[0].mxu0
          %v2666 = vadd.f32 0.0, %v2665
          %v2667 = vpop.f32.mrb[0].mxu0
          %2668 = vmatprep.mubr.f32.mxu0 0.0
          %2669 = vmatmul.mubr.f32.gmra.mrb[0].mxu0 %v2449
          %v2670 = vpop.f32.mrb[0].mxu0
          %v2671 = vadd.f32 0.0, %v2670
          %v2672 = vpop.f32.mrb[0].mxu0
          %2673 = vmatprep.mubr.f32.mxu0 0.0
          %2674 = vmatmul.mubr.f32.gmra.mrb[0].mxu0 %v2452
          %v2675 = vpop.f32.mrb[0].mxu0
          %v2676 = vadd.f32 0.0, %v2675
          %v2677 = vpop.f32.mrb[0].mxu0
          %2678 = vmatprep.mubr.f32.mxu0 0.0
          %2679 = vmatmul.mubr.f32.gmra.mrb[0].mxu0 %v2455
          %v2680 = vpop.f32.mrb[0].mxu0
          %v2681 = vadd.f32 0.0, %v2680
          %v2682 = vpop.f32.mrb[0].mxu0
          %2683 = vmatprep.mubr.f32.mxu0 0.0
          %2684 = vmatmul.mubr.f32.gmra.mrb[0].mxu0 %v2458
          %v2685 = vpop.f32.mrb[0].mxu0
          %v2686 = vadd.f32 0.0, %v2685
          %v2687 = vpop.f32.mrb[0].mxu0
          %2688 = vmatprep.mubr.f32.mxu0 0.0
          %2689 = vmatmul.mubr.f32.gmra.mrb[0].mxu0 %v2461
          %v2690 = vpop.f32.mrb[0].mxu0
          %v2691 = vadd.f32 0.0, %v2690
          %v2692 = vpop.f32.mrb[0].mxu0
          %2693 = vmatprep.mubr.f32.mxu0 0.0
          %2694 = vmatmul.mubr.f32.gmra.mrb[0].mxu0 %v2464
          %v2695 = vpop.f32.mrb[0].mxu0
          %v2696 = vadd.f32 0.0, %v2695
          %v2697 = vpop.f32.mrb[0].mxu0
          %2698 = vmatprep.mubr.f32.mxu0 0.0
          %2699 = vmatmul.mubr.f32.gmra.mrb[0].mxu0 %v2467
          %v2700 = vpop.f32.mrb[0].mxu0
          %v2701 = vadd.f32 0.0, %v2700
          %v2702 = vpop.f32.mrb[0].mxu0
          %2703 = vmatprep.mubr.f32.mxu0 0.0
          %2704 = vmatmul.mubr.f32.gmra.mrb[0].mxu0 %v2470
          %v2705 = vpop.f32.mrb[0].mxu0
          %v2706 = vadd.f32 0.0, %v2705
          %v2707 = vpop.f32.mrb[0].mxu0
          %2708 = vmatprep.mubr.f32.mxu0 0.0
          %2709 = vmatmul.mubr.f32.gmra.mrb[0].mxu0 %v2473
          %v2710 = vpop.f32.mrb[0].mxu0
          %v2711 = vadd.f32 0.0, %v2710
          %v2712 = vpop.f32.mrb[0].mxu0
          %2713 = vmatprep.mubr.f32.mxu0 0.0
          %2714 = vmatmul.mubr.f32.gmra.mrb[0].mxu0 %v2476
          %v2715 = vpop.f32.mrb[0].mxu0
          %v2716 = vadd.f32 0.0, %v2715
          %v2717 = vpop.f32.mrb[0].mxu0
          %2718 = vmatprep.mubr.f32.mxu0 0.0
          %2719 = vmatmul.mubr.f32.gmra.mrb[0].mxu0 %v2479
          %v2720 = vpop.f32.mrb[0].mxu0
          %v2721 = vadd.f32 0.0, %v2720
          %v2722 = vpop.f32.mrb[0].mxu0
          %2723 = vmatprep.mubr.f32.mxu0 0.0
          %2724 = vmatmul.mubr.f32.gmra.mrb[0].mxu0 %v2482
          %v2725 = vpop.f32.mrb[0].mxu0
          %v2726 = vadd.f32 0.0, %v2725
          %v2727 = vpop.f32.mrb[0].mxu0
          %2728 = vmatprep.mubr.f32.mxu0 0.0
          %2729 = vmatmul.mubr.f32.gmra.mrb[0].mxu0 %v2485
          %v2730 = vpop.f32.mrb[0].mxu0
          %v2731 = vadd.f32 0.0, %v2730
          %v2732 = vpop.f32.mrb[0].mxu0
          %2733 = vmatprep.mubr.f32.mxu0 0.0
          %2734 = vmatmul.mubr.f32.gmra.mrb[0].mxu0 %v2488
          %v2735 = vpop.f32.mrb[0].mxu0
          %v2736 = vadd.f32 0.0, %v2735
          %v2737 = vpop.f32.mrb[0].mxu0
          %2738 = vmatprep.mubr.f32.mxu0 0.0
          %2739 = vmatmul.mubr.f32.gmra.mrb[0].mxu0 %v2491
          %v2740 = vpop.f32.mrb[0].mxu0
          %v2741 = vadd.f32 0.0, %v2740
          %v2742 = vpop.f32.mrb[0].mxu0
          %2743 = vmatprep.mubr.f32.mxu0 0.0
          %2744 = vmatmul.mubr.f32.gmra.mrb[0].mxu0 %v2494
          %v2745 = vpop.f32.mrb[0].mxu0
          %v2746 = vadd.f32 0.0, %v2745
          %v2747 = vpop.f32.mrb[0].mxu0
          %2748 = vmatprep.mubr.f32.mxu0 0.0
          %2749 = vmatmul.mubr.f32.gmra.mrb[0].mxu0 %v2497
          %v2750 = vpop.f32.mrb[0].mxu0
          %v2751 = vadd.f32 0.0, %v2750
          %v2752 = vpop.f32.mrb[0].mxu0
          %2753 = vmatprep.mubr.f32.mxu0 0.0
          %2754 = vmatmul.mubr.f32.gmra.mrb[0].mxu0 %v2500
          %v2755 = vpop.f32.mrb[0].mxu0
          %v2756 = vadd.f32 0.0, %v2755
          %v2757 = vpop.f32.mrb[0].mxu0
          %2758 = vmatprep.mubr.f32.mxu0 0.0
          %2759 = vmatmul.mubr.f32.gmra.mrb[0].mxu0 %v2503
          %v2760 = vpop.f32.mrb[0].mxu0
          %v2761 = vadd.f32 0.0, %v2760
          %v2762 = vpop.f32.mrb[0].mxu0
          %2763 = vmatprep.mubr.f32.mxu0 0.0
          %2764 = vmatmul.mubr.f32.gmra.mrb[0].mxu0 %v2506
          %v2765 = vpop.f32.mrb[0].mxu0
          %v2766 = vadd.f32 0.0, %v2765
          %v2767 = vpop.f32.mrb[0].mxu0
          %2768 = vmatprep.mubr.f32.mxu0 0.0
          %2769 = vmatmul.mubr.f32.gmra.mrb[0].mxu0 %v2509
          %v2770 = vpop.f32.mrb[0].mxu0
          %v2771 = vadd.f32 0.0, %v2770
          %v2772 = vpop.f32.mrb[0].mxu0
          %2773 = vmatprep.mubr.f32.mxu0 0.0
          %2774 = vmatmul.mubr.f32.gmra.mrb[0].mxu0 %v2512
          %v2775 = vpop.f32.mrb[0].mxu0
          %v2776 = vadd.f32 0.0, %v2775
          %v2777 = vpop.f32.mrb[0].mxu0
          %2778 = vmatprep.mubr.f32.mxu0 0.0
          %2779 = vmatmul.mubr.f32.gmra.mrb[0].mxu0 %v2515
          %v2780 = vpop.f32.mrb[0].mxu0
          %v2781 = vadd.f32 0.0, %v2780
          %v2782 = vpop.f32.mrb[0].mxu0
          %2783 = vmatprep.mubr.f32.mxu0 0.0
          %2784 = vmatmul.mubr.f32.gmra.mrb[0].mxu0 %v2518
          %v2785 = vpop.f32.mrb[0].mxu0
          %v2786 = vadd.f32 0.0, %v2785
          %v2787 = vpop.f32.mrb[0].mxu0
          %2788 = vmatprep.mubr.f32.mxu0 0.0
          %2789 = vmatmul.mubr.f32.gmra.mrb[0].mxu0 %v2521
          %v2790 = vpop.f32.mrb[0].mxu0
          %v2791 = vadd.f32 0.0, %v2790
          %v2792 = vpop.f32.mrb[0].mxu0
          %2793 = vmatprep.mubr.f32.mxu0 0.0
          %2794 = vmatmul.mubr.f32.gmra.mrb[0].mxu0 %v2524
          %v2795 = vpop.f32.mrb[0].mxu0
          %v2796 = vadd.f32 0.0, %v2795
          %v2797 = vpop.f32.mrb[0].mxu0
          %2798 = vmatprep.mubr.f32.mxu0 0.0
          %2799 = vmatmul.mubr.f32.gmra.mrb[0].mxu0 %v2527
          %v2800 = vpop.f32.mrb[0].mxu0
          %v2801 = vadd.f32 0.0, %v2800
          %v2802 = vpop.f32.mrb[0].mxu0
          %2803 = vmatprep.mubr.f32.mxu0 0.0
          %2804 = vmatmul.mubr.f32.gmra.mrb[0].mxu0 %v2530
          %v2805 = vpop.f32.mrb[0].mxu0
          %v2806 = vadd.f32 0.0, %v2805
          %v2807 = vpop.f32.mrb[0].mxu0
          %2808 = vmatprep.mubr.f32.mxu0 0.0
          %2809 = vmatmul.mubr.f32.gmra.mrb[0].mxu0 %v2533
          %v2810 = vpop.f32.mrb[0].mxu0
          %v2811 = vadd.f32 0.0, %v2810
          %v2812 = vpop.f32.mrb[0].mxu0
          %2813 = vmatprep.mubr.f32.mxu0 0.0
          %2814 = vmatmul.mubr.f32.gmra.mrb[0].mxu0 %v2536
          %v2815 = vpop.f32.mrb[0].mxu0
          %v2816 = vadd.f32 0.0, %v2815
          %v2817 = vpop.f32.mrb[0].mxu0
          %2818 = vmatprep.mubr.f32.mxu0 0.0
          %2819 = vmatmul.mubr.f32.gmra.mrb[0].mxu0 %v2539
          %v2820 = vpop.f32.mrb[0].mxu0
          %v2821 = vadd.f32 0.0, %v2820
          %v2822 = vpop.f32.mrb[0].mxu0
          %2823 = vmatprep.mubr.f32.mxu0 0.0
          %2824 = vmatmul.mubr.f32.gmra.mrb[0].mxu0 %v2542
          %v2825 = vpop.f32.mrb[0].mxu0
          %v2826 = vadd.f32 0.0, %v2825
          %v2827 = vpop.f32.mrb[0].mxu0
          %2828 = vmatprep.mubr.f32.mxu0 0.0
          %2829 = vmatmul.mubr.f32.gmra.mrb[0].mxu0 %v2545
          %v2830 = vpop.f32.mrb[0].mxu0
          %v2831 = vadd.f32 0.0, %v2830
          %v2832 = vpop.f32.mrb[0].mxu0
          %2833 = vmatprep.mubr.f32.mxu0 0.0
          %2834 = vmatmul.mubr.f32.gmra.mrb[0].mxu0 %v2548
          %v2835 = vpop.f32.mrb[0].mxu0
          %v2836 = vadd.f32 0.0, %v2835
          %v2837 = vpop.f32.mrb[0].mxu0
          %2838 = vmatprep.mubr.f32.mxu0 0.0
          %2839 = vmatmul.mubr.f32.gmra.mrb[0].mxu0 %v2551
          %v2840 = vpop.f32.mrb[0].mxu0
          %v2841 = vadd.f32 0.0, %v2840
          %v2842 = vpop.f32.mrb[0].mxu0
          %2843 = vmatprep.mubr.f32.mxu0 0.0
          %2844 = vmatmul.mubr.f32.gmra.mrb[0].mxu0 %v2554
          %v2845 = vpop.f32.mrb[0].mxu0
          %v2846 = vadd.f32 0.0, %v2845
          %v2847 = vpop.f32.mrb[0].mxu0
          %2848 = vmatprep.mubr.f32.mxu0 0.0
          %2849 = vmatmul.mubr.f32.gmra.mrb[0].mxu0 %v2557
          %v2850 = vpop.f32.mrb[0].mxu0
          %v2851 = vadd.f32 0.0, %v2850
          %v2852 = vpop.f32.mrb[0].mxu0
          %2853 = vmatprep.mubr.f32.mxu0 0.0
          %2854 = vmatmul.mubr.f32.gmra.mrb[0].mxu0 %v2560
          %v2855 = vpop.f32.mrb[0].mxu0
          %v2856 = vadd.f32 0.0, %v2855
          %v2857 = vpop.f32.mrb[0].mxu0
          %2858 = vmatprep.mubr.f32.mxu0 0.0
          %2859 = vmatmul.mubr.f32.gmra.mrb[0].mxu0 %v2563
          %v2860 = vpop.f32.mrb[0].mxu0
          %v2861 = vadd.f32 0.0, %v2860
          %v2862 = vpop.f32.mrb[0].mxu0
          %2863 = vmatprep.mubr.f32.mxu0 0.0
          %2864 = vmatmul.mubr.f32.gmra.mrb[0].mxu0 %v2566
          %v2865 = vpop.f32.mrb[0].mxu0
          %v2866 = vadd.f32 0.0, %v2865
          %v2867 = vpop.f32.mrb[0].mxu0
          %2868 = vmatprep.mubr.f32.mxu0 0.0
          %2869 = vmatmul.mubr.f32.gmra.mrb[0].mxu0 %v2569
          %v2870 = vpop.f32.mrb[0].mxu0
          %v2871 = vadd.f32 0.0, %v2870
          %v2872 = vpop.f32.mrb[0].mxu0
          %2873 = vmatprep.mubr.f32.mxu0 0.0
          %2874 = vmatmul.mubr.f32.gmra.mrb[0].mxu0 %v2572
          %v2875 = vpop.f32.mrb[0].mxu0
          %v2876 = vadd.f32 0.0, %v2875
          %v2877 = vpop.f32.mrb[0].mxu0
          %2878 = vdwg.mxu0
          %vm2879 = vcmask 130048
          %v2881 = vsel %vm2879, %v2282, 0
          %v2884 = vsel %vm2879, %v2283, 0
          %v2887 = vsel %vm2879, %v2284, 0
          %v2890 = vsel %vm2879, %v2285, 0
          %v2893 = vsel %vm2879, %v2286, 0
          %v2896 = vsel %vm2879, %v2287, 0
          %v2899 = vsel %vm2879, %v2288, 0
          %v2902 = vsel %vm2879, %v2289, 0
          %v2905 = vsel %vm2879, %v2290, 0
          %v2908 = vsel %vm2879, %v2291, 0
          %v2911 = vsel %vm2879, %v2292, 0
          %v2914 = vsel %vm2879, %v2293, 0
          %v2917 = vsel %vm2879, %v2294, 0
          %v2920 = vsel %vm2879, %v2295, 0
          %v2923 = vsel %vm2879, %v2296, 0
          %v2926 = vsel %vm2879, %v2297, 0
          %v2929 = vsel %vm2879, %v2298, 0
          %v2932 = vsel %vm2879, %v2299, 0
          %v2935 = vsel %vm2879, %v2300, 0
          %v2938 = vsel %vm2879, %v2301, 0
          %v2941 = vsel %vm2879, %v2302, 0
          %v2944 = vsel %vm2879, %v2303, 0
          %v2947 = vsel %vm2879, %v2304, 0
          %v2950 = vsel %vm2879, %v2305, 0
          %v2953 = vsel %vm2879, %v2306, 0
          %v2956 = vsel %vm2879, %v2307, 0
          %v2959 = vsel %vm2879, %v2308, 0
          %v2962 = vsel %vm2879, %v2309, 0
          %v2965 = vsel %vm2879, %v2310, 0
          %v2968 = vsel %vm2879, %v2311, 0
          %v2971 = vsel %vm2879, %v2312, 0
          %v2974 = vsel %vm2879, %v2313, 0
          %v2977 = vsel %vm2879, %v2314, 0
          %v2980 = vsel %vm2879, %v2315, 0
          %v2983 = vsel %vm2879, %v2316, 0
          %v2986 = vsel %vm2879, %v2317, 0
          %v2989 = vsel %vm2879, %v2318, 0
          %v2992 = vsel %vm2879, %v2319, 0
          %v2995 = vsel %vm2879, %v2320, 0
          %v2998 = vsel %vm2879, %v2321, 0
          %v3001 = vsel %vm2879, %v2322, 0
          %v3004 = vsel %vm2879, %v2323, 0
          %v3007 = vsel %vm2879, %v2324, 0
          %v3010 = vsel %vm2879, %v2325, 0
          %v3013 = vsel %vm2879, %v2326, 0
          %v3016 = vsel %vm2879, %v2327, 0
          %v3019 = vsel %vm2879, %v2328, 0
          %v3022 = vsel %vm2879, %v2329, 0
          %3024 = vmatprep.subr.mxu0 0.0
          %3025 = vmatpush1.msra.mxu0 %v2426
          %3026 = vmatprep.subr.mxu0 0.0
          %3027 = vmatpush1.msra.mxu0 %v2427
          %3028 = vmatprep.subr.mxu0 0.0
          %3029 = vmatpush1.msra.mxu0 0.0
          %3030 = vmatprep.subr.mxu0 0.0
          %3031 = vmatpush1.msra.mxu0 0.0
          %3032 = vmatprep.subr.mxu0 0.0
          %3033 = vmatpush1.msra.mxu0 0.0
          %3034 = vmatprep.subr.mxu0 0.0
          %3035 = vmatpush1.msra.mxu0 0.0
          %3036 = vmatprep.subr.mxu0 0.0
          %3037 = vmatpush1.msra.mxu0 0.0
          %3038 = vmatprep.subr.mxu0 0.0
          %3039 = vmatpush1.msra.mxu0 0.0
          %3040 = vmatprep.subr.mxu0 0.0
          %3041 = vmatpush1.msra.mxu0 0.0
          %3042 = vmatprep.subr.mxu0 0.0
          %3043 = vmatpush1.msra.mxu0 0.0
          %3044 = vmatprep.subr.mxu0 0.0
          %3045 = vmatpush1.msra.mxu0 0.0
          %3046 = vmatprep.subr.mxu0 0.0
          %3047 = vmatpush1.msra.mxu0 0.0
          %3048 = vmatprep.subr.mxu0 0.0
          %3049 = vmatpush1.msra.mxu0 0.0
          %3050 = vmatprep.subr.mxu0 0.0
          %3051 = vmatpush1.msra.mxu0 0.0
          %3052 = vmatprep.subr.mxu0 0.0
          %3053 = vmatpush1.msra.mxu0 0.0
          %3054 = vmatprep.subr.mxu0 0.0
          %3055 = vmatpush1.msra.mxu0 0.0
          %3056 = vmatprep.subr.mxu0 0.0
          %3057 = vmatpush1.msra.mxu0 0.0
          %3058 = vmatprep.subr.mxu0 0.0
          %3059 = vmatpush1.msra.mxu0 0.0
          %3060 = vmatprep.subr.mxu0 0.0
          %3061 = vmatpush1.msra.mxu0 0.0
          %3062 = vmatprep.subr.mxu0 0.0
          %3063 = vmatpush1.msra.mxu0 0.0
          %3064 = vmatprep.subr.mxu0 0.0
          %3065 = vmatpush1.msra.mxu0 0.0
          %3066 = vmatprep.subr.mxu0 0.0
          %3067 = vmatpush1.msra.mxu0 0.0
          %3068 = vmatprep.subr.mxu0 0.0
          %3069 = vmatpush1.msra.mxu0 0.0
          %3070 = vmatprep.subr.mxu0 0.0
          %3071 = vmatpush1.msra.mxu0 0.0
          %3072 = vmatprep.subr.mxu0 0.0
          %3073 = vmatpush1.msra.mxu0 0.0
          %3074 = vmatprep.subr.mxu0 0.0
          %3075 = vmatpush1.msra.mxu0 0.0
          %3076 = vmatprep.subr.mxu0 0.0
          %3077 = vmatpush1.msra.mxu0 0.0
          %3078 = vmatprep.subr.mxu0 0.0
          %3079 = vmatpush1.msra.mxu0 0.0
          %3080 = vmatprep.subr.mxu0 0.0
          %3081 = vmatpush1.msra.mxu0 0.0
          %3082 = vmatprep.subr.mxu0 0.0
          %3083 = vmatpush1.msra.mxu0 0.0
          %3084 = vmatprep.subr.mxu0 0.0
          %3085 = vmatpush1.msra.mxu0 0.0
          %3086 = vmatprep.subr.mxu0 0.0
          %3087 = vmatpush1.msra.mxu0 0.0
          %3088 = vmatprep.mubr.f32.mxu0 0.0
          %3089 = vmatmul.mubr.f32.gmra.mrb[0].mxu0 %v2881
          %v3090 = vpop.f32.mrb[0].mxu0
          %v3091 = vadd.f32 %v2641, %v3090
          %v3092 = vpop.f32.mrb[0].mxu0
          %3093 = vmatprep.mubr.f32.mxu0 0.0
          %3094 = vmatmul.mubr.f32.gmra.mrb[0].mxu0 %v2884
          %v3095 = vpop.f32.mrb[0].mxu0
          %v3096 = vadd.f32 %v2646, %v3095
          %v3097 = vpop.f32.mrb[0].mxu0
          %3098 = vmatprep.mubr.f32.mxu0 0.0
          %3099 = vmatmul.mubr.f32.gmra.mrb[0].mxu0 %v2887
          %v3100 = vpop.f32.mrb[0].mxu0
          %v3101 = vadd.f32 %v2651, %v3100
          %v3102 = vpop.f32.mrb[0].mxu0
          %3103 = vmatprep.mubr.f32.mxu0 0.0
          %3104 = vmatmul.mubr.f32.gmra.mrb[0].mxu0 %v2890
          %v3105 = vpop.f32.mrb[0].mxu0
          %v3106 = vadd.f32 %v2656, %v3105
          %v3107 = vpop.f32.mrb[0].mxu0
          %3108 = vmatprep.mubr.f32.mxu0 0.0
          %3109 = vmatmul.mubr.f32.gmra.mrb[0].mxu0 %v2893
          %v3110 = vpop.f32.mrb[0].mxu0
          %v3111 = vadd.f32 %v2661, %v3110
          %v3112 = vpop.f32.mrb[0].mxu0
          %3113 = vmatprep.mubr.f32.mxu0 0.0
          %3114 = vmatmul.mubr.f32.gmra.mrb[0].mxu0 %v2896
          %v3115 = vpop.f32.mrb[0].mxu0
          %v3116 = vadd.f32 %v2666, %v3115
          %v3117 = vpop.f32.mrb[0].mxu0
          %3118 = vmatprep.mubr.f32.mxu0 0.0
          %3119 = vmatmul.mubr.f32.gmra.mrb[0].mxu0 %v2899
          %v3120 = vpop.f32.mrb[0].mxu0
          %v3121 = vadd.f32 %v2671, %v3120
          %v3122 = vpop.f32.mrb[0].mxu0
          %3123 = vmatprep.mubr.f32.mxu0 0.0
          %3124 = vmatmul.mubr.f32.gmra.mrb[0].mxu0 %v2902
          %v3125 = vpop.f32.mrb[0].mxu0
          %v3126 = vadd.f32 %v2676, %v3125
          %v3127 = vpop.f32.mrb[0].mxu0
          %3128 = vmatprep.mubr.f32.mxu0 0.0
          %3129 = vmatmul.mubr.f32.gmra.mrb[0].mxu0 %v2905
          %v3130 = vpop.f32.mrb[0].mxu0
          %v3131 = vadd.f32 %v2681, %v3130
          %v3132 = vpop.f32.mrb[0].mxu0
          %3133 = vmatprep.mubr.f32.mxu0 0.0
          %3134 = vmatmul.mubr.f32.gmra.mrb[0].mxu0 %v2908
          %v3135 = vpop.f32.mrb[0].mxu0
          %v3136 = vadd.f32 %v2686, %v3135
          %v3137 = vpop.f32.mrb[0].mxu0
          %3138 = vmatprep.mubr.f32.mxu0 0.0
          %3139 = vmatmul.mubr.f32.gmra.mrb[0].mxu0 %v2911
          %v3140 = vpop.f32.mrb[0].mxu0
          %v3141 = vadd.f32 %v2691, %v3140
          %v3142 = vpop.f32.mrb[0].mxu0
          %3143 = vmatprep.mubr.f32.mxu0 0.0
          %3144 = vmatmul.mubr.f32.gmra.mrb[0].mxu0 %v2914
          %v3145 = vpop.f32.mrb[0].mxu0
          %v3146 = vadd.f32 %v2696, %v3145
          %v3147 = vpop.f32.mrb[0].mxu0
          %3148 = vmatprep.mubr.f32.mxu0 0.0
          %3149 = vmatmul.mubr.f32.gmra.mrb[0].mxu0 %v2917
          %v3150 = vpop.f32.mrb[0].mxu0
          %v3151 = vadd.f32 %v2701, %v3150
          %v3152 = vpop.f32.mrb[0].mxu0
          %3153 = vmatprep.mubr.f32.mxu0 0.0
          %3154 = vmatmul.mubr.f32.gmra.mrb[0].mxu0 %v2920
          %v3155 = vpop.f32.mrb[0].mxu0
          %v3156 = vadd.f32 %v2706, %v3155
          %v3157 = vpop.f32.mrb[0].mxu0
          %3158 = vmatprep.mubr.f32.mxu0 0.0
          %3159 = vmatmul.mubr.f32.gmra.mrb[0].mxu0 %v2923
          %v3160 = vpop.f32.mrb[0].mxu0
          %v3161 = vadd.f32 %v2711, %v3160
          %v3162 = vpop.f32.mrb[0].mxu0
          %3163 = vmatprep.mubr.f32.mxu0 0.0
          %3164 = vmatmul.mubr.f32.gmra.mrb[0].mxu0 %v2926
          %v3165 = vpop.f32.mrb[0].mxu0
          %v3166 = vadd.f32 %v2716, %v3165
          %v3167 = vpop.f32.mrb[0].mxu0
          %3168 = vmatprep.mubr.f32.mxu0 0.0
          %3169 = vmatmul.mubr.f32.gmra.mrb[0].mxu0 %v2929
          %v3170 = vpop.f32.mrb[0].mxu0
          %v3171 = vadd.f32 %v2721, %v3170
          %v3172 = vpop.f32.mrb[0].mxu0
          %3173 = vmatprep.mubr.f32.mxu0 0.0
          %3174 = vmatmul.mubr.f32.gmra.mrb[0].mxu0 %v2932
          %v3175 = vpop.f32.mrb[0].mxu0
          %v3176 = vadd.f32 %v2726, %v3175
          %v3177 = vpop.f32.mrb[0].mxu0
          %3178 = vmatprep.mubr.f32.mxu0 0.0
          %3179 = vmatmul.mubr.f32.gmra.mrb[0].mxu0 %v2935
          %v3180 = vpop.f32.mrb[0].mxu0
          %v3181 = vadd.f32 %v2731, %v3180
          %v3182 = vpop.f32.mrb[0].mxu0
          %3183 = vmatprep.mubr.f32.mxu0 0.0
          %3184 = vmatmul.mubr.f32.gmra.mrb[0].mxu0 %v2938
          %v3185 = vpop.f32.mrb[0].mxu0
          %v3186 = vadd.f32 %v2736, %v3185
          %v3187 = vpop.f32.mrb[0].mxu0
          %3188 = vmatprep.mubr.f32.mxu0 0.0
          %3189 = vmatmul.mubr.f32.gmra.mrb[0].mxu0 %v2941
          %v3190 = vpop.f32.mrb[0].mxu0
          %v3191 = vadd.f32 %v2741, %v3190
          %v3192 = vpop.f32.mrb[0].mxu0
          %3193 = vmatprep.mubr.f32.mxu0 0.0
          %3194 = vmatmul.mubr.f32.gmra.mrb[0].mxu0 %v2944
          %v3195 = vpop.f32.mrb[0].mxu0
          %v3196 = vadd.f32 %v2746, %v3195
          %v3197 = vpop.f32.mrb[0].mxu0
          %3198 = vmatprep.mubr.f32.mxu0 0.0
          %3199 = vmatmul.mubr.f32.gmra.mrb[0].mxu0 %v2947
          %v3200 = vpop.f32.mrb[0].mxu0
          %v3201 = vadd.f32 %v2751, %v3200
          %v3202 = vpop.f32.mrb[0].mxu0
          %3203 = vmatprep.mubr.f32.mxu0 0.0
          %3204 = vmatmul.mubr.f32.gmra.mrb[0].mxu0 %v2950
          %v3205 = vpop.f32.mrb[0].mxu0
          %v3206 = vadd.f32 %v2756, %v3205
          %v3207 = vpop.f32.mrb[0].mxu0
          %3208 = vmatprep.mubr.f32.mxu0 0.0
          %3209 = vmatmul.mubr.f32.gmra.mrb[0].mxu0 %v2953
          %v3210 = vpop.f32.mrb[0].mxu0
          %v3211 = vadd.f32 %v2761, %v3210
          %v3212 = vpop.f32.mrb[0].mxu0
          %3213 = vmatprep.mubr.f32.mxu0 0.0
          %3214 = vmatmul.mubr.f32.gmra.mrb[0].mxu0 %v2956
          %v3215 = vpop.f32.mrb[0].mxu0
          %v3216 = vadd.f32 %v2766, %v3215
          %v3217 = vpop.f32.mrb[0].mxu0
          %3218 = vmatprep.mubr.f32.mxu0 0.0
          %3219 = vmatmul.mubr.f32.gmra.mrb[0].mxu0 %v2959
          %v3220 = vpop.f32.mrb[0].mxu0
          %v3221 = vadd.f32 %v2771, %v3220
          %v3222 = vpop.f32.mrb[0].mxu0
          %3223 = vmatprep.mubr.f32.mxu0 0.0
          %3224 = vmatmul.mubr.f32.gmra.mrb[0].mxu0 %v2962
          %v3225 = vpop.f32.mrb[0].mxu0
          %v3226 = vadd.f32 %v2776, %v3225
          %v3227 = vpop.f32.mrb[0].mxu0
          %3228 = vmatprep.mubr.f32.mxu0 0.0
          %3229 = vmatmul.mubr.f32.gmra.mrb[0].mxu0 %v2965
          %v3230 = vpop.f32.mrb[0].mxu0
          %v3231 = vadd.f32 %v2781, %v3230
          %v3232 = vpop.f32.mrb[0].mxu0
          %3233 = vmatprep.mubr.f32.mxu0 0.0
          %3234 = vmatmul.mubr.f32.gmra.mrb[0].mxu0 %v2968
          %v3235 = vpop.f32.mrb[0].mxu0
          %v3236 = vadd.f32 %v2786, %v3235
          %v3237 = vpop.f32.mrb[0].mxu0
          %3238 = vmatprep.mubr.f32.mxu0 0.0
          %3239 = vmatmul.mubr.f32.gmra.mrb[0].mxu0 %v2971
          %v3240 = vpop.f32.mrb[0].mxu0
          %v3241 = vadd.f32 %v2791, %v3240
          %v3242 = vpop.f32.mrb[0].mxu0
          %3243 = vmatprep.mubr.f32.mxu0 0.0
          %3244 = vmatmul.mubr.f32.gmra.mrb[0].mxu0 %v2974
          %v3245 = vpop.f32.mrb[0].mxu0
          %v3246 = vadd.f32 %v2796, %v3245
          %v3247 = vpop.f32.mrb[0].mxu0
          %3248 = vmatprep.mubr.f32.mxu0 0.0
          %3249 = vmatmul.mubr.f32.gmra.mrb[0].mxu0 %v2977
          %v3250 = vpop.f32.mrb[0].mxu0
          %v3251 = vadd.f32 %v2801, %v3250
          %v3252 = vpop.f32.mrb[0].mxu0
          %3253 = vmatprep.mubr.f32.mxu0 0.0
          %3254 = vmatmul.mubr.f32.gmra.mrb[0].mxu0 %v2980
          %v3255 = vpop.f32.mrb[0].mxu0
          %v3256 = vadd.f32 %v2806, %v3255
          %v3257 = vpop.f32.mrb[0].mxu0
          %3258 = vmatprep.mubr.f32.mxu0 0.0
          %3259 = vmatmul.mubr.f32.gmra.mrb[0].mxu0 %v2983
          %v3260 = vpop.f32.mrb[0].mxu0
          %v3261 = vadd.f32 %v2811, %v3260
          %v3262 = vpop.f32.mrb[0].mxu0
          %3263 = vmatprep.mubr.f32.mxu0 0.0
          %3264 = vmatmul.mubr.f32.gmra.mrb[0].mxu0 %v2986
          %v3265 = vpop.f32.mrb[0].mxu0
          %v3266 = vadd.f32 %v2816, %v3265
          %v3267 = vpop.f32.mrb[0].mxu0
          %3268 = vmatprep.mubr.f32.mxu0 0.0
          %3269 = vmatmul.mubr.f32.gmra.mrb[0].mxu0 %v2989
          %v3270 = vpop.f32.mrb[0].mxu0
          %v3271 = vadd.f32 %v2821, %v3270
          %v3272 = vpop.f32.mrb[0].mxu0
          %3273 = vmatprep.mubr.f32.mxu0 0.0
          %3274 = vmatmul.mubr.f32.gmra.mrb[0].mxu0 %v2992
          %v3275 = vpop.f32.mrb[0].mxu0
          %v3276 = vadd.f32 %v2826, %v3275
          %v3277 = vpop.f32.mrb[0].mxu0
          %3278 = vmatprep.mubr.f32.mxu0 0.0
          %3279 = vmatmul.mubr.f32.gmra.mrb[0].mxu0 %v2995
          %v3280 = vpop.f32.mrb[0].mxu0
          %v3281 = vadd.f32 %v2831, %v3280
          %v3282 = vpop.f32.mrb[0].mxu0
          %3283 = vmatprep.mubr.f32.mxu0 0.0
          %3284 = vmatmul.mubr.f32.gmra.mrb[0].mxu0 %v2998
          %v3285 = vpop.f32.mrb[0].mxu0
          %v3286 = vadd.f32 %v2836, %v3285
          %v3287 = vpop.f32.mrb[0].mxu0
          %3288 = vmatprep.mubr.f32.mxu0 0.0
          %3289 = vmatmul.mubr.f32.gmra.mrb[0].mxu0 %v3001
          %v3290 = vpop.f32.mrb[0].mxu0
          %v3291 = vadd.f32 %v2841, %v3290
          %v3292 = vpop.f32.mrb[0].mxu0
          %3293 = vmatprep.mubr.f32.mxu0 0.0
          %3294 = vmatmul.mubr.f32.gmra.mrb[0].mxu0 %v3004
          %v3295 = vpop.f32.mrb[0].mxu0
          %v3296 = vadd.f32 %v2846, %v3295
          %v3297 = vpop.f32.mrb[0].mxu0
          %3298 = vmatprep.mubr.f32.mxu0 0.0
          %3299 = vmatmul.mubr.f32.gmra.mrb[0].mxu0 %v3007
          %v3300 = vpop.f32.mrb[0].mxu0
          %v3301 = vadd.f32 %v2851, %v3300
          %v3302 = vpop.f32.mrb[0].mxu0
          %3303 = vmatprep.mubr.f32.mxu0 0.0
          %3304 = vmatmul.mubr.f32.gmra.mrb[0].mxu0 %v3010
          %v3305 = vpop.f32.mrb[0].mxu0
          %v3306 = vadd.f32 %v2856, %v3305
          %v3307 = vpop.f32.mrb[0].mxu0
          %3308 = vmatprep.mubr.f32.mxu0 0.0
          %3309 = vmatmul.mubr.f32.gmra.mrb[0].mxu0 %v3013
          %v3310 = vpop.f32.mrb[0].mxu0
          %v3311 = vadd.f32 %v2861, %v3310
          %v3312 = vpop.f32.mrb[0].mxu0
          %3313 = vmatprep.mubr.f32.mxu0 0.0
          %3314 = vmatmul.mubr.f32.gmra.mrb[0].mxu0 %v3016
          %v3315 = vpop.f32.mrb[0].mxu0
          %v3316 = vadd.f32 %v2866, %v3315
          %v3317 = vpop.f32.mrb[0].mxu0
          %3318 = vmatprep.mubr.f32.mxu0 0.0
          %3319 = vmatmul.mubr.f32.gmra.mrb[0].mxu0 %v3019
          %v3320 = vpop.f32.mrb[0].mxu0
          %v3321 = vadd.f32 %v2871, %v3320
          %v3322 = vpop.f32.mrb[0].mxu0
          %3323 = vmatprep.mubr.f32.mxu0 0.0
          %3324 = vmatmul.mubr.f32.gmra.mrb[0].mxu0 %v3022
          %v3325 = vpop.f32.mrb[0].mxu0
          %v3326 = vadd.f32 %v2876, %v3325
          %v3327 = vpop.f32.mrb[0].mxu0
          %3328 = vdwg.mxu0
          %3329 = vst.msk [vmem:[%s509] sm:$0xff] %vm2879, %v3091
          %3330 = vst.msk [vmem:[%s509 + $0x8] sm:$0xff] %vm2879, %v3096
          %3331 = vst.msk [vmem:[%s509 + $0x10] sm:$0xff] %vm2879, %v3101
          %3332 = vst.msk [vmem:[%s509 + $0x18] sm:$0xff] %vm2879, %v3106
          %3333 = vst.msk [vmem:[%s509 + $0x20] sm:$0xff] %vm2879, %v3111
          %3334 = vst.msk [vmem:[%s509 + $0x28] sm:$0xff] %vm2879, %v3116
          %3335 = vst.msk [vmem:[%s509 + $0x30] sm:$0xff] %vm2879, %v3121
          %3336 = vst.msk [vmem:[%s509 + $0x38] sm:$0xff] %vm2879, %v3126
          %3337 = vst.msk [vmem:[%s509 + $0x40] sm:$0xff] %vm2879, %v3131
          %3338 = vst.msk [vmem:[%s509 + $0x48] sm:$0xff] %vm2879, %v3136
          %3339 = vst.msk [vmem:[%s509 + $0x50] sm:$0xff] %vm2879, %v3141
          %3340 = vst.msk [vmem:[%s509 + $0x58] sm:$0xff] %vm2879, %v3146
          %3341 = vst.msk [vmem:[%s509 + $0x60] sm:$0xff] %vm2879, %v3151
          %3342 = vst.msk [vmem:[%s509 + $0x68] sm:$0xff] %vm2879, %v3156
          %3343 = vst.msk [vmem:[%s509 + $0x70] sm:$0xff] %vm2879, %v3161
          %3344 = vst.msk [vmem:[%s509 + $0x78] sm:$0xff] %vm2879, %v3166
          %3345 = vst.msk [vmem:[%s509 + $0x80] sm:$0xff] %vm2879, %v3171
          %3346 = vst.msk [vmem:[%s509 + $0x88] sm:$0xff] %vm2879, %v3176
          %3347 = vst.msk [vmem:[%s509 + $0x90] sm:$0xff] %vm2879, %v3181
          %3348 = vst.msk [vmem:[%s509 + $0x98] sm:$0xff] %vm2879, %v3186
          %3349 = vst.msk [vmem:[%s509 + $0xa0] sm:$0xff] %vm2879, %v3191
          %3350 = vst.msk [vmem:[%s509 + $0xa8] sm:$0xff] %vm2879, %v3196
          %3351 = vst.msk [vmem:[%s509 + $0xb0] sm:$0xff] %vm2879, %v3201
          %3352 = vst.msk [vmem:[%s509 + $0xb8] sm:$0xff] %vm2879, %v3206
          %3353 = vst.msk [vmem:[%s509 + $0xc0] sm:$0xff] %vm2879, %v3211
          %3354 = vst.msk [vmem:[%s509 + $0xc8] sm:$0xff] %vm2879, %v3216
          %3355 = vst.msk [vmem:[%s509 + $0xd0] sm:$0xff] %vm2879, %v3221
          %3356 = vst.msk [vmem:[%s509 + $0xd8] sm:$0xff] %vm2879, %v3226
          %3357 = vst.msk [vmem:[%s509 + $0xe0] sm:$0xff] %vm2879, %v3231
          %3358 = vst.msk [vmem:[%s509 + $0xe8] sm:$0xff] %vm2879, %v3236
          %3359 = vst.msk [vmem:[%s509 + $0xf0] sm:$0xff] %vm2879, %v3241
          %3360 = vst.msk [vmem:[%s509 + $0xf8] sm:$0xff] %vm2879, %v3246
          %3361 = vst.msk [vmem:[%s509 + $0x100] sm:$0xff] %vm2879, %v3251
          %3362 = vst.msk [vmem:[%s509 + $0x108] sm:$0xff] %vm2879, %v3256
          %3363 = vst.msk [vmem:[%s509 + $0x110] sm:$0xff] %vm2879, %v3261
          %3364 = vst.msk [vmem:[%s509 + $0x118] sm:$0xff] %vm2879, %v3266
          %3365 = vst.msk [vmem:[%s509 + $0x120] sm:$0xff] %vm2879, %v3271
          %3366 = vst.msk [vmem:[%s509 + $0x128] sm:$0xff] %vm2879, %v3276
          %3367 = vst.msk [vmem:[%s509 + $0x130] sm:$0xff] %vm2879, %v3281
          %3368 = vst.msk [vmem:[%s509 + $0x138] sm:$0xff] %vm2879, %v3286
          %3369 = vst.msk [vmem:[%s509 + $0x140] sm:$0xff] %vm2879, %v3291
          %3370 = vst.msk [vmem:[%s509 + $0x148] sm:$0xff] %vm2879, %v3296
          %3371 = vst.msk [vmem:[%s509 + $0x150] sm:$0xff] %vm2879, %v3301
          %3372 = vst.msk [vmem:[%s509 + $0x158] sm:$0xff] %vm2879, %v3306
          %3373 = vst.msk [vmem:[%s509 + $0x160] sm:$0xff] %vm2879, %v3311
          %3374 = vst.msk [vmem:[%s509 + $0x168] sm:$0xff] %vm2879, %v3316
          %3375 = vst.msk [vmem:[%s509 + $0x170] sm:$0xff] %vm2879, %v3321
          %3376 = vst.msk [vmem:[%s509 + $0x178] sm:$0xff] %vm2879, %v3326
        $region80: #{tpu_custom_call.1} parent=47 // pred_fallthru
          _
        %s3377 = smul.u32 48, %s35
        %p3378 = scmp.lt.s32.totalorder %s3377, 95
        %s3379 = scalar_select %p3378, %s3377, 95
        %s3380 = smul.addr %s3379, 8
        %s3381 = scalar_lea.vmem %s9, %s3380
        // Predicated region
        $region81: #{tpu_custom_call.1} parent=47 // pred_check
          %p3382 = pneg %p257
        $region82: #{tpu_custom_call.1} parent=47 // pred_check_branch
          %3384 = sbr.rel (%p3382) target = $region84
        $region83: #{tpu_custom_call.1} parent=47 // pred_region
          %s3385 = smul.u32 48, %s35
        $region84: #{tpu_custom_call.1} parent=47 // pred_fallthru
          _
      $region48: #{tpu_custom_call.1} parent=5 // pred_fallthru
        _
      %p3386 = scmp.le.s32.totalorder 2, %s26
      // Predicated region
      $region85: #{tpu_custom_call.1} parent=5 // pred_check
        %p3387 = pneg %p3386
      $region86: #{tpu_custom_call.1} parent=5 // pred_check_branch
        %3389 = sbr.rel (%p3387) target = $region88
      $region87: #{tpu_custom_call.1} parent=5 // pred_region
        %s3390 = ssub.s32 %s26, 2
        // Predicated region
        $region89: #{tpu_custom_call.1} parent=87 // pred_check
          %p3391 = pneg %p263
        $region90: #{tpu_custom_call.1} parent=87 // pred_check_branch
          %3393 = sbr.rel (%p3391) target = $region92
        $region91: #{tpu_custom_call.1} parent=87 // pred_region
          %s3394 = smul.u32 48, %s37
          %p3395 = scmp.lt.s32.totalorder %s3394, 95
          %s3396 = scalar_select %p3395, %s3394, 95
          %s3397 = smul.addr %s3396, 8
          %s3398 = scalar_lea.vmem %s9, %s3397
        $region92: #{tpu_custom_call.1} parent=87 // pred_fallthru
          _
      $region88: #{tpu_custom_call.1} parent=5 // pred_fallthru
        _
    $region6: #{tpu_custom_call.1} parent=1 // loop_footer
      %s30 = sadd.s32 1, %s26
    $region7: #{tpu_custom_call.1} parent=1 // loop_footer_branch
      %25 = sbr.rel target = $region3
    $region8: #{tpu_custom_call.1} parent=1 // loop_exit
      _
    %3399 = vsyncpa [#allocation7], 1
    %s3400 = scalar_lea.sflag [#allocation7], 1
    %3401 = vsyncpa %s3400, 1
    %3402 = vsyncpa [#allocation9], 1
    %3403 = vsyncpa [#allocation12], 1

</llo_original>
